<compile_context>
chip_gen: v7x
topology: tpu7x:2x2x1
jax: 0.10.0
libtpu: 0.0.40
codegen_flags: <defaults>
</compile_context>

<pallas_src>
import jax
import jax.numpy as jnp
import numpy as np
from jax import lax
from jax.experimental import pallas as pl
from jax.experimental.pallas import tpu as pltpu

SEQ_LEN = 16          # L
IN_DIM = 26           # input_dim
CIN_PAD = 32          # input channels zero-padded so L*CIN_PAD = 512 lanes
C_OUT = 64            # conv_out_channels
K = 5                 # kernel_size
DIL = 2               # dilation of conv1
HID = 128             # fc1 hidden
PAD1 = DIL * (K - 1) // 2   # 'same' padding of conv1 (dilation=2) -> 4
PAD2 = (K - 1) // 2         # 'same' padding of conv2               -> 2

MAX_B_TILE = 1024     # v6e could take 2048, but v7x (64 MiB VMEM/TC) caps ~1024
GROUP_T = 4           # output time-steps per banded matmul group (4*64 = 256 lanes)

# Receptive-field windows (start_time, n_times) per group of 4 output times,
# clipped to [0, L) and rounded so every lane offset is a multiple of 128.
#   conv1 (dilation=2, pad=4): out times [4j,4j+3] need in times [4j-4, 4j+7]
_CONV1_WIN = ((0, 8), (0, 12), (4, 12), (8, 8))
#   conv2 (dilation=1, pad=2): out times [4j,4j+3] need in times [4j-2, 4j+5]
_CONV2_WIN = ((0, 6), (2, 8), (6, 8), (10, 6))


def _round_up(x, m):
    return ((x + m - 1) // m) * m


def _conv_as_toeplitz(w_kio, seq_len, dilation, pad):
    """Fold a 1-D 'same' conv (weights (K, Cin, Cout)) into (L*Cin, L*Cout).

    Row index = t_in*Cin + ci, column index = t_out*Cout + co.  Out-of-range
    taps map to zero blocks, i.e. the 'same' padding is baked in.
    """
    k_sz, cin, cout = w_kio.shape
    place = np.zeros((k_sz, seq_len, seq_len), np.float32)
    for k in range(k_sz):
        for t_out in range(seq_len):
            t_in = t_out + k * dilation - pad
            if 0 <= t_in < seq_len:
                place[k, t_in, t_out] = 1.0
    w_big = jnp.einsum('kab,kio->aibo', jnp.asarray(place), w_kio)
    return w_big.reshape(seq_len * cin, seq_len * cout)


def _classifier_kernel(x_ref, w1_ref, b1_ref, w2_ref, b2_ref,
                       wf1_ref, bf1_ref, wf2_ref, bf2_ref, o_ref):
    bt = x_ref.shape[0]
    x = x_ref[...].astype(jnp.bfloat16)                       # (BT, 512)

    # ---- conv1 (+bias, ReLU): 4 banded sub-matmuls of the block-Toeplitz ----
    y1_parts = []
    for j, (s, w) in enumerate(_CONV1_WIN):
        lo, hi = s * CIN_PAD, (s + w) * CIN_PAD               # aligned lane window
        c0, c1 = j * GROUP_T * C_OUT, (j + 1) * GROUP_T * C_OUT
        acc = jnp.dot(x[:, lo:hi], w1_ref[lo:hi, c0:c1],
                      preferred_element_type=jnp.float32)     # (BT, 256) f32
        acc = jnp.maximum(acc + b1_ref[:, c0:c1], 0.0)
        y1_parts.append(acc.astype(jnp.bfloat16))
    y1 = jnp.concatenate(y1_parts, axis=1)                    # (BT, 1024) bf16

    # ---- conv2 (+bias, ReLU) with on-the-fly average pooling (VPU) ----------
    # pooled lanes: [0:64] = sum over even time-steps, [64:128] = odd ones.
    pooled = jnp.zeros((bt, 2 * C_OUT), jnp.float32)
    for j, (s, w) in enumerate(_CONV2_WIN):
        lo, hi = s * C_OUT, (s + w) * C_OUT
        c0, c1 = j * GROUP_T * C_OUT, (j + 1) * GROUP_T * C_OUT
        acc = jnp.dot(y1[:, lo:hi], w2_ref[lo:hi, c0:c1],
                      preferred_element_type=jnp.float32)     # (BT, 256) f32
        acc = jnp.maximum(acc + b2_ref[:, c0:c1], 0.0)
        pooled = pooled + acc[:, :2 * C_OUT] + acc[:, 2 * C_OUT:]
    pooled = pooled * (1.0 / SEQ_LEN)                         # (BT, 128) f32

    # ---- fc1 (+bias, ReLU); wf1 rows are duplicated to match the 128 lanes --
    h = jnp.dot(pooled.astype(jnp.bfloat16), wf1_ref[...],
                preferred_element_type=jnp.float32) + bf1_ref[...]
    h = jnp.maximum(h, 0.0)                                   # (BT, 128)

    # ---- fc2 + sigmoid: contract h's feature dim directly (no h.T) ---------
    logit_t = lax.dot_general(wf2_ref[...], h.astype(jnp.bfloat16),
                              dimension_numbers=(((1,), (1,)), ((), ())),
                              preferred_element_type=jnp.float32)   # (1, BT)
    o_ref[0] = jax.nn.sigmoid(logit_t + bf2_ref[...])         # lane-dense store


def protein_conv1d_classifier(x, params):
    """x: (B, L, IN_DIM) float32 -> (B, 1) float32 probabilities."""
    w1, b1, w2, b2, wf1, bf1, wf2, bf2 = params
    B, L, Cin = x.shape
    assert (L, Cin) == (SEQ_LEN, IN_DIM)

    # ---- batch tiling: multiples of 16, and >= 2 tiles so both v7x TCs work -
    b_tile = max(16, min(MAX_B_TILE, _round_up((B + 1) // 2, 16)))
    n_tiles = max(2, -(-B // b_tile))
    b_pad = n_tiles * b_tile

    # ---- input: pad batch + channels (26 -> 32) so rows are 512 lanes -------
    x_p = jnp.pad(x, ((0, b_pad - B), (0, 0), (0, CIN_PAD - IN_DIM)))
    x2d = x_p.reshape(b_pad, L * CIN_PAD)

    # ---- fold convs into block-Toeplitz matrices (tiny, host-side) ----------
    w1_pad = jnp.pad(w1, ((0, 0), (0, CIN_PAD - IN_DIM), (0, 0)))       # (Cout, 32, K)
    w1_big = _conv_as_toeplitz(jnp.transpose(w1_pad, (2, 1, 0)),
                               L, DIL, PAD1).astype(jnp.bfloat16)       # (512, 1024)
    w2_big = _conv_as_toeplitz(jnp.transpose(w2, (2, 1, 0)),
                               L, 1, PAD2).astype(jnp.bfloat16)         # (1024, 1024)
    b1_t = jnp.tile(b1, L).reshape(1, L * C_OUT)
    b2_t = jnp.tile(b2, L).reshape(1, L * C_OUT)
    # fc1 weights duplicated: pooled = [even-time sums | odd-time sums] / 16
    wf1_dup = jnp.concatenate([wf1.T, wf1.T], axis=0).astype(jnp.bfloat16)  # (128, 128)
    bf1_r = bf1.reshape(1, HID)
    wf2_r = wf2.reshape(1, HID).astype(jnp.bfloat16)
    bf2_r = bf2.reshape(1, 1)

    out = pl.pallas_call(
        _classifier_kernel,
        out_shape=jax.ShapeDtypeStruct((n_tiles, 1, b_tile), jnp.float32),
        grid_spec=pltpu.PrefetchScalarGridSpec(
            num_scalar_prefetch=0,
            grid=(n_tiles,),
            in_specs=[
                pl.BlockSpec((b_tile, L * CIN_PAD), lambda b: (b, 0)),       # x tile
                pl.BlockSpec((L * CIN_PAD, L * C_OUT), lambda b: (0, 0)),    # conv1 Toeplitz
                pl.BlockSpec((1, L * C_OUT), lambda b: (0, 0)),              # conv1 bias
                pl.BlockSpec((L * C_OUT, L * C_OUT), lambda b: (0, 0)),      # conv2 Toeplitz
                pl.BlockSpec((1, L * C_OUT), lambda b: (0, 0)),              # conv2 bias
                pl.BlockSpec((HID, HID), lambda b: (0, 0)),                  # fc1 weight (dup)
                pl.BlockSpec((1, HID), lambda b: (0, 0)),                    # fc1 bias
                pl.BlockSpec((1, HID), lambda b: (0, 0)),                    # fc2 weight
                pl.BlockSpec((1, 1), lambda b: (0, 0)),                      # fc2 bias
            ],
            out_specs=pl.BlockSpec((1, 1, b_tile), lambda b: (b, 0, 0)),     # lane-dense row
        ),
        compiler_params=pltpu.CompilerParams(
            dimension_semantics=("parallel",),      # disjoint output tile per step
            vmem_limit_bytes=48 * 1024 * 1024),     # fits v7x's 64 MiB/TC with headroom
    )(x2d, w1_big, b1_t, w2_big, b2_t, wf1_dup, bf1_r, wf2_r, bf2_r)

    return out.reshape(b_pad, 1)[:B]


def ref_forward(x, params):
    """Pure-JAX reference mirroring the PyTorch module (f32)."""
    w1, b1, w2, b2, wf1, bf1, wf2, bf2 = params
    xc = jnp.transpose(x, (0, 2, 1))                    # (B, C_in, L)
    dn = ('NCH', 'OIH', 'NCH')
    y1 = lax.conv_general_dilated(xc, w1, window_strides=(1,), padding='SAME',
                                  rhs_dilation=(DIL,), dimension_numbers=dn)
    y1 = jax.nn.relu(y1 + b1[None, :, None])
    y2 = lax.conv_general_dilated(y1, w2, window_strides=(1,), padding='SAME',
                                  rhs_dilation=(1,), dimension_numbers=dn)
    y2 = jax.nn.relu(y2 + b2[None, :, None])
    pooled = jnp.mean(y2, axis=-1)                      # (B, C_out)
    h = jax.nn.relu(pooled @ wf1.T + bf1)
    return jax.nn.sigmoid(h @ wf2.T + bf2)


if __name__ == "__main__":
    key = jax.random.PRNGKey(0)
    ks = jax.random.split(key, 9)
    # deterministic synthetic parameters (PyTorch weight conventions)
    w1 = jax.random.normal(ks[1], (C_OUT, IN_DIM, K), jnp.float32) * 0.10
    b1 = jax.random.normal(ks[2], (C_OUT,), jnp.float32) * 0.10
    w2 = jax.random.normal(ks[3], (C_OUT, C_OUT, K), jnp.float32) * 0.05
    b2 = jax.random.normal(ks[4], (C_OUT,), jnp.float32) * 0.10
    wf1 = jax.random.normal(ks[5], (HID, C_OUT), jnp.float32) * 0.10
    bf1 = jax.random.normal(ks[6], (HID,), jnp.float32) * 0.10
    wf2 = jax.random.normal(ks[7], (1, HID), jnp.float32) * 0.10
    bf2 = jax.random.normal(ks[8], (1,), jnp.float32) * 0.10
    params = (w1, b1, w2, b2, wf1, bf1, wf2, bf2)

    # Small case (B=4) plus a multi-tile, non-multiple-of-tile case (B=600,
    # b_tile=304, n_tiles=2) to exercise padding and the parallel grid axis.
    for B in (4, 600):
        x = jax.random.normal(jax.random.fold_in(ks[0], B),
                              (B, SEQ_LEN, IN_DIM), jnp.float32)
        out = jax.block_until_ready(protein_conv1d_classifier(x, params))
        ref = jax.block_until_ready(ref_forward(x, params))
        # bf16 MXU inputs (f32 accumulation) -> slightly looser tolerance.
        np.testing.assert_allclose(np.asarray(out), np.asarray(ref),
                                   rtol=2e-2, atol=2e-2)
    print("KERNEL_OK")
</pallas_src>

<mosaic_0001>
module attributes {stable_mosaic.version = 11 : i64} {
  func.func @_classifier_kernel(%arg0: i32, %arg1: memref<16x512xf32, #tpu.memory_space<vmem>>, %arg2: memref<512x1024xbf16, #tpu.memory_space<vmem>>, %arg3: memref<1x1024xf32, #tpu.memory_space<vmem>>, %arg4: memref<1024x1024xbf16, #tpu.memory_space<vmem>>, %arg5: memref<1x1024xf32, #tpu.memory_space<vmem>>, %arg6: memref<128x128xbf16, #tpu.memory_space<vmem>>, %arg7: memref<1x128xf32, #tpu.memory_space<vmem>>, %arg8: memref<1x128xbf16, #tpu.memory_space<vmem>>, %arg9: memref<1x1xf32, #tpu.memory_space<vmem>>, %arg10: memref<1x1x16xf32, #tpu.memory_space<vmem>>) attributes {dimension_semantics = [#tpu.dimension_semantics<parallel>], iteration_bounds = array<i64: 2>, scalar_prefetch = 0 : i64, scratch_operands = 0 : i64, tpu.core_type = #tpu.core_type<tc>, window_params = [{transform_indices = @transform_0, window_bounds = array<i64: 16, 512>}, {pipeline_mode = #tpu.pipeline_mode<synchronous>, transform_indices = @transform_1, window_bounds = array<i64: 512, 1024>}, {pipeline_mode = #tpu.pipeline_mode<synchronous>, transform_indices = @transform_2, window_bounds = array<i64: 1, 1024>}, {pipeline_mode = #tpu.pipeline_mode<synchronous>, transform_indices = @transform_3, window_bounds = array<i64: 1024, 1024>}, {pipeline_mode = #tpu.pipeline_mode<synchronous>, transform_indices = @transform_4, window_bounds = array<i64: 1, 1024>}, {pipeline_mode = #tpu.pipeline_mode<synchronous>, transform_indices = @transform_5, window_bounds = array<i64: 128, 128>}, {pipeline_mode = #tpu.pipeline_mode<synchronous>, transform_indices = @transform_6, window_bounds = array<i64: 1, 128>}, {pipeline_mode = #tpu.pipeline_mode<synchronous>, transform_indices = @transform_7, window_bounds = array<i64: 1, 128>}, {pipeline_mode = #tpu.pipeline_mode<synchronous>, transform_indices = @transform_8, window_bounds = array<i64: 1, 1>}, {transform_indices = @transform_9, window_bounds = array<i64: 1, 1, 16>}]} {
    %c0 = arith.constant 0 : index
    %c0_0 = arith.constant 0 : index
    %0 = vector.load %arg1[%c0, %c0_0] : memref<16x512xf32, #tpu.memory_space<vmem>>, vector<16x512xf32>
    %1 = arith.truncf %0 : vector<16x512xf32> to vector<16x512xbf16>
    %2 = vector.extract_strided_slice %1 {offsets = [0, 0], sizes = [16, 256], strides = [1, 1]} : vector<16x512xbf16> to vector<16x256xbf16>
    %c0_1 = arith.constant 0 : index
    %c0_2 = arith.constant 0 : index
    %3 = vector.load %arg2[%c0_1, %c0_2] : memref<512x1024xbf16, #tpu.memory_space<vmem>>, vector<256x256xbf16>
    %cst = arith.constant dense<0.000000e+00> : vector<16x256xf32>
    %4 = tpu.matmul %2, %3, %cst {dimension_numbers = #tpu.dot_dimension_numbers<[1], [0], [0], [1], [0, 0, 1, 1], [], []>} : vector<16x256xbf16>, vector<256x256xbf16>, vector<16x256xf32> -> vector<16x256xf32>
    %c0_3 = arith.constant 0 : index
    %c0_4 = arith.constant 0 : index
    %5 = vector.load %arg3[%c0_3, %c0_4] : memref<1x1024xf32, #tpu.memory_space<vmem>>, vector<1x256xf32>
    %6 = vector.broadcast %5 : vector<1x256xf32> to vector<16x256xf32>
    %7 = arith.addf %4, %6 : vector<16x256xf32>
    %cst_5 = arith.constant 0.000000e+00 : f32
    %8 = vector.broadcast %cst_5 : f32 to vector<16x256xf32>
    %9 = arith.maximumf %7, %8 : vector<16x256xf32>
    %10 = arith.truncf %9 : vector<16x256xf32> to vector<16x256xbf16>
    %11 = vector.extract_strided_slice %1 {offsets = [0, 0], sizes = [16, 384], strides = [1, 1]} : vector<16x512xbf16> to vector<16x384xbf16>
    %c0_6 = arith.constant 0 : index
    %c256 = arith.constant 256 : index
    %12 = vector.load %arg2[%c0_6, %c256] : memref<512x1024xbf16, #tpu.memory_space<vmem>>, vector<384x256xbf16>
    %cst_7 = arith.constant dense<0.000000e+00> : vector<16x256xf32>
    %13 = tpu.matmul %11, %12, %cst_7 {dimension_numbers = #tpu.dot_dimension_numbers<[1], [0], [0], [1], [0, 0, 1, 1], [], []>} : vector<16x384xbf16>, vector<384x256xbf16>, vector<16x256xf32> -> vector<16x256xf32>
    %c0_8 = arith.constant 0 : index
    %c256_9 = arith.constant 256 : index
    %14 = vector.load %arg3[%c0_8, %c256_9] : memref<1x1024xf32, #tpu.memory_space<vmem>>, vector<1x256xf32>
    %15 = vector.broadcast %14 : vector<1x256xf32> to vector<16x256xf32>
    %16 = arith.addf %13, %15 : vector<16x256xf32>
    %cst_10 = arith.constant 0.000000e+00 : f32
    %17 = vector.broadcast %cst_10 : f32 to vector<16x256xf32>
    %18 = arith.maximumf %16, %17 : vector<16x256xf32>
    %19 = arith.truncf %18 : vector<16x256xf32> to vector<16x256xbf16>
    %20 = vector.extract_strided_slice %1 {offsets = [0, 128], sizes = [16, 384], strides = [1, 1]} : vector<16x512xbf16> to vector<16x384xbf16>
    %c128 = arith.constant 128 : index
    %c512 = arith.constant 512 : index
    %21 = vector.load %arg2[%c128, %c512] : memref<512x1024xbf16, #tpu.memory_space<vmem>>, vector<384x256xbf16>
    %cst_11 = arith.constant dense<0.000000e+00> : vector<16x256xf32>
    %22 = tpu.matmul %20, %21, %cst_11 {dimension_numbers = #tpu.dot_dimension_numbers<[1], [0], [0], [1], [0, 0, 1, 1], [], []>} : vector<16x384xbf16>, vector<384x256xbf16>, vector<16x256xf32> -> vector<16x256xf32>
    %c0_12 = arith.constant 0 : index
    %c512_13 = arith.constant 512 : index
    %23 = vector.load %arg3[%c0_12, %c512_13] : memref<1x1024xf32, #tpu.memory_space<vmem>>, vector<1x256xf32>
    %24 = vector.broadcast %23 : vector<1x256xf32> to vector<16x256xf32>
    %25 = arith.addf %22, %24 : vector<16x256xf32>
    %cst_14 = arith.constant 0.000000e+00 : f32
    %26 = vector.broadcast %cst_14 : f32 to vector<16x256xf32>
    %27 = arith.maximumf %25, %26 : vector<16x256xf32>
    %28 = arith.truncf %27 : vector<16x256xf32> to vector<16x256xbf16>
    %29 = vector.extract_strided_slice %1 {offsets = [0, 256], sizes = [16, 256], strides = [1, 1]} : vector<16x512xbf16> to vector<16x256xbf16>
    %c256_15 = arith.constant 256 : index
    %c768 = arith.constant 768 : index
    %30 = vector.load %arg2[%c256_15, %c768] : memref<512x1024xbf16, #tpu.memory_space<vmem>>, vector<256x256xbf16>
    %cst_16 = arith.constant dense<0.000000e+00> : vector<16x256xf32>
    %31 = tpu.matmul %29, %30, %cst_16 {dimension_numbers = #tpu.dot_dimension_numbers<[1], [0], [0], [1], [0, 0, 1, 1], [], []>} : vector<16x256xbf16>, vector<256x256xbf16>, vector<16x256xf32> -> vector<16x256xf32>
    %c0_17 = arith.constant 0 : index
    %c768_18 = arith.constant 768 : index
    %32 = vector.load %arg3[%c0_17, %c768_18] : memref<1x1024xf32, #tpu.memory_space<vmem>>, vector<1x256xf32>
    %33 = vector.broadcast %32 : vector<1x256xf32> to vector<16x256xf32>
    %34 = arith.addf %31, %33 : vector<16x256xf32>
    %cst_19 = arith.constant 0.000000e+00 : f32
    %35 = vector.broadcast %cst_19 : f32 to vector<16x256xf32>
    %36 = arith.maximumf %34, %35 : vector<16x256xf32>
    %37 = arith.truncf %36 : vector<16x256xf32> to vector<16x256xbf16>
    %38 = tpu.concatenate %10, %19, %28, %37 in 1 : vector<16x256xbf16>, vector<16x256xbf16>, vector<16x256xbf16>, vector<16x256xbf16> -> vector<16x1024xbf16>
    %cst_20 = arith.constant 0.000000e+00 : f32
    %39 = vector.broadcast %cst_20 : f32 to vector<16x128xf32>
    %40 = vector.extract_strided_slice %38 {offsets = [0, 0], sizes = [16, 384], strides = [1, 1]} : vector<16x1024xbf16> to vector<16x384xbf16>
    %c0_21 = arith.constant 0 : index
    %c0_22 = arith.constant 0 : index
    %41 = vector.load %arg4[%c0_21, %c0_22] : memref<1024x1024xbf16, #tpu.memory_space<vmem>>, vector<384x256xbf16>
    %cst_23 = arith.constant dense<0.000000e+00> : vector<16x256xf32>
    %42 = tpu.matmul %40, %41, %cst_23 {dimension_numbers = #tpu.dot_dimension_numbers<[1], [0], [0], [1], [0, 0, 1, 1], [], []>} : vector<16x384xbf16>, vector<384x256xbf16>, vector<16x256xf32> -> vector<16x256xf32>
    %c0_24 = arith.constant 0 : index
    %c0_25 = arith.constant 0 : index
    %43 = vector.load %arg5[%c0_24, %c0_25] : memref<1x1024xf32, #tpu.memory_space<vmem>>, vector<1x256xf32>
    %44 = vector.broadcast %43 : vector<1x256xf32> to vector<16x256xf32>
    %45 = arith.addf %42, %44 : vector<16x256xf32>
    %cst_26 = arith.constant 0.000000e+00 : f32
    %46 = vector.broadcast %cst_26 : f32 to vector<16x256xf32>
    %47 = arith.maximumf %45, %46 : vector<16x256xf32>
    %48 = vector.extract_strided_slice %47 {offsets = [0, 0], sizes = [16, 128], strides = [1, 1]} : vector<16x256xf32> to vector<16x128xf32>
    %49 = arith.addf %39, %48 : vector<16x128xf32>
    %50 = vector.extract_strided_slice %47 {offsets = [0, 128], sizes = [16, 128], strides = [1, 1]} : vector<16x256xf32> to vector<16x128xf32>
    %51 = arith.addf %49, %50 : vector<16x128xf32>
    %52 = vector.extract_strided_slice %38 {offsets = [0, 128], sizes = [16, 512], strides = [1, 1]} : vector<16x1024xbf16> to vector<16x512xbf16>
    %c128_27 = arith.constant 128 : index
    %c256_28 = arith.constant 256 : index
    %53 = vector.load %arg4[%c128_27, %c256_28] : memref<1024x1024xbf16, #tpu.memory_space<vmem>>, vector<512x256xbf16>
    %cst_29 = arith.constant dense<0.000000e+00> : vector<16x256xf32>
    %54 = tpu.matmul %52, %53, %cst_29 {dimension_numbers = #tpu.dot_dimension_numbers<[1], [0], [0], [1], [0, 0, 1, 1], [], []>} : vector<16x512xbf16>, vector<512x256xbf16>, vector<16x256xf32> -> vector<16x256xf32>
    %c0_30 = arith.constant 0 : index
    %c256_31 = arith.constant 256 : index
    %55 = vector.load %arg5[%c0_30, %c256_31] : memref<1x1024xf32, #tpu.memory_space<vmem>>, vector<1x256xf32>
    %56 = vector.broadcast %55 : vector<1x256xf32> to vector<16x256xf32>
    %57 = arith.addf %54, %56 : vector<16x256xf32>
    %cst_32 = arith.constant 0.000000e+00 : f32
    %58 = vector.broadcast %cst_32 : f32 to vector<16x256xf32>
    %59 = arith.maximumf %57, %58 : vector<16x256xf32>
    %60 = vector.extract_strided_slice %59 {offsets = [0, 0], sizes = [16, 128], strides = [1, 1]} : vector<16x256xf32> to vector<16x128xf32>
    %61 = arith.addf %51, %60 : vector<16x128xf32>
    %62 = vector.extract_strided_slice %59 {offsets = [0, 128], sizes = [16, 128], strides = [1, 1]} : vector<16x256xf32> to vector<16x128xf32>
    %63 = arith.addf %61, %62 : vector<16x128xf32>
    %64 = vector.extract_strided_slice %38 {offsets = [0, 384], sizes = [16, 512], strides = [1, 1]} : vector<16x1024xbf16> to vector<16x512xbf16>
    %c384 = arith.constant 384 : index
    %c512_33 = arith.constant 512 : index
    %65 = vector.load %arg4[%c384, %c512_33] : memref<1024x1024xbf16, #tpu.memory_space<vmem>>, vector<512x256xbf16>
    %cst_34 = arith.constant dense<0.000000e+00> : vector<16x256xf32>
    %66 = tpu.matmul %64, %65, %cst_34 {dimension_numbers = #tpu.dot_dimension_numbers<[1], [0], [0], [1], [0, 0, 1, 1], [], []>} : vector<16x512xbf16>, vector<512x256xbf16>, vector<16x256xf32> -> vector<16x256xf32>
    %c0_35 = arith.constant 0 : index
    %c512_36 = arith.constant 512 : index
    %67 = vector.load %arg5[%c0_35, %c512_36] : memref<1x1024xf32, #tpu.memory_space<vmem>>, vector<1x256xf32>
    %68 = vector.broadcast %67 : vector<1x256xf32> to vector<16x256xf32>
    %69 = arith.addf %66, %68 : vector<16x256xf32>
    %cst_37 = arith.constant 0.000000e+00 : f32
    %70 = vector.broadcast %cst_37 : f32 to vector<16x256xf32>
    %71 = arith.maximumf %69, %70 : vector<16x256xf32>
    %72 = vector.extract_strided_slice %71 {offsets = [0, 0], sizes = [16, 128], strides = [1, 1]} : vector<16x256xf32> to vector<16x128xf32>
    %73 = arith.addf %63, %72 : vector<16x128xf32>
    %74 = vector.extract_strided_slice %71 {offsets = [0, 128], sizes = [16, 128], strides = [1, 1]} : vector<16x256xf32> to vector<16x128xf32>
    %75 = arith.addf %73, %74 : vector<16x128xf32>
    %76 = vector.extract_strided_slice %38 {offsets = [0, 640], sizes = [16, 384], strides = [1, 1]} : vector<16x1024xbf16> to vector<16x384xbf16>
    %c640 = arith.constant 640 : index
    %c768_38 = arith.constant 768 : index
    %77 = vector.load %arg4[%c640, %c768_38] : memref<1024x1024xbf16, #tpu.memory_space<vmem>>, vector<384x256xbf16>
    %cst_39 = arith.constant dense<0.000000e+00> : vector<16x256xf32>
    %78 = tpu.matmul %76, %77, %cst_39 {dimension_numbers = #tpu.dot_dimension_numbers<[1], [0], [0], [1], [0, 0, 1, 1], [], []>} : vector<16x384xbf16>, vector<384x256xbf16>, vector<16x256xf32> -> vector<16x256xf32>
    %c0_40 = arith.constant 0 : index
    %c768_41 = arith.constant 768 : index
    %79 = vector.load %arg5[%c0_40, %c768_41] : memref<1x1024xf32, #tpu.memory_space<vmem>>, vector<1x256xf32>
    %80 = vector.broadcast %79 : vector<1x256xf32> to vector<16x256xf32>
    %81 = arith.addf %78, %80 : vector<16x256xf32>
    %cst_42 = arith.constant 0.000000e+00 : f32
    %82 = vector.broadcast %cst_42 : f32 to vector<16x256xf32>
    %83 = arith.maximumf %81, %82 : vector<16x256xf32>
    %84 = vector.extract_strided_slice %83 {offsets = [0, 0], sizes = [16, 128], strides = [1, 1]} : vector<16x256xf32> to vector<16x128xf32>
    %85 = arith.addf %75, %84 : vector<16x128xf32>
    %86 = vector.extract_strided_slice %83 {offsets = [0, 128], sizes = [16, 128], strides = [1, 1]} : vector<16x256xf32> to vector<16x128xf32>
    %87 = arith.addf %85, %86 : vector<16x128xf32>
    %cst_43 = arith.constant 6.250000e-02 : f32
    %88 = vector.broadcast %cst_43 : f32 to vector<16x128xf32>
    %89 = arith.mulf %87, %88 : vector<16x128xf32>
    %90 = arith.truncf %89 : vector<16x128xf32> to vector<16x128xbf16>
    %c0_44 = arith.constant 0 : index
    %c0_45 = arith.constant 0 : index
    %91 = vector.load %arg6[%c0_44, %c0_45] : memref<128x128xbf16, #tpu.memory_space<vmem>>, vector<128x128xbf16>
    %cst_46 = arith.constant dense<0.000000e+00> : vector<16x128xf32>
    %92 = tpu.matmul %90, %91, %cst_46 {dimension_numbers = #tpu.dot_dimension_numbers<[1], [0], [0], [1], [0, 0, 1, 1], [], []>} : vector<16x128xbf16>, vector<128x128xbf16>, vector<16x128xf32> -> vector<16x128xf32>
    %c0_47 = arith.constant 0 : index
    %c0_48 = arith.constant 0 : index
    %93 = vector.load %arg7[%c0_47, %c0_48] : memref<1x128xf32, #tpu.memory_space<vmem>>, vector<1x128xf32>
    %94 = vector.broadcast %93 : vector<1x128xf32> to vector<16x128xf32>
    %95 = arith.addf %92, %94 : vector<16x128xf32>
    %cst_49 = arith.constant 0.000000e+00 : f32
    %96 = vector.broadcast %cst_49 : f32 to vector<16x128xf32>
    %97 = arith.maximumf %95, %96 : vector<16x128xf32>
    %c0_50 = arith.constant 0 : index
    %c0_51 = arith.constant 0 : index
    %98 = vector.load %arg8[%c0_50, %c0_51] : memref<1x128xbf16, #tpu.memory_space<vmem>>, vector<1x128xbf16>
    %99 = arith.truncf %97 : vector<16x128xf32> to vector<16x128xbf16>
    %cst_52 = arith.constant dense<0.000000e+00> : vector<1x16xf32>
    %100 = tpu.matmul %98, %99, %cst_52 {dimension_numbers = #tpu.dot_dimension_numbers<[1], [1], [0], [0], [0, 0, 1, 0], [], []>} : vector<1x128xbf16>, vector<16x128xbf16>, vector<1x16xf32> -> vector<1x16xf32>
    %c0_53 = arith.constant 0 : index
    %c0_54 = arith.constant 0 : index
    %101 = vector.load %arg9[%c0_53, %c0_54] : memref<1x1xf32, #tpu.memory_space<vmem>>, vector<1x1xf32>
    %102 = vector.broadcast %101 : vector<1x1xf32> to vector<1x16xf32>
    %103 = arith.addf %100, %102 : vector<1x16xf32>
    %104 = arith.negf %103 : vector<1x16xf32>
    %105 = math.exp %104 : vector<1x16xf32>
    %cst_55 = arith.constant 1.000000e+00 : f32
    %106 = vector.broadcast %cst_55 : f32 to vector<1x16xf32>
    %107 = arith.addf %106, %105 : vector<1x16xf32>
    %108 = arith.divf %106, %107 : vector<1x16xf32>
    %c0_56 = arith.constant 0 : index
    %c0_57 = arith.constant 0 : index
    %c0_58 = arith.constant 0 : index
    %109 = vector.load %arg10[%c0_56, %c0_57, %c0_58] : memref<1x1x16xf32, #tpu.memory_space<vmem>>, vector<1x1x16xf32>
    %110 = vector.shape_cast %109 : vector<1x1x16xf32> to vector<1x16xf32>
    %111 = vector.shape_cast %108 : vector<1x16xf32> to vector<1x1x16xf32>
    tpu.vector_store %arg10[%c0_56, %c0_57, %c0_58], %111 {strides = array<i32>} : memref<1x1x16xf32, #tpu.memory_space<vmem>>, vector<1x1x16xf32>,
    return
  }
  func.func @transform_0(%arg0: i32) -> (i32, i32) {
    %c0_i32 = arith.constant 0 : i32
    %c0_i32_0 = arith.constant 0 : i32
    return %arg0, %c0_i32 : i32, i32
  }
  func.func @transform_1(%arg0: i32) -> (i32, i32) {
    %c0_i32 = arith.constant 0 : i32
    %c0_i32_0 = arith.constant 0 : i32
    %c0_i32_1 = arith.constant 0 : i32
    return %c0_i32, %c0_i32_0 : i32, i32
  }
  func.func @transform_2(%arg0: i32) -> (i32, i32) {
    %c0_i32 = arith.constant 0 : i32
    %c0_i32_0 = arith.constant 0 : i32
    %c0_i32_1 = arith.constant 0 : i32
    return %c0_i32, %c0_i32_0 : i32, i32
  }
  func.func @transform_3(%arg0: i32) -> (i32, i32) {
    %c0_i32 = arith.constant 0 : i32
    %c0_i32_0 = arith.constant 0 : i32
    %c0_i32_1 = arith.constant 0 : i32
    return %c0_i32, %c0_i32_0 : i32, i32
  }
  func.func @transform_4(%arg0: i32) -> (i32, i32) {
    %c0_i32 = arith.constant 0 : i32
    %c0_i32_0 = arith.constant 0 : i32
    %c0_i32_1 = arith.constant 0 : i32
    return %c0_i32, %c0_i32_0 : i32, i32
  }
  func.func @transform_5(%arg0: i32) -> (i32, i32) {
    %c0_i32 = arith.constant 0 : i32
    %c0_i32_0 = arith.constant 0 : i32
    %c0_i32_1 = arith.constant 0 : i32
    return %c0_i32, %c0_i32_0 : i32, i32
  }
  func.func @transform_6(%arg0: i32) -> (i32, i32) {
    %c0_i32 = arith.constant 0 : i32
    %c0_i32_0 = arith.constant 0 : i32
    %c0_i32_1 = arith.constant 0 : i32
    return %c0_i32, %c0_i32_0 : i32, i32
  }
  func.func @transform_7(%arg0: i32) -> (i32, i32) {
    %c0_i32 = arith.constant 0 : i32
    %c0_i32_0 = arith.constant 0 : i32
    %c0_i32_1 = arith.constant 0 : i32
    return %c0_i32, %c0_i32_0 : i32, i32
  }
  func.func @transform_8(%arg0: i32) -> (i32, i32) {
    %c0_i32 = arith.constant 0 : i32
    %c0_i32_0 = arith.constant 0 : i32
    %c0_i32_1 = arith.constant 0 : i32
    return %c0_i32, %c0_i32_0 : i32, i32
  }
  func.func @transform_9(%arg0: i32) -> (i32, i32, i32) {
    %c0_i32 = arith.constant 0 : i32
    %c0_i32_0 = arith.constant 0 : i32
    %c0_i32_1 = arith.constant 0 : i32
    return %arg0, %c0_i32, %c0_i32_0 : i32, i32, i32
  }
}

</mosaic_0001>

<llo_original>
// kernel: tpu_custom_call.1
$region0: #{tpu_custom_call.1}
  #allocation0 [shape = 'u32[]', space=smem, size = 0x4, offset = 0x4, fixed_abs, tag = 'smem constant byte address 0x4 - core index']
  #allocation1 [shape = 'u32[144,128]{1,0:T(1,128)}', space=vmem, size = 0x12000, scoped, tag = 'internal scratch']
  #allocation2 [shape = 'f32[1,1]{1,0:T(1,128)S(1)}', space=vmem, size = 0x200, scoped, tag = 'scoped memory for tpu_custom_call.1']
  %s0 = inlined_call_operand.hbm [shape: f32[32,512], index: 0, kind: input, shape index: {}]
  %s1 = inlined_call_operand.hbm [shape: bf16[512,1024], index: 1, kind: input, shape index: {}]
  %s2 = inlined_call_operand.hbm [shape: f32[1,1024], index: 2, kind: input, shape index: {}]
  %s3 = inlined_call_operand.hbm [shape: bf16[1024,1024], index: 3, kind: input, shape index: {}]
  %s4 = inlined_call_operand.hbm [shape: f32[1,1024], index: 4, kind: input, shape index: {}]
  %s5 = inlined_call_operand.hbm [shape: bf16[128,128], index: 5, kind: input, shape index: {}]
  %s6 = inlined_call_operand.hbm [shape: f32[1,128], index: 6, kind: input, shape index: {}]
  %s7 = inlined_call_operand.hbm [shape: bf16[1,128], index: 7, kind: input, shape index: {}]
  %s8 = inlined_call_operand.<no memory space> [shape: f32[1,1], index: 8, kind: input, shape index: {}]
  %s9 = inlined_call_operand.hbm [shape: f32[2,1,16], index: 9, kind: output, shape index: {}]
  %s10 = sld [smem:[#allocation0]]
  $region101: #{tpu_custom_call.1} parent=0
    _
  %s12 = ssub.s32 1, %s10
  %s13 = scalar_select 0, %s12, %s10
  %v14 = vstv %s8
  %15 = vst [vmem:[#allocation2] sm:$0x1] %v14
  $region1: #{tpu_custom_call.1} parent=0
    #allocation3 [shape = 'u8[65536]{0}', space=vmem, size = 0x10000, scoped, tag = 'input window, operand 0']
    #allocation4 [shape = 's32[2]{0}', space=sflag, size = 0x8, scoped, tag = 'scoped memory for tpu_custom_call.1']
    #allocation5 [shape = 's32[2]{0}', space=sflag, size = 0x8, scoped, tag = 'scoped memory for tpu_custom_call.1']
    #allocation6 [shape = 'u8[1048576]{0}', space=vmem, size = 0x100000, scoped, tag = 'input window, operand 1, single buffered']
    #allocation7 [shape = 's32[1]{0}', space=sflag, size = 0x4, scoped, tag = 'scoped memory for tpu_custom_call.1']
    #allocation8 [shape = 'u8[4096]{0}', space=vmem, size = 0x1000, scoped, tag = 'input window, operand 2, single buffered']
    #allocation9 [shape = 'u8[2097152]{0}', space=vmem, size = 0x200000, scoped, tag = 'input window, operand 3, single buffered']
    #allocation10 [shape = 's32[1]{0}', space=sflag, size = 0x4, scoped, tag = 'scoped memory for tpu_custom_call.1']
    #allocation11 [shape = 'u8[4096]{0}', space=vmem, size = 0x1000, scoped, tag = 'input window, operand 4, single buffered']
    #allocation12 [shape = 'u8[32768]{0}', space=vmem, size = 0x8000, scoped, tag = 'input window, operand 5, single buffered']
    #allocation13 [shape = 's32[1]{0}', space=sflag, size = 0x4, scoped, tag = 'scoped memory for tpu_custom_call.1']
    #allocation14 [shape = 'u8[512]{0}', space=vmem, size = 0x400, scoped, tag = 'input window, operand 6, single buffered']
    #allocation15 [shape = 'u8[512]{0}', space=vmem, size = 0x400, scoped, tag = 'input window, operand 7, single buffered']
    #allocation16 [shape = 's32[1]{0}', space=sflag, size = 0x4, scoped, tag = 'scoped memory for tpu_custom_call.1']
    #allocation17 [shape = 'u8[1024]{0}', space=vmem, size = 0x400, scoped, tag = 'output window, operand 0']
    %16 = vsyncpa [#allocation4], 0
    %s17 = scalar_lea.sflag [#allocation4], 1
    %18 = vsyncpa %s17, 0
    %19 = vsyncpa [#allocation7], 0
    %20 = vsyncpa [#allocation10], 0
    %21 = vsyncpa [#allocation13], 0
    %22 = vsyncpa [#allocation16], 0
    %23 = vsyncpa [#allocation5], 0
    %s24 = scalar_lea.sflag [#allocation5], 1
    %25 = vsyncpa %s24, 0
    loop: start=0, step=1, limit=4
    $region2: #{tpu_custom_call.1} parent=1 // loop_pre_header
      _
    $region3: #{tpu_custom_call.1} parent=1 // loop_header
      %s27 = sphi 0, %s31
      %p28 = scmp.ge.s32.totalorder %s27, 4
      %s37 = sphi 0, %s39
      %s40 = sphi 0, %s37
      %s41 = sphi 0, %s40
      %s57 = sphi 0, %s41
      %s61 = sphi 0, %s61
      %s63 = sphi 0, %s61
      %s64 = sphi 0, %s63
      %s78 = sphi 0, %s64
      %s82 = sphi 0, %s82
      %s84 = sphi 0, %s82
      %s85 = sphi 0, %s84
      %s99 = sphi 0, %s85
      %s103 = sphi 0, %s103
      %s105 = sphi 0, %s103
      %s106 = sphi 0, %s105
      %s120 = sphi 0, %s106
      %s124 = sphi 0, %s124
      %s126 = sphi 0, %s124
      %s127 = sphi 0, %s126
      %s141 = sphi 0, %s127
      %s145 = sphi 0, %s145
      %s147 = sphi 0, %s145
      %s148 = sphi 0, %s147
      %s162 = sphi 0, %s148
      %s166 = sphi 0, %s166
      %s168 = sphi 0, %s166
      %s169 = sphi 0, %s168
      %s183 = sphi 0, %s169
      %s187 = sphi 0, %s187
      %s189 = sphi 0, %s187
      %s190 = sphi 0, %s189
      %s204 = sphi 0, %s190
      %s208 = sphi 0, %s208
      %s210 = sphi 0, %s208
      %s211 = sphi 0, %s210
      %s225 = sphi 0, %s211
      %s231 = sphi 0, %s233
      %s234 = sphi 0, %s231
      %s235 = sphi 0, %s234
      %s251 = sphi 0, %s235
    $region4: #{tpu_custom_call.1} parent=1 // loop_header_branch
      %30 = sbr.rel (%p28) target = $region8
    $region5: #{tpu_custom_call.1} parent=1 // loop_body
      %s32 = ssub.s32 %s27, 1
      %s33 = ssub.s32 %s27, 2
      %s34 = sadd.s32 %s27, 1
      %s35 = ssub.s32 %s27, %s34
      %p36 = scmp.eq.s32.totalorder %s35, 0
      %s38 = sadd.s32 %s37, 1
      %s39 = scalar_select %p36, %s37, %s38
      %p42 = pneg %p36
      %p43 = scmp.eq.s32.totalorder %s27, 1
      %p44 = por %p42, %p43
      %p45 = scmp.ne.s32.totalorder %s37, %s40
      %p46 = scmp.eq.s32.totalorder %s27, 0
      %p47 = por %p45, %p46
      %p48 = scmp.ne.s32.totalorder %s37, %s40
      %p49 = scmp.eq.s32.totalorder %s32, 1
      %p50 = por %p48, %p49
      %p51 = scmp.ne.s32.totalorder %s40, %s41
      %p52 = scmp.eq.s32.totalorder %s32, 0
      %p53 = por %p51, %p52
      %p54 = scmp.ne.s32.totalorder %s40, %s41
      %p55 = scmp.eq.s32.totalorder %s33, 1
      %p56 = por %p54, %p55
      %p58 = scmp.ne.s32.totalorder %s41, %s57
      %p59 = scmp.eq.s32.totalorder %s33, 0
      %p60 = por %p58, %p59
      %s62 = sadd.s32 %s61, 1
      %p65 = scmp.eq.s32.totalorder %s27, 1
      %p66 = scmp.ne.s32.totalorder %s61, %s63
      %p67 = scmp.eq.s32.totalorder %s27, 0
      %p68 = por %p66, %p67
      %p69 = scmp.ne.s32.totalorder %s61, %s63
      %p70 = scmp.eq.s32.totalorder %s32, 1
      %p71 = por %p69, %p70
      %p72 = scmp.ne.s32.totalorder %s63, %s64
      %p73 = scmp.eq.s32.totalorder %s32, 0
      %p74 = por %p72, %p73
      %p75 = scmp.ne.s32.totalorder %s63, %s64
      %p76 = scmp.eq.s32.totalorder %s33, 1
      %p77 = por %p75, %p76
      %p79 = scmp.ne.s32.totalorder %s64, %s78
      %p80 = scmp.eq.s32.totalorder %s33, 0
      %p81 = por %p79, %p80
      %s83 = sadd.s32 %s82, 1
      %p86 = scmp.eq.s32.totalorder %s27, 1
      %p87 = scmp.ne.s32.totalorder %s82, %s84
      %p88 = scmp.eq.s32.totalorder %s27, 0
      %p89 = por %p87, %p88
      %p90 = scmp.ne.s32.totalorder %s82, %s84
      %p91 = scmp.eq.s32.totalorder %s32, 1
      %p92 = por %p90, %p91
      %p93 = scmp.ne.s32.totalorder %s84, %s85
      %p94 = scmp.eq.s32.totalorder %s32, 0
      %p95 = por %p93, %p94
      %p96 = scmp.ne.s32.totalorder %s84, %s85
      %p97 = scmp.eq.s32.totalorder %s33, 1
      %p98 = por %p96, %p97
      %p100 = scmp.ne.s32.totalorder %s85, %s99
      %p101 = scmp.eq.s32.totalorder %s33, 0
      %p102 = por %p100, %p101
      %s104 = sadd.s32 %s103, 1
      %p107 = scmp.eq.s32.totalorder %s27, 1
      %p108 = scmp.ne.s32.totalorder %s103, %s105
      %p109 = scmp.eq.s32.totalorder %s27, 0
      %p110 = por %p108, %p109
      %p111 = scmp.ne.s32.totalorder %s103, %s105
      %p112 = scmp.eq.s32.totalorder %s32, 1
      %p113 = por %p111, %p112
      %p114 = scmp.ne.s32.totalorder %s105, %s106
      %p115 = scmp.eq.s32.totalorder %s32, 0
      %p116 = por %p114, %p115
      %p117 = scmp.ne.s32.totalorder %s105, %s106
      %p118 = scmp.eq.s32.totalorder %s33, 1
      %p119 = por %p117, %p118
      %p121 = scmp.ne.s32.totalorder %s106, %s120
      %p122 = scmp.eq.s32.totalorder %s33, 0
      %p123 = por %p121, %p122
      %s125 = sadd.s32 %s124, 1
      %p128 = scmp.eq.s32.totalorder %s27, 1
      %p129 = scmp.ne.s32.totalorder %s124, %s126
      %p130 = scmp.eq.s32.totalorder %s27, 0
      %p131 = por %p129, %p130
      %p132 = scmp.ne.s32.totalorder %s124, %s126
      %p133 = scmp.eq.s32.totalorder %s32, 1
      %p134 = por %p132, %p133
      %p135 = scmp.ne.s32.totalorder %s126, %s127
      %p136 = scmp.eq.s32.totalorder %s32, 0
      %p137 = por %p135, %p136
      %p138 = scmp.ne.s32.totalorder %s126, %s127
      %p139 = scmp.eq.s32.totalorder %s33, 1
      %p140 = por %p138, %p139
      %p142 = scmp.ne.s32.totalorder %s127, %s141
      %p143 = scmp.eq.s32.totalorder %s33, 0
      %p144 = por %p142, %p143
      %s146 = sadd.s32 %s145, 1
      %p149 = scmp.eq.s32.totalorder %s27, 1
      %p150 = scmp.ne.s32.totalorder %s145, %s147
      %p151 = scmp.eq.s32.totalorder %s27, 0
      %p152 = por %p150, %p151
      %p153 = scmp.ne.s32.totalorder %s145, %s147
      %p154 = scmp.eq.s32.totalorder %s32, 1
      %p155 = por %p153, %p154
      %p156 = scmp.ne.s32.totalorder %s147, %s148
      %p157 = scmp.eq.s32.totalorder %s32, 0
      %p158 = por %p156, %p157
      %p159 = scmp.ne.s32.totalorder %s147, %s148
      %p160 = scmp.eq.s32.totalorder %s33, 1
      %p161 = por %p159, %p160
      %p163 = scmp.ne.s32.totalorder %s148, %s162
      %p164 = scmp.eq.s32.totalorder %s33, 0
      %p165 = por %p163, %p164
      %s167 = sadd.s32 %s166, 1
      %p170 = scmp.eq.s32.totalorder %s27, 1
      %p171 = scmp.ne.s32.totalorder %s166, %s168
      %p172 = scmp.eq.s32.totalorder %s27, 0
      %p173 = por %p171, %p172
      %p174 = scmp.ne.s32.totalorder %s166, %s168
      %p175 = scmp.eq.s32.totalorder %s32, 1
      %p176 = por %p174, %p175
      %p177 = scmp.ne.s32.totalorder %s168, %s169
      %p178 = scmp.eq.s32.totalorder %s32, 0
      %p179 = por %p177, %p178
      %p180 = scmp.ne.s32.totalorder %s168, %s169
      %p181 = scmp.eq.s32.totalorder %s33, 1
      %p182 = por %p180, %p181
      %p184 = scmp.ne.s32.totalorder %s169, %s183
      %p185 = scmp.eq.s32.totalorder %s33, 0
      %p186 = por %p184, %p185
      %s188 = sadd.s32 %s187, 1
      %p191 = scmp.eq.s32.totalorder %s27, 1
      %p192 = scmp.ne.s32.totalorder %s187, %s189
      %p193 = scmp.eq.s32.totalorder %s27, 0
      %p194 = por %p192, %p193
      %p195 = scmp.ne.s32.totalorder %s187, %s189
      %p196 = scmp.eq.s32.totalorder %s32, 1
      %p197 = por %p195, %p196
      %p198 = scmp.ne.s32.totalorder %s189, %s190
      %p199 = scmp.eq.s32.totalorder %s32, 0
      %p200 = por %p198, %p199
      %p201 = scmp.ne.s32.totalorder %s189, %s190
      %p202 = scmp.eq.s32.totalorder %s33, 1
      %p203 = por %p201, %p202
      %p205 = scmp.ne.s32.totalorder %s190, %s204
      %p206 = scmp.eq.s32.totalorder %s33, 0
      %p207 = por %p205, %p206
      %s209 = sadd.s32 %s208, 1
      %p212 = scmp.eq.s32.totalorder %s27, 1
      %p213 = scmp.ne.s32.totalorder %s208, %s210
      %p214 = scmp.eq.s32.totalorder %s27, 0
      %p215 = por %p213, %p214
      %p216 = scmp.ne.s32.totalorder %s208, %s210
      %p217 = scmp.eq.s32.totalorder %s32, 1
      %p218 = por %p216, %p217
      %p219 = scmp.ne.s32.totalorder %s210, %s211
      %p220 = scmp.eq.s32.totalorder %s32, 0
      %p221 = por %p219, %p220
      %p222 = scmp.ne.s32.totalorder %s210, %s211
      %p223 = scmp.eq.s32.totalorder %s33, 1
      %p224 = por %p222, %p223
      %p226 = scmp.ne.s32.totalorder %s211, %s225
      %p227 = scmp.eq.s32.totalorder %s33, 0
      %p228 = por %p226, %p227
      %s229 = ssub.s32 %s27, %s34
      %p230 = scmp.eq.s32.totalorder %s229, 0
      %s232 = sadd.s32 %s231, 1
      %s233 = scalar_select %p230, %s231, %s232
      %p236 = pneg %p230
      %p237 = scmp.eq.s32.totalorder %s27, 1
      %p238 = por %p236, %p237
      %p239 = scmp.ne.s32.totalorder %s231, %s234
      %p240 = scmp.eq.s32.totalorder %s27, 0
      %p241 = por %p239, %p240
      %p242 = scmp.ne.s32.totalorder %s231, %s234
      %p243 = scmp.eq.s32.totalorder %s32, 1
      %p244 = por %p242, %p243
      %p245 = scmp.ne.s32.totalorder %s234, %s235
      %p246 = scmp.eq.s32.totalorder %s32, 0
      %p247 = por %p245, %p246
      %p248 = scmp.ne.s32.totalorder %s234, %s235
      %p249 = scmp.eq.s32.totalorder %s33, 1
      %p250 = por %p248, %p249
      %p252 = scmp.ne.s32.totalorder %s235, %s251
      %p253 = scmp.eq.s32.totalorder %s33, 0
      %p254 = por %p252, %p253
      %p255 = scmp.le.s32.totalorder 1, %s27
      %p256 = scmp.lt.s32.totalorder %s27, 3
      %p257 = pnand %p255, %p256
      %p258 = pneg %p257
      // Predicated region
      $region9: #{tpu_custom_call.1} parent=5 // pred_check
        _
      $region10: #{tpu_custom_call.1} parent=5 // pred_check_branch
        %260 = sbr.rel (%p257) target = $region12
      $region11: #{tpu_custom_call.1} parent=5 // pred_region
        %s261 = ssub.s32 %s27, 1
        // Predicated region
        $region13: #{tpu_custom_call.1} parent=11 // pred_check
          %p262 = pneg %p74
        $region14: #{tpu_custom_call.1} parent=11 // pred_check_branch
          %264 = sbr.rel (%p262) target = $region16
        $region15: #{tpu_custom_call.1} parent=11 // pred_region
          %s266 = ssub.s32 32768, 32768
          %267 = vsyncadd [#allocation7], %s266
          %s268 = sshll.u32 [#allocation6], 4
          %s269 = int_to_ptr.vmem [resolvable:$true] %s268
          %274 = dma.hbm_to_vmem [thread:$0]  %s1, 32768, %s269, [#allocation7], 512, 512, 32
        $region16: #{tpu_custom_call.1} parent=11 // pred_fallthru
          _
        // Predicated region
        $region17: #{tpu_custom_call.1} parent=11 // pred_check
          %p275 = pneg %p95
        $region18: #{tpu_custom_call.1} parent=11 // pred_check_branch
          %277 = sbr.rel (%p275) target = $region20
        $region19: #{tpu_custom_call.1} parent=11 // pred_region
          %s279 = ssub.s32 128, 128
          %280 = vsyncadd [#allocation7], %s279
          %s282 = sshll.u32 [#allocation8], 4
          %s283 = int_to_ptr.vmem [resolvable:$true] %s282
          %285 = dma.hbm_to_vmem [thread:$0]  %s2, 128, %s283, [#allocation7]
        $region20: #{tpu_custom_call.1} parent=11 // pred_fallthru
          _
        // Predicated region
        $region21: #{tpu_custom_call.1} parent=11 // pred_check
          %p286 = pneg %p116
        $region22: #{tpu_custom_call.1} parent=11 // pred_check_branch
          %288 = sbr.rel (%p286) target = $region24
        $region23: #{tpu_custom_call.1} parent=11 // pred_region
          %s290 = ssub.s32 65536, 65536
          %291 = vsyncadd [#allocation10], %s290
          %s292 = sshll.u32 [#allocation9], 4
          %s293 = int_to_ptr.vmem [resolvable:$true] %s292
          %298 = dma.hbm_to_vmem [thread:$0]  %s3, 65536, %s293, [#allocation10], 512, 512, 32
        $region24: #{tpu_custom_call.1} parent=11 // pred_fallthru
          _
        // Predicated region
        $region25: #{tpu_custom_call.1} parent=11 // pred_check
          %p299 = pneg %p137
        $region26: #{tpu_custom_call.1} parent=11 // pred_check_branch
          %301 = sbr.rel (%p299) target = $region28
        $region27: #{tpu_custom_call.1} parent=11 // pred_region
          %s303 = ssub.s32 128, 128
          %304 = vsyncadd [#allocation10], %s303
          %s306 = sshll.u32 [#allocation11], 4
          %s307 = int_to_ptr.vmem [resolvable:$true] %s306
          %309 = dma.hbm_to_vmem [thread:$0]  %s4, 128, %s307, [#allocation10]
        $region28: #{tpu_custom_call.1} parent=11 // pred_fallthru
          _
        // Predicated region
        $region29: #{tpu_custom_call.1} parent=11 // pred_check
          %p310 = pneg %p158
        $region30: #{tpu_custom_call.1} parent=11 // pred_check_branch
          %312 = sbr.rel (%p310) target = $region32
        $region31: #{tpu_custom_call.1} parent=11 // pred_region
          %s314 = ssub.s32 1024, 1024
          %315 = vsyncadd [#allocation13], %s314
          %s316 = sshll.u32 [#allocation12], 4
          %s317 = int_to_ptr.vmem [resolvable:$true] %s316
          %322 = dma.hbm_to_vmem [thread:$0]  %s5, 1024, %s317, [#allocation13], 64, 64, 4
        $region32: #{tpu_custom_call.1} parent=11 // pred_fallthru
          _
        // Predicated region
        $region33: #{tpu_custom_call.1} parent=11 // pred_check
          %p323 = pneg %p179
        $region34: #{tpu_custom_call.1} parent=11 // pred_check_branch
          %325 = sbr.rel (%p323) target = $region36
        $region35: #{tpu_custom_call.1} parent=11 // pred_region
          %s327 = ssub.s32 16, 16
          %328 = vsyncadd [#allocation13], %s327
          %s330 = sshll.u32 [#allocation14], 4
          %s331 = int_to_ptr.vmem [resolvable:$true] %s330
          %333 = dma.hbm_to_vmem [thread:$0]  %s6, 16, %s331, [#allocation13]
        $region36: #{tpu_custom_call.1} parent=11 // pred_fallthru
          _
        // Predicated region
        $region37: #{tpu_custom_call.1} parent=11 // pred_check
          %p334 = pneg %p200
        $region38: #{tpu_custom_call.1} parent=11 // pred_check_branch
          %336 = sbr.rel (%p334) target = $region40
        $region39: #{tpu_custom_call.1} parent=11 // pred_region
          %s338 = ssub.s32 16, 16
          %339 = vsyncadd [#allocation16], %s338
          %s341 = sshll.u32 [#allocation15], 4
          %s342 = int_to_ptr.vmem [resolvable:$true] %s341
          %344 = dma.hbm_to_vmem [thread:$0]  %s7, 16, %s342, [#allocation16]
        $region40: #{tpu_custom_call.1} parent=11 // pred_fallthru
          _
        // Predicated region
        $region41: #{tpu_custom_call.1} parent=11 // pred_check
          %p345 = pneg %p221
        $region42: #{tpu_custom_call.1} parent=11 // pred_check_branch
          %347 = sbr.rel (%p345) target = $region44
        $region43: #{tpu_custom_call.1} parent=11 // pred_region
          _
        $region44: #{tpu_custom_call.1} parent=11 // pred_fallthru
          _
      $region12: #{tpu_custom_call.1} parent=5 // pred_fallthru
        _
      %p348 = scmp.lt.s32.totalorder %s27, 2
      // Predicated region
      $region45: #{tpu_custom_call.1} parent=5 // pred_check
        %p349 = pneg %p348
      $region46: #{tpu_custom_call.1} parent=5 // pred_check_branch
        %351 = sbr.rel (%p349) target = $region48
      $region47: #{tpu_custom_call.1} parent=5 // pred_region
        // Predicated region
        $region49: #{tpu_custom_call.1} parent=47 // pred_check
          %p352 = pneg %p47
        $region50: #{tpu_custom_call.1} parent=47 // pred_check_branch
          %354 = sbr.rel (%p352) target = $region52
        $region51: #{tpu_custom_call.1} parent=47 // pred_region
          %s355 = sand.u32 %s37, 1
          %s356 = scalar_lea.sflag [#allocation4], %s355
          %s357 = sand.u32 %s37, 1
          %s358 = smul.addr %s357, 64
          %s359 = scalar_lea.vmem [#allocation3], %s358
          %s360 = smul.u32 2, %s27
          %s362 = ssub.s32 1024, 1024
          %363 = vsyncadd %s356, %s362
          %s364 = smul.addr %s360, 4
          %s365 = smul.addr %s364, 128
          %s366 = scalar_lea.hbm %s0, %s365
          %s367 = sshll.u32 %s359, 4
          %s368 = int_to_ptr.vmem [resolvable:$true] %s367
          %373 = dma.hbm_to_vmem [thread:$0]  %s366, 1024, %s368, %s356, 512, 512, 32
        $region52: #{tpu_custom_call.1} parent=47 // pred_fallthru
          _
      $region48: #{tpu_custom_call.1} parent=5 // pred_fallthru
        _
      %p374 = scmp.le.s32.totalorder 1, %s27
      %p375 = scmp.lt.s32.totalorder %s27, 3
      %p376 = pnand %p374, %p375
      %p377 = pneg %p376
      // Predicated region
      $region53: #{tpu_custom_call.1} parent=5 // pred_check
        _
      $region54: #{tpu_custom_call.1} parent=5 // pred_check_branch
        %379 = sbr.rel (%p376) target = $region56
      $region55: #{tpu_custom_call.1} parent=5 // pred_region
        %s380 = ssub.s32 %s27, 1
        %s381 = sand.u32 %s40, 1
        %s382 = scalar_lea.sflag [#allocation4], %s381
        %s383 = sand.u32 %s40, 1
        %s384 = smul.addr %s383, 64
        %s385 = scalar_lea.vmem [#allocation3], %s384
        // Predicated region
        $region57: #{tpu_custom_call.1} parent=55 // pred_check
          %p386 = pneg %p53
        $region58: #{tpu_custom_call.1} parent=55 // pred_check_branch
          %388 = sbr.rel (%p386) target = $region60
        $region59: #{tpu_custom_call.1} parent=55 // pred_region
          %389 = dma.done %s382, 1024
        $region60: #{tpu_custom_call.1} parent=55 // pred_fallthru
          _
        // Predicated region
        $region61: #{tpu_custom_call.1} parent=55 // pred_check
          %p390 = pneg %p74
        $region62: #{tpu_custom_call.1} parent=55 // pred_check_branch
          %392 = sbr.rel (%p390) target = $region64
        $region63: #{tpu_custom_call.1} parent=55 // pred_region
          %393 = dma.done [#allocation7], 32768
        $region64: #{tpu_custom_call.1} parent=55 // pred_fallthru
          _
        // Predicated region
        $region65: #{tpu_custom_call.1} parent=55 // pred_check
          %p394 = pneg %p95
        $region66: #{tpu_custom_call.1} parent=55 // pred_check_branch
          %396 = sbr.rel (%p394) target = $region68
        $region67: #{tpu_custom_call.1} parent=55 // pred_region
          %397 = dma.done [#allocation7], 128
        $region68: #{tpu_custom_call.1} parent=55 // pred_fallthru
          _
        // Predicated region
        $region69: #{tpu_custom_call.1} parent=55 // pred_check
          %p398 = pneg %p116
        $region70: #{tpu_custom_call.1} parent=55 // pred_check_branch
          %400 = sbr.rel (%p398) target = $region72
        $region71: #{tpu_custom_call.1} parent=55 // pred_region
          %401 = dma.done [#allocation10], 65536
        $region72: #{tpu_custom_call.1} parent=55 // pred_fallthru
          _
        // Predicated region
        $region73: #{tpu_custom_call.1} parent=55 // pred_check
          %p402 = pneg %p137
        $region74: #{tpu_custom_call.1} parent=55 // pred_check_branch
          %404 = sbr.rel (%p402) target = $region76
        $region75: #{tpu_custom_call.1} parent=55 // pred_region
          %405 = dma.done [#allocation10], 128
        $region76: #{tpu_custom_call.1} parent=55 // pred_fallthru
          _
        // Predicated region
        $region77: #{tpu_custom_call.1} parent=55 // pred_check
          %p406 = pneg %p158
        $region78: #{tpu_custom_call.1} parent=55 // pred_check_branch
          %408 = sbr.rel (%p406) target = $region80
        $region79: #{tpu_custom_call.1} parent=55 // pred_region
          %409 = dma.done [#allocation13], 1024
        $region80: #{tpu_custom_call.1} parent=55 // pred_fallthru
          _
        // Predicated region
        $region81: #{tpu_custom_call.1} parent=55 // pred_check
          %p410 = pneg %p179
        $region82: #{tpu_custom_call.1} parent=55 // pred_check_branch
          %412 = sbr.rel (%p410) target = $region84
        $region83: #{tpu_custom_call.1} parent=55 // pred_region
          %413 = dma.done [#allocation13], 16
        $region84: #{tpu_custom_call.1} parent=55 // pred_fallthru
          _
        // Predicated region
        $region85: #{tpu_custom_call.1} parent=55 // pred_check
          %p414 = pneg %p200
        $region86: #{tpu_custom_call.1} parent=55 // pred_check_branch
          %416 = sbr.rel (%p414) target = $region88
        $region87: #{tpu_custom_call.1} parent=55 // pred_region
          %417 = dma.done [#allocation16], 16
        $region88: #{tpu_custom_call.1} parent=55 // pred_fallthru
          _
        %s418 = sand.u32 %s40, 1
        %s419 = scalar_lea.sflag [#allocation4], %s418
        %s420 = sand.u32 %s40, 1
        %s421 = smul.addr %s420, 64
        %s422 = scalar_lea.vmem [#allocation3], %s421
        %p423 = pneg %p53
        %p424 = pneg %p50
        %p425 = pneg %p74
        %p426 = pneg %p71
        %p427 = pneg %p95
        %p428 = pneg %p92
        %p429 = pneg %p116
        %p430 = pneg %p113
        %p431 = pneg %p137
        %p432 = pneg %p134
        %p433 = pneg %p158
        %p434 = pneg %p155
        %p435 = pneg %p179
        %p436 = pneg %p176
        %p437 = pneg %p200
        %p438 = pneg %p197
        %p439 = pneg %p221
        %p440 = pneg %p218
        %p441 = pneg %p247
        %p442 = pneg %p244
        %s443 = sand.u32 %s234, 1
        %s444 = scalar_lea.sflag [#allocation5], %s443
        %s445 = sand.u32 %s234, 1
        %s446 = scalar_lea.vmem [#allocation17], %s445
        %s447 = smul.u32 2, %s32
        %v449 = vld [vmem:[%s385] sm:$0xff]
        %v450 = vld [vmem:[%s385 + $0x8] sm:$0xff]
        %v451 = vld [vmem:[%s385 + $0x10] sm:$0xff]
        %v452 = vld [vmem:[%s385 + $0x18] sm:$0xff]
        %v453 = vld [vmem:[%s385 + $0x20] sm:$0xff]
        %v454 = vld [vmem:[%s385 + $0x28] sm:$0xff]
        %v455 = vld [vmem:[%s385 + $0x30] sm:$0xff]
        %v456 = vld [vmem:[%s385 + $0x38] sm:$0xff]
        %v457 = vpack.c.bf16 %v453, %v449
        %v458 = vpack.c.bf16 %v454, %v450
        %v459 = vpack.c.bf16 %v455, %v451
        %v460 = vpack.c.bf16 %v456, %v452
        %v461 = vld [vmem:[#allocation6] sm:$0xff]
        %v462 = vld [vmem:[#allocation6 + $0x20] sm:$0xff]
        %v463 = vld [vmem:[#allocation6 + $0x40] sm:$0xff]
        %v464 = vld [vmem:[#allocation6 + $0x60] sm:$0xff]
        %v465 = vld [vmem:[#allocation6 + $0x80] sm:$0xff]
        %v466 = vld [vmem:[#allocation6 + $0xa0] sm:$0xff]
        %v467 = vld [vmem:[#allocation6 + $0xc0] sm:$0xff]
        %v468 = vld [vmem:[#allocation6 + $0xe0] sm:$0xff]
        %v469 = vld [vmem:[#allocation6 + $0x100] sm:$0xff]
        %v470 = vld [vmem:[#allocation6 + $0x120] sm:$0xff]
        %v471 = vld [vmem:[#allocation6 + $0x140] sm:$0xff]
        %v472 = vld [vmem:[#allocation6 + $0x160] sm:$0xff]
        %v473 = vld [vmem:[#allocation6 + $0x180] sm:$0xff]
        %v474 = vld [vmem:[#allocation6 + $0x1a0] sm:$0xff]
        %v475 = vld [vmem:[#allocation6 + $0x1c0] sm:$0xff]
        %v476 = vld [vmem:[#allocation6 + $0x1e0] sm:$0xff]
        %v477 = vld [vmem:[#allocation6 + $0x200] sm:$0xff]
        %v478 = vld [vmem:[#allocation6 + $0x220] sm:$0xff]
        %v479 = vld [vmem:[#allocation6 + $0x240] sm:$0xff]
        %v480 = vld [vmem:[#allocation6 + $0x260] sm:$0xff]
        %v481 = vld [vmem:[#allocation6 + $0x280] sm:$0xff]
        %v482 = vld [vmem:[#allocation6 + $0x2a0] sm:$0xff]
        %v483 = vld [vmem:[#allocation6 + $0x2c0] sm:$0xff]
        %v484 = vld [vmem:[#allocation6 + $0x2e0] sm:$0xff]
        %v485 = vld [vmem:[#allocation6 + $0x300] sm:$0xff]
        %v486 = vld [vmem:[#allocation6 + $0x320] sm:$0xff]
        %v487 = vld [vmem:[#allocation6 + $0x340] sm:$0xff]
        %v488 = vld [vmem:[#allocation6 + $0x360] sm:$0xff]
        %v489 = vld [vmem:[#allocation6 + $0x380] sm:$0xff]
        %v490 = vld [vmem:[#allocation6 + $0x3a0] sm:$0xff]
        %v491 = vld [vmem:[#allocation6 + $0x3c0] sm:$0xff]
        %v492 = vld [vmem:[#allocation6 + $0x3e0] sm:$0xff]
        %v493 = vld [vmem:[#allocation8] sm:$0x3]
        %v495 = vlaneseq
        %v496 = vshrl.u32 %v495, 7
        %v497 = vsub.s32 0, %v496
        %v498 = vrot.slane %v493, %v497
        %v499 = vlaneseq
        %v500 = vshrl.u32 %v499, 7
        %v501 = vsub.s32 1, %v500
        %v502 = vrot.slane %v493, %v501
        %v537 = vunpack.c.l.b16 %v461
        %v538 = vunpack.c.h.b16 %v461
        %v539 = vunpack.c.l.b16 %v462
        %v540 = vunpack.c.h.b16 %v462
        %v541 = vunpack.c.l.b16 %v463
        %v542 = vunpack.c.h.b16 %v463
        %v543 = vunpack.c.l.b16 %v464
        %v544 = vunpack.c.h.b16 %v464
        %v545 = vunpack.c.l.b16 %v465
        %v546 = vunpack.c.h.b16 %v465
        %v547 = vunpack.c.l.b16 %v466
        %v548 = vunpack.c.h.b16 %v466
        %v549 = vunpack.c.l.b16 %v467
        %v550 = vunpack.c.h.b16 %v467
        %v551 = vunpack.c.l.b16 %v468
        %v552 = vunpack.c.h.b16 %v468
        %v553 = vunpack.c.l.b16 %v469
        %v554 = vunpack.c.h.b16 %v469
        %v555 = vunpack.c.l.b16 %v470
        %v556 = vunpack.c.h.b16 %v470
        %v557 = vunpack.c.l.b16 %v471
        %v558 = vunpack.c.h.b16 %v471
        %v559 = vunpack.c.l.b16 %v472
        %v560 = vunpack.c.h.b16 %v472
        %v561 = vunpack.c.l.b16 %v473
        %v562 = vunpack.c.h.b16 %v473
        %v563 = vunpack.c.l.b16 %v474
        %v564 = vunpack.c.h.b16 %v474
        %v565 = vunpack.c.l.b16 %v475
        %v566 = vunpack.c.h.b16 %v475
        %v567 = vunpack.c.l.b16 %v476
        %v568 = vunpack.c.h.b16 %v476
        %v569 = vunpack.c.l.b16 %v477
        %v570 = vunpack.c.h.b16 %v477
        %v571 = vunpack.c.l.b16 %v478
        %v572 = vunpack.c.h.b16 %v478
        %v573 = vunpack.c.l.b16 %v479
        %v574 = vunpack.c.h.b16 %v479
        %v575 = vunpack.c.l.b16 %v480
        %v576 = vunpack.c.h.b16 %v480
        %v577 = vunpack.c.l.b16 %v481
        %v578 = vunpack.c.h.b16 %v481
        %v579 = vunpack.c.l.b16 %v482
        %v580 = vunpack.c.h.b16 %v482
        %v581 = vunpack.c.l.b16 %v483
        %v582 = vunpack.c.h.b16 %v483
        %v583 = vunpack.c.l.b16 %v484
        %v584 = vunpack.c.h.b16 %v484
        %v585 = vunpack.c.l.b16 %v485
        %v586 = vunpack.c.h.b16 %v485
        %v587 = vunpack.c.l.b16 %v486
        %v588 = vunpack.c.h.b16 %v486
        %v589 = vunpack.c.l.b16 %v487
        %v590 = vunpack.c.h.b16 %v487
        %v591 = vunpack.c.l.b16 %v488
        %v592 = vunpack.c.h.b16 %v488
        %v593 = vunpack.c.l.b16 %v489
        %v594 = vunpack.c.h.b16 %v489
        %v595 = vunpack.c.l.b16 %v490
        %v596 = vunpack.c.h.b16 %v490
        %v597 = vunpack.c.l.b16 %v491
        %v598 = vunpack.c.h.b16 %v491
        %v599 = vunpack.c.l.b16 %v492
        %v600 = vunpack.c.h.b16 %v492
        %v601 = vpack.c.b16 %v539, %v537
        %v602 = vpack.c.b16 %v540, %v538
        %v603 = vpack.c.b16 %v543, %v541
        %v604 = vpack.c.b16 %v544, %v542
        %v605 = vpack.c.b16 %v547, %v545
        %v606 = vpack.c.b16 %v548, %v546
        %v607 = vpack.c.b16 %v551, %v549
        %v608 = vpack.c.b16 %v552, %v550
        %v609 = vpack.c.b16 %v555, %v553
        %v610 = vpack.c.b16 %v556, %v554
        %v611 = vpack.c.b16 %v559, %v557
        %v612 = vpack.c.b16 %v560, %v558
        %v613 = vpack.c.b16 %v563, %v561
        %v614 = vpack.c.b16 %v564, %v562
        %v615 = vpack.c.b16 %v567, %v565
        %v616 = vpack.c.b16 %v568, %v566
        %v617 = vpack.c.b16 %v571, %v569
        %v618 = vpack.c.b16 %v572, %v570
        %v619 = vpack.c.b16 %v575, %v573
        %v620 = vpack.c.b16 %v576, %v574
        %v621 = vpack.c.b16 %v579, %v577
        %v622 = vpack.c.b16 %v580, %v578
        %v623 = vpack.c.b16 %v583, %v581
        %v624 = vpack.c.b16 %v584, %v582
        %v625 = vpack.c.b16 %v587, %v585
        %v626 = vpack.c.b16 %v588, %v586
        %v627 = vpack.c.b16 %v591, %v589
        %v628 = vpack.c.b16 %v592, %v590
        %v629 = vpack.c.b16 %v595, %v593
        %v630 = vpack.c.b16 %v596, %v594
        %v631 = vpack.c.b16 %v599, %v597
        %v632 = vpack.c.b16 %v600, %v598
        %665 = vmatprep.subr.bf16.mxu0 %v602
        %666 = vmatpush1.bf16.msra.mxu0 %v601
        %667 = vmatprep.subr.bf16.mxu0 %v604
        %668 = vmatpush1.bf16.msra.mxu0 %v603
        %669 = vmatprep.subr.bf16.mxu0 %v606
        %670 = vmatpush1.bf16.msra.mxu0 %v605
        %671 = vmatprep.subr.bf16.mxu0 %v608
        %672 = vmatpush1.bf16.msra.mxu0 %v607
        %673 = vmatprep.subr.bf16.mxu0 %v610
        %674 = vmatpush1.bf16.msra.mxu0 %v609
        %675 = vmatprep.subr.bf16.mxu0 %v612
        %676 = vmatpush1.bf16.msra.mxu0 %v611
        %677 = vmatprep.subr.bf16.mxu0 %v614
        %678 = vmatpush1.bf16.msra.mxu0 %v613
        %679 = vmatprep.subr.bf16.mxu0 %v616
        %680 = vmatpush1.bf16.msra.mxu0 %v615
        %681 = vmatprep.subr.bf16.mxu0 %v618
        %682 = vmatpush1.bf16.msra.mxu0 %v617
        %683 = vmatprep.subr.bf16.mxu0 %v620
        %684 = vmatpush1.bf16.msra.mxu0 %v619
        %685 = vmatprep.subr.bf16.mxu0 %v622
        %686 = vmatpush1.bf16.msra.mxu0 %v621
        %687 = vmatprep.subr.bf16.mxu0 %v624
        %688 = vmatpush1.bf16.msra.mxu0 %v623
        %689 = vmatprep.subr.bf16.mxu0 %v626
        %690 = vmatpush1.bf16.msra.mxu0 %v625
        %691 = vmatprep.subr.bf16.mxu0 %v628
        %692 = vmatpush1.bf16.msra.mxu0 %v627
        %693 = vmatprep.subr.bf16.mxu0 %v630
        %694 = vmatpush1.bf16.msra.mxu0 %v629
        %695 = vmatprep.subr.bf16.mxu0 %v632
        %696 = vmatpush1.bf16.msra.mxu0 %v631
        %697 = vmatprep.mubr.bf16.mxu0 %v458
        %698 = vmatmul.mubr.bf16.gmra.mrb[0].mxu0 %v457
        %v699 = vpop.f32.mrb[0].mxu0
        %v700 = vadd.f32 %v498, %v699
        %v701 = vpop.f32.mrb[0].mxu0
        %v702 = vadd.f32 %v502, %v701
        %v703 = vpop.f32.mrb[0].mxu0
        %v704 = vadd.f32 %v498, %v703
        %v705 = vpop.f32.mrb[0].mxu0
        %v706 = vadd.f32 %v502, %v705
        %707 = vdwg.mxu0
        %v708 = vmax.f32 %v700, 0.0
        %v709 = vmax.f32 %v702, 0.0
        %v710 = vmax.f32 %v704, 0.0
        %v711 = vmax.f32 %v706, 0.0
        %v712 = vpack.c.bf16 %v710, %v708
        %v713 = vpack.c.bf16 %v711, %v709
        %v714 = vld [vmem:[#allocation6 + $0x8] sm:$0xff]
        %v715 = vld [vmem:[#allocation6 + $0x28] sm:$0xff]
        %v716 = vld [vmem:[#allocation6 + $0x48] sm:$0xff]
        %v717 = vld [vmem:[#allocation6 + $0x68] sm:$0xff]
        %v718 = vld [vmem:[#allocation6 + $0x88] sm:$0xff]
        %v719 = vld [vmem:[#allocation6 + $0xa8] sm:$0xff]
        %v720 = vld [vmem:[#allocation6 + $0xc8] sm:$0xff]
        %v721 = vld [vmem:[#allocation6 + $0xe8] sm:$0xff]
        %v722 = vld [vmem:[#allocation6 + $0x108] sm:$0xff]
        %v723 = vld [vmem:[#allocation6 + $0x128] sm:$0xff]
        %v724 = vld [vmem:[#allocation6 + $0x148] sm:$0xff]
        %v725 = vld [vmem:[#allocation6 + $0x168] sm:$0xff]
        %v726 = vld [vmem:[#allocation6 + $0x188] sm:$0xff]
        %v727 = vld [vmem:[#allocation6 + $0x1a8] sm:$0xff]
        %v728 = vld [vmem:[#allocation6 + $0x1c8] sm:$0xff]
        %v729 = vld [vmem:[#allocation6 + $0x1e8] sm:$0xff]
        %v730 = vld [vmem:[#allocation6 + $0x208] sm:$0xff]
        %v731 = vld [vmem:[#allocation6 + $0x228] sm:$0xff]
        %v732 = vld [vmem:[#allocation6 + $0x248] sm:$0xff]
        %v733 = vld [vmem:[#allocation6 + $0x268] sm:$0xff]
        %v734 = vld [vmem:[#allocation6 + $0x288] sm:$0xff]
        %v735 = vld [vmem:[#allocation6 + $0x2a8] sm:$0xff]
        %v736 = vld [vmem:[#allocation6 + $0x2c8] sm:$0xff]
        %v737 = vld [vmem:[#allocation6 + $0x2e8] sm:$0xff]
        %v738 = vld [vmem:[#allocation6 + $0x308] sm:$0xff]
        %v739 = vld [vmem:[#allocation6 + $0x328] sm:$0xff]
        %v740 = vld [vmem:[#allocation6 + $0x348] sm:$0xff]
        %v741 = vld [vmem:[#allocation6 + $0x368] sm:$0xff]
        %v742 = vld [vmem:[#allocation6 + $0x388] sm:$0xff]
        %v743 = vld [vmem:[#allocation6 + $0x3a8] sm:$0xff]
        %v744 = vld [vmem:[#allocation6 + $0x3c8] sm:$0xff]
        %v745 = vld [vmem:[#allocation6 + $0x3e8] sm:$0xff]
        %v746 = vld [vmem:[#allocation6 + $0x408] sm:$0xff]
        %v747 = vld [vmem:[#allocation6 + $0x428] sm:$0xff]
        %v748 = vld [vmem:[#allocation6 + $0x448] sm:$0xff]
        %v749 = vld [vmem:[#allocation6 + $0x468] sm:$0xff]
        %v750 = vld [vmem:[#allocation6 + $0x488] sm:$0xff]
        %v751 = vld [vmem:[#allocation6 + $0x4a8] sm:$0xff]
        %v752 = vld [vmem:[#allocation6 + $0x4c8] sm:$0xff]
        %v753 = vld [vmem:[#allocation6 + $0x4e8] sm:$0xff]
        %v754 = vld [vmem:[#allocation6 + $0x508] sm:$0xff]
        %v755 = vld [vmem:[#allocation6 + $0x528] sm:$0xff]
        %v756 = vld [vmem:[#allocation6 + $0x548] sm:$0xff]
        %v757 = vld [vmem:[#allocation6 + $0x568] sm:$0xff]
        %v758 = vld [vmem:[#allocation6 + $0x588] sm:$0xff]
        %v759 = vld [vmem:[#allocation6 + $0x5a8] sm:$0xff]
        %v760 = vld [vmem:[#allocation6 + $0x5c8] sm:$0xff]
        %v761 = vld [vmem:[#allocation6 + $0x5e8] sm:$0xff]
        %v762 = vld [vmem:[#allocation8 + $0x2] sm:$0x3]
        %v764 = vlaneseq
        %v765 = vshrl.u32 %v764, 7
        %v766 = vsub.s32 0, %v765
        %v767 = vrot.slane %v762, %v766
        %v768 = vlaneseq
        %v769 = vshrl.u32 %v768, 7
        %v770 = vsub.s32 1, %v769
        %v771 = vrot.slane %v762, %v770
        %v822 = vunpack.c.l.b16 %v714
        %v823 = vunpack.c.h.b16 %v714
        %v824 = vunpack.c.l.b16 %v715
        %v825 = vunpack.c.h.b16 %v715
        %v826 = vunpack.c.l.b16 %v716
        %v827 = vunpack.c.h.b16 %v716
        %v828 = vunpack.c.l.b16 %v717
        %v829 = vunpack.c.h.b16 %v717
        %v830 = vunpack.c.l.b16 %v718
        %v831 = vunpack.c.h.b16 %v718
        %v832 = vunpack.c.l.b16 %v719
        %v833 = vunpack.c.h.b16 %v719
        %v834 = vunpack.c.l.b16 %v720
        %v835 = vunpack.c.h.b16 %v720
        %v836 = vunpack.c.l.b16 %v721
        %v837 = vunpack.c.h.b16 %v721
        %v838 = vunpack.c.l.b16 %v722
        %v839 = vunpack.c.h.b16 %v722
        %v840 = vunpack.c.l.b16 %v723
        %v841 = vunpack.c.h.b16 %v723
        %v842 = vunpack.c.l.b16 %v724
        %v843 = vunpack.c.h.b16 %v724
        %v844 = vunpack.c.l.b16 %v725
        %v845 = vunpack.c.h.b16 %v725
        %v846 = vunpack.c.l.b16 %v726
        %v847 = vunpack.c.h.b16 %v726
        %v848 = vunpack.c.l.b16 %v727
        %v849 = vunpack.c.h.b16 %v727
        %v850 = vunpack.c.l.b16 %v728
        %v851 = vunpack.c.h.b16 %v728
        %v852 = vunpack.c.l.b16 %v729
        %v853 = vunpack.c.h.b16 %v729
        %v854 = vunpack.c.l.b16 %v730
        %v855 = vunpack.c.h.b16 %v730
        %v856 = vunpack.c.l.b16 %v731
        %v857 = vunpack.c.h.b16 %v731
        %v858 = vunpack.c.l.b16 %v732
        %v859 = vunpack.c.h.b16 %v732
        %v860 = vunpack.c.l.b16 %v733
        %v861 = vunpack.c.h.b16 %v733
        %v862 = vunpack.c.l.b16 %v734
        %v863 = vunpack.c.h.b16 %v734
        %v864 = vunpack.c.l.b16 %v735
        %v865 = vunpack.c.h.b16 %v735
        %v866 = vunpack.c.l.b16 %v736
        %v867 = vunpack.c.h.b16 %v736
        %v868 = vunpack.c.l.b16 %v737
        %v869 = vunpack.c.h.b16 %v737
        %v870 = vunpack.c.l.b16 %v738
        %v871 = vunpack.c.h.b16 %v738
        %v872 = vunpack.c.l.b16 %v739
        %v873 = vunpack.c.h.b16 %v739
        %v874 = vunpack.c.l.b16 %v740
        %v875 = vunpack.c.h.b16 %v740
        %v876 = vunpack.c.l.b16 %v741
        %v877 = vunpack.c.h.b16 %v741
        %v878 = vunpack.c.l.b16 %v742
        %v879 = vunpack.c.h.b16 %v742
        %v880 = vunpack.c.l.b16 %v743
        %v881 = vunpack.c.h.b16 %v743
        %v882 = vunpack.c.l.b16 %v744
        %v883 = vunpack.c.h.b16 %v744
        %v884 = vunpack.c.l.b16 %v745
        %v885 = vunpack.c.h.b16 %v745
        %v886 = vunpack.c.l.b16 %v746
        %v887 = vunpack.c.h.b16 %v746
        %v888 = vunpack.c.l.b16 %v747
        %v889 = vunpack.c.h.b16 %v747
        %v890 = vunpack.c.l.b16 %v748
        %v891 = vunpack.c.h.b16 %v748
        %v892 = vunpack.c.l.b16 %v749
        %v893 = vunpack.c.h.b16 %v749
        %v894 = vunpack.c.l.b16 %v750
        %v895 = vunpack.c.h.b16 %v750
        %v896 = vunpack.c.l.b16 %v751
        %v897 = vunpack.c.h.b16 %v751
        %v898 = vunpack.c.l.b16 %v752
        %v899 = vunpack.c.h.b16 %v752
        %v900 = vunpack.c.l.b16 %v753
        %v901 = vunpack.c.h.b16 %v753
        %v902 = vunpack.c.l.b16 %v754
        %v903 = vunpack.c.h.b16 %v754
        %v904 = vunpack.c.l.b16 %v755
        %v905 = vunpack.c.h.b16 %v755
        %v906 = vunpack.c.l.b16 %v756
        %v907 = vunpack.c.h.b16 %v756
        %v908 = vunpack.c.l.b16 %v757
        %v909 = vunpack.c.h.b16 %v757
        %v910 = vunpack.c.l.b16 %v758
        %v911 = vunpack.c.h.b16 %v758
        %v912 = vunpack.c.l.b16 %v759
        %v913 = vunpack.c.h.b16 %v759
        %v914 = vunpack.c.l.b16 %v760
        %v915 = vunpack.c.h.b16 %v760
        %v916 = vunpack.c.l.b16 %v761
        %v917 = vunpack.c.h.b16 %v761
        %v918 = vpack.c.b16 %v824, %v822
        %v919 = vpack.c.b16 %v825, %v823
        %v920 = vpack.c.b16 %v828, %v826
        %v921 = vpack.c.b16 %v829, %v827
        %v922 = vpack.c.b16 %v832, %v830
        %v923 = vpack.c.b16 %v833, %v831
        %v924 = vpack.c.b16 %v836, %v834
        %v925 = vpack.c.b16 %v837, %v835
        %v926 = vpack.c.b16 %v840, %v838
        %v927 = vpack.c.b16 %v841, %v839
        %v928 = vpack.c.b16 %v844, %v842
        %v929 = vpack.c.b16 %v845, %v843
        %v930 = vpack.c.b16 %v848, %v846
        %v931 = vpack.c.b16 %v849, %v847
        %v932 = vpack.c.b16 %v852, %v850
        %v933 = vpack.c.b16 %v853, %v851
        %v934 = vpack.c.b16 %v856, %v854
        %v935 = vpack.c.b16 %v857, %v855
        %v936 = vpack.c.b16 %v860, %v858
        %v937 = vpack.c.b16 %v861, %v859
        %v938 = vpack.c.b16 %v864, %v862
        %v939 = vpack.c.b16 %v865, %v863
        %v940 = vpack.c.b16 %v868, %v866
        %v941 = vpack.c.b16 %v869, %v867
        %v942 = vpack.c.b16 %v872, %v870
        %v943 = vpack.c.b16 %v873, %v871
        %v944 = vpack.c.b16 %v876, %v874
        %v945 = vpack.c.b16 %v877, %v875
        %v946 = vpack.c.b16 %v880, %v878
        %v947 = vpack.c.b16 %v881, %v879
        %v948 = vpack.c.b16 %v884, %v882
        %v949 = vpack.c.b16 %v885, %v883
        %v950 = vpack.c.b16 %v888, %v886
        %v951 = vpack.c.b16 %v889, %v887
        %v952 = vpack.c.b16 %v892, %v890
        %v953 = vpack.c.b16 %v893, %v891
        %v954 = vpack.c.b16 %v896, %v894
        %v955 = vpack.c.b16 %v897, %v895
        %v956 = vpack.c.b16 %v900, %v898
        %v957 = vpack.c.b16 %v901, %v899
        %v958 = vpack.c.b16 %v904, %v902
        %v959 = vpack.c.b16 %v905, %v903
        %v960 = vpack.c.b16 %v908, %v906
        %v961 = vpack.c.b16 %v909, %v907
        %v962 = vpack.c.b16 %v912, %v910
        %v963 = vpack.c.b16 %v913, %v911
        %v964 = vpack.c.b16 %v916, %v914
        %v965 = vpack.c.b16 %v917, %v915
        %1014 = vmatprep.subr.bf16.mxu0 %v919
        %1015 = vmatpush1.bf16.msra.mxu0 %v918
        %1016 = vmatprep.subr.bf16.mxu0 %v921
        %1017 = vmatpush1.bf16.msra.mxu0 %v920
        %1018 = vmatprep.subr.bf16.mxu0 %v923
        %1019 = vmatpush1.bf16.msra.mxu0 %v922
        %1020 = vmatprep.subr.bf16.mxu0 %v925
        %1021 = vmatpush1.bf16.msra.mxu0 %v924
        %1022 = vmatprep.subr.bf16.mxu0 %v927
        %1023 = vmatpush1.bf16.msra.mxu0 %v926
        %1024 = vmatprep.subr.bf16.mxu0 %v929
        %1025 = vmatpush1.bf16.msra.mxu0 %v928
        %1026 = vmatprep.subr.bf16.mxu0 %v931
        %1027 = vmatpush1.bf16.msra.mxu0 %v930
        %1028 = vmatprep.subr.bf16.mxu0 %v933
        %1029 = vmatpush1.bf16.msra.mxu0 %v932
        %1030 = vmatprep.subr.bf16.mxu0 %v935
        %1031 = vmatpush1.bf16.msra.mxu0 %v934
        %1032 = vmatprep.subr.bf16.mxu0 %v937
        %1033 = vmatpush1.bf16.msra.mxu0 %v936
        %1034 = vmatprep.subr.bf16.mxu0 %v939
        %1035 = vmatpush1.bf16.msra.mxu0 %v938
        %1036 = vmatprep.subr.bf16.mxu0 %v941
        %1037 = vmatpush1.bf16.msra.mxu0 %v940
        %1038 = vmatprep.subr.bf16.mxu0 %v943
        %1039 = vmatpush1.bf16.msra.mxu0 %v942
        %1040 = vmatprep.subr.bf16.mxu0 %v945
        %1041 = vmatpush1.bf16.msra.mxu0 %v944
        %1042 = vmatprep.subr.bf16.mxu0 %v947
        %1043 = vmatpush1.bf16.msra.mxu0 %v946
        %1044 = vmatprep.subr.bf16.mxu0 %v949
        %1045 = vmatpush1.bf16.msra.mxu0 %v948
        %1046 = vmatprep.mubr.bf16.mxu0 %v458
        %1047 = vmatmul.mubr.bf16.gmra.mrb[0].mxu0 %v457
        %v1048 = vpop.f32.mrb[0].mxu0
        %v1049 = vadd.f32 %v767, %v1048
        %v1050 = vpop.f32.mrb[0].mxu0
        %v1051 = vadd.f32 %v771, %v1050
        %v1052 = vpop.f32.mrb[0].mxu0
        %v1053 = vadd.f32 %v767, %v1052
        %v1054 = vpop.f32.mrb[0].mxu0
        %v1055 = vadd.f32 %v771, %v1054
        %1056 = vdwg.mxu0
        %1057 = vmatprep.subr.bf16.mxu0 %v951
        %1058 = vmatpush1.bf16.msra.mxu0 %v950
        %1059 = vmatprep.subr.bf16.mxu0 %v953
        %1060 = vmatpush1.bf16.msra.mxu0 %v952
        %1061 = vmatprep.subr.bf16.mxu0 %v955
        %1062 = vmatpush1.bf16.msra.mxu0 %v954
        %1063 = vmatprep.subr.bf16.mxu0 %v957
        %1064 = vmatpush1.bf16.msra.mxu0 %v956
        %1065 = vmatprep.subr.bf16.mxu0 %v959
        %1066 = vmatpush1.bf16.msra.mxu0 %v958
        %1067 = vmatprep.subr.bf16.mxu0 %v961
        %1068 = vmatpush1.bf16.msra.mxu0 %v960
        %1069 = vmatprep.subr.bf16.mxu0 %v963
        %1070 = vmatpush1.bf16.msra.mxu0 %v962
        %1071 = vmatprep.subr.bf16.mxu0 %v965
        %1072 = vmatpush1.bf16.msra.mxu0 %v964
        %1073 = vmatprep.subr.bf16.mxu0 0
        %1074 = vmatpush1.bf16.msra.mxu0 0
        %1075 = vmatprep.subr.bf16.mxu0 0
        %1076 = vmatpush1.bf16.msra.mxu0 0
        %1077 = vmatprep.subr.bf16.mxu0 0
        %1078 = vmatpush1.bf16.msra.mxu0 0
        %1079 = vmatprep.subr.bf16.mxu0 0
        %1080 = vmatpush1.bf16.msra.mxu0 0
        %1081 = vmatprep.subr.bf16.mxu0 0
        %1082 = vmatpush1.bf16.msra.mxu0 0
        %1083 = vmatprep.subr.bf16.mxu0 0
        %1084 = vmatpush1.bf16.msra.mxu0 0
        %1085 = vmatprep.subr.bf16.mxu0 0
        %1086 = vmatpush1.bf16.msra.mxu0 0
        %1087 = vmatprep.subr.bf16.mxu0 0
        %1088 = vmatpush1.bf16.msra.mxu0 0
        %1089 = vmatprep.mubr.bf16.mxu0 0
        %1090 = vmatmul.mubr.bf16.gmra.mrb[0].mxu0 %v459
        %v1091 = vpop.f32.mrb[0].mxu0
        %v1092 = vadd.f32 %v1049, %v1091
        %v1093 = vpop.f32.mrb[0].mxu0
        %v1094 = vadd.f32 %v1051, %v1093
        %v1095 = vpop.f32.mrb[0].mxu0
        %v1096 = vadd.f32 %v1053, %v1095
        %v1097 = vpop.f32.mrb[0].mxu0
        %v1098 = vadd.f32 %v1055, %v1097
        %1099 = vdwg.mxu0
        %v1100 = vmax.f32 %v1092, 0.0
        %v1101 = vmax.f32 %v1094, 0.0
        %v1102 = vmax.f32 %v1096, 0.0
        %v1103 = vmax.f32 %v1098, 0.0
        %v1104 = vpack.c.bf16 %v1102, %v1100
        %v1105 = vpack.c.bf16 %v1103, %v1101
        %v1106 = vld [vmem:[#allocation6 + $0x210] sm:$0xff]
        %v1107 = vld [vmem:[#allocation6 + $0x230] sm:$0xff]
        %v1108 = vld [vmem:[#allocation6 + $0x250] sm:$0xff]
        %v1109 = vld [vmem:[#allocation6 + $0x270] sm:$0xff]
        %v1110 = vld [vmem:[#allocation6 + $0x290] sm:$0xff]
        %v1111 = vld [vmem:[#allocation6 + $0x2b0] sm:$0xff]
        %v1112 = vld [vmem:[#allocation6 + $0x2d0] sm:$0xff]
        %v1113 = vld [vmem:[#allocation6 + $0x2f0] sm:$0xff]
        %v1114 = vld [vmem:[#allocation6 + $0x310] sm:$0xff]
        %v1115 = vld [vmem:[#allocation6 + $0x330] sm:$0xff]
        %v1116 = vld [vmem:[#allocation6 + $0x350] sm:$0xff]
        %v1117 = vld [vmem:[#allocation6 + $0x370] sm:$0xff]
        %v1118 = vld [vmem:[#allocation6 + $0x390] sm:$0xff]
        %v1119 = vld [vmem:[#allocation6 + $0x3b0] sm:$0xff]
        %v1120 = vld [vmem:[#allocation6 + $0x3d0] sm:$0xff]
        %v1121 = vld [vmem:[#allocation6 + $0x3f0] sm:$0xff]
        %v1122 = vld [vmem:[#allocation6 + $0x410] sm:$0xff]
        %v1123 = vld [vmem:[#allocation6 + $0x430] sm:$0xff]
        %v1124 = vld [vmem:[#allocation6 + $0x450] sm:$0xff]
        %v1125 = vld [vmem:[#allocation6 + $0x470] sm:$0xff]
        %v1126 = vld [vmem:[#allocation6 + $0x490] sm:$0xff]
        %v1127 = vld [vmem:[#allocation6 + $0x4b0] sm:$0xff]
        %v1128 = vld [vmem:[#allocation6 + $0x4d0] sm:$0xff]
        %v1129 = vld [vmem:[#allocation6 + $0x4f0] sm:$0xff]
        %v1130 = vld [vmem:[#allocation6 + $0x510] sm:$0xff]
        %v1131 = vld [vmem:[#allocation6 + $0x530] sm:$0xff]
        %v1132 = vld [vmem:[#allocation6 + $0x550] sm:$0xff]
        %v1133 = vld [vmem:[#allocation6 + $0x570] sm:$0xff]
        %v1134 = vld [vmem:[#allocation6 + $0x590] sm:$0xff]
        %v1135 = vld [vmem:[#allocation6 + $0x5b0] sm:$0xff]
        %v1136 = vld [vmem:[#allocation6 + $0x5d0] sm:$0xff]
        %v1137 = vld [vmem:[#allocation6 + $0x5f0] sm:$0xff]
        %v1138 = vld [vmem:[#allocation6 + $0x610] sm:$0xff]
        %v1139 = vld [vmem:[#allocation6 + $0x630] sm:$0xff]
        %v1140 = vld [vmem:[#allocation6 + $0x650] sm:$0xff]
        %v1141 = vld [vmem:[#allocation6 + $0x670] sm:$0xff]
        %v1142 = vld [vmem:[#allocation6 + $0x690] sm:$0xff]
        %v1143 = vld [vmem:[#allocation6 + $0x6b0] sm:$0xff]
        %v1144 = vld [vmem:[#allocation6 + $0x6d0] sm:$0xff]
        %v1145 = vld [vmem:[#allocation6 + $0x6f0] sm:$0xff]
        %v1146 = vld [vmem:[#allocation6 + $0x710] sm:$0xff]
        %v1147 = vld [vmem:[#allocation6 + $0x730] sm:$0xff]
        %v1148 = vld [vmem:[#allocation6 + $0x750] sm:$0xff]
        %v1149 = vld [vmem:[#allocation6 + $0x770] sm:$0xff]
        %v1150 = vld [vmem:[#allocation6 + $0x790] sm:$0xff]
        %v1151 = vld [vmem:[#allocation6 + $0x7b0] sm:$0xff]
        %v1152 = vld [vmem:[#allocation6 + $0x7d0] sm:$0xff]
        %v1153 = vld [vmem:[#allocation6 + $0x7f0] sm:$0xff]
        %v1154 = vld [vmem:[#allocation8 + $0x4] sm:$0x3]
        %v1156 = vlaneseq
        %v1157 = vshrl.u32 %v1156, 7
        %v1158 = vsub.s32 0, %v1157
        %v1159 = vrot.slane %v1154, %v1158
        %v1160 = vlaneseq
        %v1161 = vshrl.u32 %v1160, 7
        %v1162 = vsub.s32 1, %v1161
        %v1163 = vrot.slane %v1154, %v1162
        %v1214 = vunpack.c.l.b16 %v1106
        %v1215 = vunpack.c.h.b16 %v1106
        %v1216 = vunpack.c.l.b16 %v1107
        %v1217 = vunpack.c.h.b16 %v1107
        %v1218 = vunpack.c.l.b16 %v1108
        %v1219 = vunpack.c.h.b16 %v1108
        %v1220 = vunpack.c.l.b16 %v1109
        %v1221 = vunpack.c.h.b16 %v1109
        %v1222 = vunpack.c.l.b16 %v1110
        %v1223 = vunpack.c.h.b16 %v1110
        %v1224 = vunpack.c.l.b16 %v1111
        %v1225 = vunpack.c.h.b16 %v1111
        %v1226 = vunpack.c.l.b16 %v1112
        %v1227 = vunpack.c.h.b16 %v1112
        %v1228 = vunpack.c.l.b16 %v1113
        %v1229 = vunpack.c.h.b16 %v1113
        %v1230 = vunpack.c.l.b16 %v1114
        %v1231 = vunpack.c.h.b16 %v1114
        %v1232 = vunpack.c.l.b16 %v1115
        %v1233 = vunpack.c.h.b16 %v1115
        %v1234 = vunpack.c.l.b16 %v1116
        %v1235 = vunpack.c.h.b16 %v1116
        %v1236 = vunpack.c.l.b16 %v1117
        %v1237 = vunpack.c.h.b16 %v1117
        %v1238 = vunpack.c.l.b16 %v1118
        %v1239 = vunpack.c.h.b16 %v1118
        %v1240 = vunpack.c.l.b16 %v1119
        %v1241 = vunpack.c.h.b16 %v1119
        %v1242 = vunpack.c.l.b16 %v1120
        %v1243 = vunpack.c.h.b16 %v1120
        %v1244 = vunpack.c.l.b16 %v1121
        %v1245 = vunpack.c.h.b16 %v1121
        %v1246 = vunpack.c.l.b16 %v1122
        %v1247 = vunpack.c.h.b16 %v1122
        %v1248 = vunpack.c.l.b16 %v1123
        %v1249 = vunpack.c.h.b16 %v1123
        %v1250 = vunpack.c.l.b16 %v1124
        %v1251 = vunpack.c.h.b16 %v1124
        %v1252 = vunpack.c.l.b16 %v1125
        %v1253 = vunpack.c.h.b16 %v1125
        %v1254 = vunpack.c.l.b16 %v1126
        %v1255 = vunpack.c.h.b16 %v1126
        %v1256 = vunpack.c.l.b16 %v1127
        %v1257 = vunpack.c.h.b16 %v1127
        %v1258 = vunpack.c.l.b16 %v1128
        %v1259 = vunpack.c.h.b16 %v1128
        %v1260 = vunpack.c.l.b16 %v1129
        %v1261 = vunpack.c.h.b16 %v1129
        %v1262 = vunpack.c.l.b16 %v1130
        %v1263 = vunpack.c.h.b16 %v1130
        %v1264 = vunpack.c.l.b16 %v1131
        %v1265 = vunpack.c.h.b16 %v1131
        %v1266 = vunpack.c.l.b16 %v1132
        %v1267 = vunpack.c.h.b16 %v1132
        %v1268 = vunpack.c.l.b16 %v1133
        %v1269 = vunpack.c.h.b16 %v1133
        %v1270 = vunpack.c.l.b16 %v1134
        %v1271 = vunpack.c.h.b16 %v1134
        %v1272 = vunpack.c.l.b16 %v1135
        %v1273 = vunpack.c.h.b16 %v1135
        %v1274 = vunpack.c.l.b16 %v1136
        %v1275 = vunpack.c.h.b16 %v1136
        %v1276 = vunpack.c.l.b16 %v1137
        %v1277 = vunpack.c.h.b16 %v1137
        %v1278 = vunpack.c.l.b16 %v1138
        %v1279 = vunpack.c.h.b16 %v1138
        %v1280 = vunpack.c.l.b16 %v1139
        %v1281 = vunpack.c.h.b16 %v1139
        %v1282 = vunpack.c.l.b16 %v1140
        %v1283 = vunpack.c.h.b16 %v1140
        %v1284 = vunpack.c.l.b16 %v1141
        %v1285 = vunpack.c.h.b16 %v1141
        %v1286 = vunpack.c.l.b16 %v1142
        %v1287 = vunpack.c.h.b16 %v1142
        %v1288 = vunpack.c.l.b16 %v1143
        %v1289 = vunpack.c.h.b16 %v1143
        %v1290 = vunpack.c.l.b16 %v1144
        %v1291 = vunpack.c.h.b16 %v1144
        %v1292 = vunpack.c.l.b16 %v1145
        %v1293 = vunpack.c.h.b16 %v1145
        %v1294 = vunpack.c.l.b16 %v1146
        %v1295 = vunpack.c.h.b16 %v1146
        %v1296 = vunpack.c.l.b16 %v1147
        %v1297 = vunpack.c.h.b16 %v1147
        %v1298 = vunpack.c.l.b16 %v1148
        %v1299 = vunpack.c.h.b16 %v1148
        %v1300 = vunpack.c.l.b16 %v1149
        %v1301 = vunpack.c.h.b16 %v1149
        %v1302 = vunpack.c.l.b16 %v1150
        %v1303 = vunpack.c.h.b16 %v1150
        %v1304 = vunpack.c.l.b16 %v1151
        %v1305 = vunpack.c.h.b16 %v1151
        %v1306 = vunpack.c.l.b16 %v1152
        %v1307 = vunpack.c.h.b16 %v1152
        %v1308 = vunpack.c.l.b16 %v1153
        %v1309 = vunpack.c.h.b16 %v1153
        %v1310 = vpack.c.b16 %v1216, %v1214
        %v1311 = vpack.c.b16 %v1217, %v1215
        %v1312 = vpack.c.b16 %v1220, %v1218
        %v1313 = vpack.c.b16 %v1221, %v1219
        %v1314 = vpack.c.b16 %v1224, %v1222
        %v1315 = vpack.c.b16 %v1225, %v1223
        %v1316 = vpack.c.b16 %v1228, %v1226
        %v1317 = vpack.c.b16 %v1229, %v1227
        %v1318 = vpack.c.b16 %v1232, %v1230
        %v1319 = vpack.c.b16 %v1233, %v1231
        %v1320 = vpack.c.b16 %v1236, %v1234
        %v1321 = vpack.c.b16 %v1237, %v1235
        %v1322 = vpack.c.b16 %v1240, %v1238
        %v1323 = vpack.c.b16 %v1241, %v1239
        %v1324 = vpack.c.b16 %v1244, %v1242
        %v1325 = vpack.c.b16 %v1245, %v1243
        %v1326 = vpack.c.b16 %v1248, %v1246
        %v1327 = vpack.c.b16 %v1249, %v1247
        %v1328 = vpack.c.b16 %v1252, %v1250
        %v1329 = vpack.c.b16 %v1253, %v1251
        %v1330 = vpack.c.b16 %v1256, %v1254
        %v1331 = vpack.c.b16 %v1257, %v1255
        %v1332 = vpack.c.b16 %v1260, %v1258
        %v1333 = vpack.c.b16 %v1261, %v1259
        %v1334 = vpack.c.b16 %v1264, %v1262
        %v1335 = vpack.c.b16 %v1265, %v1263
        %v1336 = vpack.c.b16 %v1268, %v1266
        %v1337 = vpack.c.b16 %v1269, %v1267
        %v1338 = vpack.c.b16 %v1272, %v1270
        %v1339 = vpack.c.b16 %v1273, %v1271
        %v1340 = vpack.c.b16 %v1276, %v1274
        %v1341 = vpack.c.b16 %v1277, %v1275
        %v1342 = vpack.c.b16 %v1280, %v1278
        %v1343 = vpack.c.b16 %v1281, %v1279
        %v1344 = vpack.c.b16 %v1284, %v1282
        %v1345 = vpack.c.b16 %v1285, %v1283
        %v1346 = vpack.c.b16 %v1288, %v1286
        %v1347 = vpack.c.b16 %v1289, %v1287
        %v1348 = vpack.c.b16 %v1292, %v1290
        %v1349 = vpack.c.b16 %v1293, %v1291
        %v1350 = vpack.c.b16 %v1296, %v1294
        %v1351 = vpack.c.b16 %v1297, %v1295
        %v1352 = vpack.c.b16 %v1300, %v1298
        %v1353 = vpack.c.b16 %v1301, %v1299
        %v1354 = vpack.c.b16 %v1304, %v1302
        %v1355 = vpack.c.b16 %v1305, %v1303
        %v1356 = vpack.c.b16 %v1308, %v1306
        %v1357 = vpack.c.b16 %v1309, %v1307
        %1406 = vmatprep.subr.bf16.mxu0 %v1311
        %1407 = vmatpush1.bf16.msra.mxu0 %v1310
        %1408 = vmatprep.subr.bf16.mxu0 %v1313
        %1409 = vmatpush1.bf16.msra.mxu0 %v1312
        %1410 = vmatprep.subr.bf16.mxu0 %v1315
        %1411 = vmatpush1.bf16.msra.mxu0 %v1314
        %1412 = vmatprep.subr.bf16.mxu0 %v1317
        %1413 = vmatpush1.bf16.msra.mxu0 %v1316
        %1414 = vmatprep.subr.bf16.mxu0 %v1319
        %1415 = vmatpush1.bf16.msra.mxu0 %v1318
        %1416 = vmatprep.subr.bf16.mxu0 %v1321
        %1417 = vmatpush1.bf16.msra.mxu0 %v1320
        %1418 = vmatprep.subr.bf16.mxu0 %v1323
        %1419 = vmatpush1.bf16.msra.mxu0 %v1322
        %1420 = vmatprep.subr.bf16.mxu0 %v1325
        %1421 = vmatpush1.bf16.msra.mxu0 %v1324
        %1422 = vmatprep.subr.bf16.mxu0 %v1327
        %1423 = vmatpush1.bf16.msra.mxu0 %v1326
        %1424 = vmatprep.subr.bf16.mxu0 %v1329
        %1425 = vmatpush1.bf16.msra.mxu0 %v1328
        %1426 = vmatprep.subr.bf16.mxu0 %v1331
        %1427 = vmatpush1.bf16.msra.mxu0 %v1330
        %1428 = vmatprep.subr.bf16.mxu0 %v1333
        %1429 = vmatpush1.bf16.msra.mxu0 %v1332
        %1430 = vmatprep.subr.bf16.mxu0 %v1335
        %1431 = vmatpush1.bf16.msra.mxu0 %v1334
        %1432 = vmatprep.subr.bf16.mxu0 %v1337
        %1433 = vmatpush1.bf16.msra.mxu0 %v1336
        %1434 = vmatprep.subr.bf16.mxu0 %v1339
        %1435 = vmatpush1.bf16.msra.mxu0 %v1338
        %1436 = vmatprep.subr.bf16.mxu0 %v1341
        %1437 = vmatpush1.bf16.msra.mxu0 %v1340
        %1438 = vmatprep.mubr.bf16.mxu0 %v459
        %1439 = vmatmul.mubr.bf16.gmra.mrb[0].mxu0 %v458
        %v1440 = vpop.f32.mrb[0].mxu0
        %v1441 = vadd.f32 %v1159, %v1440
        %v1442 = vpop.f32.mrb[0].mxu0
        %v1443 = vadd.f32 %v1163, %v1442
        %v1444 = vpop.f32.mrb[0].mxu0
        %v1445 = vadd.f32 %v1159, %v1444
        %v1446 = vpop.f32.mrb[0].mxu0
        %v1447 = vadd.f32 %v1163, %v1446
        %1448 = vdwg.mxu0
        %1449 = vmatprep.subr.bf16.mxu0 %v1343
        %1450 = vmatpush1.bf16.msra.mxu0 %v1342
        %1451 = vmatprep.subr.bf16.mxu0 %v1345
        %1452 = vmatpush1.bf16.msra.mxu0 %v1344
        %1453 = vmatprep.subr.bf16.mxu0 %v1347
        %1454 = vmatpush1.bf16.msra.mxu0 %v1346
        %1455 = vmatprep.subr.bf16.mxu0 %v1349
        %1456 = vmatpush1.bf16.msra.mxu0 %v1348
        %1457 = vmatprep.subr.bf16.mxu0 %v1351
        %1458 = vmatpush1.bf16.msra.mxu0 %v1350
        %1459 = vmatprep.subr.bf16.mxu0 %v1353
        %1460 = vmatpush1.bf16.msra.mxu0 %v1352
        %1461 = vmatprep.subr.bf16.mxu0 %v1355
        %1462 = vmatpush1.bf16.msra.mxu0 %v1354
        %1463 = vmatprep.subr.bf16.mxu0 %v1357
        %1464 = vmatpush1.bf16.msra.mxu0 %v1356
        %1465 = vmatprep.subr.bf16.mxu0 0
        %1466 = vmatpush1.bf16.msra.mxu0 0
        %1467 = vmatprep.subr.bf16.mxu0 0
        %1468 = vmatpush1.bf16.msra.mxu0 0
        %1469 = vmatprep.subr.bf16.mxu0 0
        %1470 = vmatpush1.bf16.msra.mxu0 0
        %1471 = vmatprep.subr.bf16.mxu0 0
        %1472 = vmatpush1.bf16.msra.mxu0 0
        %1473 = vmatprep.subr.bf16.mxu0 0
        %1474 = vmatpush1.bf16.msra.mxu0 0
        %1475 = vmatprep.subr.bf16.mxu0 0
        %1476 = vmatpush1.bf16.msra.mxu0 0
        %1477 = vmatprep.subr.bf16.mxu0 0
        %1478 = vmatpush1.bf16.msra.mxu0 0
        %1479 = vmatprep.subr.bf16.mxu0 0
        %1480 = vmatpush1.bf16.msra.mxu0 0
        %1481 = vmatprep.mubr.bf16.mxu0 0
        %1482 = vmatmul.mubr.bf16.gmra.mrb[0].mxu0 %v460
        %v1483 = vpop.f32.mrb[0].mxu0
        %v1484 = vadd.f32 %v1441, %v1483
        %v1485 = vpop.f32.mrb[0].mxu0
        %v1486 = vadd.f32 %v1443, %v1485
        %v1487 = vpop.f32.mrb[0].mxu0
        %v1488 = vadd.f32 %v1445, %v1487
        %v1489 = vpop.f32.mrb[0].mxu0
        %v1490 = vadd.f32 %v1447, %v1489
        %1491 = vdwg.mxu0
        %v1492 = vmax.f32 %v1484, 0.0
        %v1493 = vmax.f32 %v1486, 0.0
        %v1494 = vmax.f32 %v1488, 0.0
        %v1495 = vmax.f32 %v1490, 0.0
        %v1496 = vpack.c.bf16 %v1494, %v1492
        %v1497 = vpack.c.bf16 %v1495, %v1493
        %v1498 = vld [vmem:[#allocation6 + $0x418] sm:$0xff]
        %v1499 = vld [vmem:[#allocation6 + $0x438] sm:$0xff]
        %v1500 = vld [vmem:[#allocation6 + $0x458] sm:$0xff]
        %v1501 = vld [vmem:[#allocation6 + $0x478] sm:$0xff]
        %v1502 = vld [vmem:[#allocation6 + $0x498] sm:$0xff]
        %v1503 = vld [vmem:[#allocation6 + $0x4b8] sm:$0xff]
        %v1504 = vld [vmem:[#allocation6 + $0x4d8] sm:$0xff]
        %v1505 = vld [vmem:[#allocation6 + $0x4f8] sm:$0xff]
        %v1506 = vld [vmem:[#allocation6 + $0x518] sm:$0xff]
        %v1507 = vld [vmem:[#allocation6 + $0x538] sm:$0xff]
        %v1508 = vld [vmem:[#allocation6 + $0x558] sm:$0xff]
        %v1509 = vld [vmem:[#allocation6 + $0x578] sm:$0xff]
        %v1510 = vld [vmem:[#allocation6 + $0x598] sm:$0xff]
        %v1511 = vld [vmem:[#allocation6 + $0x5b8] sm:$0xff]
        %v1512 = vld [vmem:[#allocation6 + $0x5d8] sm:$0xff]
        %v1513 = vld [vmem:[#allocation6 + $0x5f8] sm:$0xff]
        %v1514 = vld [vmem:[#allocation6 + $0x618] sm:$0xff]
        %v1515 = vld [vmem:[#allocation6 + $0x638] sm:$0xff]
        %v1516 = vld [vmem:[#allocation6 + $0x658] sm:$0xff]
        %v1517 = vld [vmem:[#allocation6 + $0x678] sm:$0xff]
        %v1518 = vld [vmem:[#allocation6 + $0x698] sm:$0xff]
        %v1519 = vld [vmem:[#allocation6 + $0x6b8] sm:$0xff]
        %v1520 = vld [vmem:[#allocation6 + $0x6d8] sm:$0xff]
        %v1521 = vld [vmem:[#allocation6 + $0x6f8] sm:$0xff]
        %v1522 = vld [vmem:[#allocation6 + $0x718] sm:$0xff]
        %v1523 = vld [vmem:[#allocation6 + $0x738] sm:$0xff]
        %v1524 = vld [vmem:[#allocation6 + $0x758] sm:$0xff]
        %v1525 = vld [vmem:[#allocation6 + $0x778] sm:$0xff]
        %v1526 = vld [vmem:[#allocation6 + $0x798] sm:$0xff]
        %v1527 = vld [vmem:[#allocation6 + $0x7b8] sm:$0xff]
        %v1528 = vld [vmem:[#allocation6 + $0x7d8] sm:$0xff]
        %v1529 = vld [vmem:[#allocation6 + $0x7f8] sm:$0xff]
        %v1530 = vld [vmem:[#allocation8 + $0x6] sm:$0x3]
        %v1532 = vlaneseq
        %v1533 = vshrl.u32 %v1532, 7
        %v1534 = vsub.s32 0, %v1533
        %v1535 = vrot.slane %v1530, %v1534
        %v1536 = vlaneseq
        %v1537 = vshrl.u32 %v1536, 7
        %v1538 = vsub.s32 1, %v1537
        %v1539 = vrot.slane %v1530, %v1538
        %v1574 = vunpack.c.l.b16 %v1498
        %v1575 = vunpack.c.h.b16 %v1498
        %v1576 = vunpack.c.l.b16 %v1499
        %v1577 = vunpack.c.h.b16 %v1499
        %v1578 = vunpack.c.l.b16 %v1500
        %v1579 = vunpack.c.h.b16 %v1500
        %v1580 = vunpack.c.l.b16 %v1501
        %v1581 = vunpack.c.h.b16 %v1501
        %v1582 = vunpack.c.l.b16 %v1502
        %v1583 = vunpack.c.h.b16 %v1502
        %v1584 = vunpack.c.l.b16 %v1503
        %v1585 = vunpack.c.h.b16 %v1503
        %v1586 = vunpack.c.l.b16 %v1504
        %v1587 = vunpack.c.h.b16 %v1504
        %v1588 = vunpack.c.l.b16 %v1505
        %v1589 = vunpack.c.h.b16 %v1505
        %v1590 = vunpack.c.l.b16 %v1506
        %v1591 = vunpack.c.h.b16 %v1506
        %v1592 = vunpack.c.l.b16 %v1507
        %v1593 = vunpack.c.h.b16 %v1507
        %v1594 = vunpack.c.l.b16 %v1508
        %v1595 = vunpack.c.h.b16 %v1508
        %v1596 = vunpack.c.l.b16 %v1509
        %v1597 = vunpack.c.h.b16 %v1509
        %v1598 = vunpack.c.l.b16 %v1510
        %v1599 = vunpack.c.h.b16 %v1510
        %v1600 = vunpack.c.l.b16 %v1511
        %v1601 = vunpack.c.h.b16 %v1511
        %v1602 = vunpack.c.l.b16 %v1512
        %v1603 = vunpack.c.h.b16 %v1512
        %v1604 = vunpack.c.l.b16 %v1513
        %v1605 = vunpack.c.h.b16 %v1513
        %v1606 = vunpack.c.l.b16 %v1514
        %v1607 = vunpack.c.h.b16 %v1514
        %v1608 = vunpack.c.l.b16 %v1515
        %v1609 = vunpack.c.h.b16 %v1515
        %v1610 = vunpack.c.l.b16 %v1516
        %v1611 = vunpack.c.h.b16 %v1516
        %v1612 = vunpack.c.l.b16 %v1517
        %v1613 = vunpack.c.h.b16 %v1517
        %v1614 = vunpack.c.l.b16 %v1518
        %v1615 = vunpack.c.h.b16 %v1518
        %v1616 = vunpack.c.l.b16 %v1519
        %v1617 = vunpack.c.h.b16 %v1519
        %v1618 = vunpack.c.l.b16 %v1520
        %v1619 = vunpack.c.h.b16 %v1520
        %v1620 = vunpack.c.l.b16 %v1521
        %v1621 = vunpack.c.h.b16 %v1521
        %v1622 = vunpack.c.l.b16 %v1522
        %v1623 = vunpack.c.h.b16 %v1522
        %v1624 = vunpack.c.l.b16 %v1523
        %v1625 = vunpack.c.h.b16 %v1523
        %v1626 = vunpack.c.l.b16 %v1524
        %v1627 = vunpack.c.h.b16 %v1524
        %v1628 = vunpack.c.l.b16 %v1525
        %v1629 = vunpack.c.h.b16 %v1525
        %v1630 = vunpack.c.l.b16 %v1526
        %v1631 = vunpack.c.h.b16 %v1526
        %v1632 = vunpack.c.l.b16 %v1527
        %v1633 = vunpack.c.h.b16 %v1527
        %v1634 = vunpack.c.l.b16 %v1528
        %v1635 = vunpack.c.h.b16 %v1528
        %v1636 = vunpack.c.l.b16 %v1529
        %v1637 = vunpack.c.h.b16 %v1529
        %v1638 = vpack.c.b16 %v1576, %v1574
        %v1639 = vpack.c.b16 %v1577, %v1575
        %v1640 = vpack.c.b16 %v1580, %v1578
        %v1641 = vpack.c.b16 %v1581, %v1579
        %v1642 = vpack.c.b16 %v1584, %v1582
        %v1643 = vpack.c.b16 %v1585, %v1583
        %v1644 = vpack.c.b16 %v1588, %v1586
        %v1645 = vpack.c.b16 %v1589, %v1587
        %v1646 = vpack.c.b16 %v1592, %v1590
        %v1647 = vpack.c.b16 %v1593, %v1591
        %v1648 = vpack.c.b16 %v1596, %v1594
        %v1649 = vpack.c.b16 %v1597, %v1595
        %v1650 = vpack.c.b16 %v1600, %v1598
        %v1651 = vpack.c.b16 %v1601, %v1599
        %v1652 = vpack.c.b16 %v1604, %v1602
        %v1653 = vpack.c.b16 %v1605, %v1603
        %v1654 = vpack.c.b16 %v1608, %v1606
        %v1655 = vpack.c.b16 %v1609, %v1607
        %v1656 = vpack.c.b16 %v1612, %v1610
        %v1657 = vpack.c.b16 %v1613, %v1611
        %v1658 = vpack.c.b16 %v1616, %v1614
        %v1659 = vpack.c.b16 %v1617, %v1615
        %v1660 = vpack.c.b16 %v1620, %v1618
        %v1661 = vpack.c.b16 %v1621, %v1619
        %v1662 = vpack.c.b16 %v1624, %v1622
        %v1663 = vpack.c.b16 %v1625, %v1623
        %v1664 = vpack.c.b16 %v1628, %v1626
        %v1665 = vpack.c.b16 %v1629, %v1627
        %v1666 = vpack.c.b16 %v1632, %v1630
        %v1667 = vpack.c.b16 %v1633, %v1631
        %v1668 = vpack.c.b16 %v1636, %v1634
        %v1669 = vpack.c.b16 %v1637, %v1635
        %1702 = vmatprep.subr.bf16.mxu0 %v1639
        %1703 = vmatpush1.bf16.msra.mxu0 %v1638
        %1704 = vmatprep.subr.bf16.mxu0 %v1641
        %1705 = vmatpush1.bf16.msra.mxu0 %v1640
        %1706 = vmatprep.subr.bf16.mxu0 %v1643
        %1707 = vmatpush1.bf16.msra.mxu0 %v1642
        %1708 = vmatprep.subr.bf16.mxu0 %v1645
        %1709 = vmatpush1.bf16.msra.mxu0 %v1644
        %1710 = vmatprep.subr.bf16.mxu0 %v1647
        %1711 = vmatpush1.bf16.msra.mxu0 %v1646
        %1712 = vmatprep.subr.bf16.mxu0 %v1649
        %1713 = vmatpush1.bf16.msra.mxu0 %v1648
        %1714 = vmatprep.subr.bf16.mxu0 %v1651
        %1715 = vmatpush1.bf16.msra.mxu0 %v1650
        %1716 = vmatprep.subr.bf16.mxu0 %v1653
        %1717 = vmatpush1.bf16.msra.mxu0 %v1652
        %1718 = vmatprep.subr.bf16.mxu0 %v1655
        %1719 = vmatpush1.bf16.msra.mxu0 %v1654
        %1720 = vmatprep.subr.bf16.mxu0 %v1657
        %1721 = vmatpush1.bf16.msra.mxu0 %v1656
        %1722 = vmatprep.subr.bf16.mxu0 %v1659
        %1723 = vmatpush1.bf16.msra.mxu0 %v1658
        %1724 = vmatprep.subr.bf16.mxu0 %v1661
        %1725 = vmatpush1.bf16.msra.mxu0 %v1660
        %1726 = vmatprep.subr.bf16.mxu0 %v1663
        %1727 = vmatpush1.bf16.msra.mxu0 %v1662
        %1728 = vmatprep.subr.bf16.mxu0 %v1665
        %1729 = vmatpush1.bf16.msra.mxu0 %v1664
        %1730 = vmatprep.subr.bf16.mxu0 %v1667
        %1731 = vmatpush1.bf16.msra.mxu0 %v1666
        %1732 = vmatprep.subr.bf16.mxu0 %v1669
        %1733 = vmatpush1.bf16.msra.mxu0 %v1668
        %1734 = vmatprep.mubr.bf16.mxu0 %v460
        %1735 = vmatmul.mubr.bf16.gmra.mrb[0].mxu0 %v459
        %v1736 = vpop.f32.mrb[0].mxu0
        %v1737 = vadd.f32 %v1535, %v1736
        %v1738 = vpop.f32.mrb[0].mxu0
        %v1739 = vadd.f32 %v1539, %v1738
        %v1740 = vpop.f32.mrb[0].mxu0
        %v1741 = vadd.f32 %v1535, %v1740
        %v1742 = vpop.f32.mrb[0].mxu0
        %v1743 = vadd.f32 %v1539, %v1742
        %1744 = vdwg.mxu0
        %v1745 = vmax.f32 %v1737, 0.0
        %v1746 = vmax.f32 %v1739, 0.0
        %v1747 = vmax.f32 %v1741, 0.0
        %v1748 = vmax.f32 %v1743, 0.0
        %v1749 = vpack.c.bf16 %v1747, %v1745
        %v1750 = vpack.c.bf16 %v1748, %v1746
        %v1751 = vld [vmem:[#allocation9] sm:$0xff]
        %v1752 = vld [vmem:[#allocation9 + $0x20] sm:$0xff]
        %v1753 = vld [vmem:[#allocation9 + $0x40] sm:$0xff]
        %v1754 = vld [vmem:[#allocation9 + $0x60] sm:$0xff]
        %v1755 = vld [vmem:[#allocation9 + $0x80] sm:$0xff]
        %v1756 = vld [vmem:[#allocation9 + $0xa0] sm:$0xff]
        %v1757 = vld [vmem:[#allocation9 + $0xc0] sm:$0xff]
        %v1758 = vld [vmem:[#allocation9 + $0xe0] sm:$0xff]
        %v1759 = vld [vmem:[#allocation9 + $0x100] sm:$0xff]
        %v1760 = vld [vmem:[#allocation9 + $0x120] sm:$0xff]
        %v1761 = vld [vmem:[#allocation9 + $0x140] sm:$0xff]
        %v1762 = vld [vmem:[#allocation9 + $0x160] sm:$0xff]
        %v1763 = vld [vmem:[#allocation9 + $0x180] sm:$0xff]
        %v1764 = vld [vmem:[#allocation9 + $0x1a0] sm:$0xff]
        %v1765 = vld [vmem:[#allocation9 + $0x1c0] sm:$0xff]
        %v1766 = vld [vmem:[#allocation9 + $0x1e0] sm:$0xff]
        %v1767 = vld [vmem:[#allocation9 + $0x200] sm:$0xff]
        %v1768 = vld [vmem:[#allocation9 + $0x220] sm:$0xff]
        %v1769 = vld [vmem:[#allocation9 + $0x240] sm:$0xff]
        %v1770 = vld [vmem:[#allocation9 + $0x260] sm:$0xff]
        %v1771 = vld [vmem:[#allocation9 + $0x280] sm:$0xff]
        %v1772 = vld [vmem:[#allocation9 + $0x2a0] sm:$0xff]
        %v1773 = vld [vmem:[#allocation9 + $0x2c0] sm:$0xff]
        %v1774 = vld [vmem:[#allocation9 + $0x2e0] sm:$0xff]
        %v1775 = vld [vmem:[#allocation9 + $0x300] sm:$0xff]
        %v1776 = vld [vmem:[#allocation9 + $0x320] sm:$0xff]
        %v1777 = vld [vmem:[#allocation9 + $0x340] sm:$0xff]
        %v1778 = vld [vmem:[#allocation9 + $0x360] sm:$0xff]
        %v1779 = vld [vmem:[#allocation9 + $0x380] sm:$0xff]
        %v1780 = vld [vmem:[#allocation9 + $0x3a0] sm:$0xff]
        %v1781 = vld [vmem:[#allocation9 + $0x3c0] sm:$0xff]
        %v1782 = vld [vmem:[#allocation9 + $0x3e0] sm:$0xff]
        %v1783 = vld [vmem:[#allocation9 + $0x400] sm:$0xff]
        %v1784 = vld [vmem:[#allocation9 + $0x420] sm:$0xff]
        %v1785 = vld [vmem:[#allocation9 + $0x440] sm:$0xff]
        %v1786 = vld [vmem:[#allocation9 + $0x460] sm:$0xff]
        %v1787 = vld [vmem:[#allocation9 + $0x480] sm:$0xff]
        %v1788 = vld [vmem:[#allocation9 + $0x4a0] sm:$0xff]
        %v1789 = vld [vmem:[#allocation9 + $0x4c0] sm:$0xff]
        %v1790 = vld [vmem:[#allocation9 + $0x4e0] sm:$0xff]
        %v1791 = vld [vmem:[#allocation9 + $0x500] sm:$0xff]
        %v1792 = vld [vmem:[#allocation9 + $0x520] sm:$0xff]
        %v1793 = vld [vmem:[#allocation9 + $0x540] sm:$0xff]
        %v1794 = vld [vmem:[#allocation9 + $0x560] sm:$0xff]
        %v1795 = vld [vmem:[#allocation9 + $0x580] sm:$0xff]
        %v1796 = vld [vmem:[#allocation9 + $0x5a0] sm:$0xff]
        %v1797 = vld [vmem:[#allocation9 + $0x5c0] sm:$0xff]
        %v1798 = vld [vmem:[#allocation9 + $0x5e0] sm:$0xff]
        %v1799 = vld [vmem:[#allocation11] sm:$0x3]
        %v1801 = vlaneseq
        %v1802 = vshrl.u32 %v1801, 7
        %v1803 = vsub.s32 0, %v1802
        %v1804 = vrot.slane %v1799, %v1803
        %v1805 = vlaneseq
        %v1806 = vshrl.u32 %v1805, 7
        %v1807 = vsub.s32 1, %v1806
        %v1808 = vrot.slane %v1799, %v1807
        %v1859 = vunpack.c.l.b16 %v1751
        %v1860 = vunpack.c.h.b16 %v1751
        %v1861 = vunpack.c.l.b16 %v1752
        %v1862 = vunpack.c.h.b16 %v1752
        %v1863 = vunpack.c.l.b16 %v1753
        %v1864 = vunpack.c.h.b16 %v1753
        %v1865 = vunpack.c.l.b16 %v1754
        %v1866 = vunpack.c.h.b16 %v1754
        %v1867 = vunpack.c.l.b16 %v1755
        %v1868 = vunpack.c.h.b16 %v1755
        %v1869 = vunpack.c.l.b16 %v1756
        %v1870 = vunpack.c.h.b16 %v1756
        %v1871 = vunpack.c.l.b16 %v1757
        %v1872 = vunpack.c.h.b16 %v1757
        %v1873 = vunpack.c.l.b16 %v1758
        %v1874 = vunpack.c.h.b16 %v1758
        %v1875 = vunpack.c.l.b16 %v1759
        %v1876 = vunpack.c.h.b16 %v1759
        %v1877 = vunpack.c.l.b16 %v1760
        %v1878 = vunpack.c.h.b16 %v1760
        %v1879 = vunpack.c.l.b16 %v1761
        %v1880 = vunpack.c.h.b16 %v1761
        %v1881 = vunpack.c.l.b16 %v1762
        %v1882 = vunpack.c.h.b16 %v1762
        %v1883 = vunpack.c.l.b16 %v1763
        %v1884 = vunpack.c.h.b16 %v1763
        %v1885 = vunpack.c.l.b16 %v1764
        %v1886 = vunpack.c.h.b16 %v1764
        %v1887 = vunpack.c.l.b16 %v1765
        %v1888 = vunpack.c.h.b16 %v1765
        %v1889 = vunpack.c.l.b16 %v1766
        %v1890 = vunpack.c.h.b16 %v1766
        %v1891 = vunpack.c.l.b16 %v1767
        %v1892 = vunpack.c.h.b16 %v1767
        %v1893 = vunpack.c.l.b16 %v1768
        %v1894 = vunpack.c.h.b16 %v1768
        %v1895 = vunpack.c.l.b16 %v1769
        %v1896 = vunpack.c.h.b16 %v1769
        %v1897 = vunpack.c.l.b16 %v1770
        %v1898 = vunpack.c.h.b16 %v1770
        %v1899 = vunpack.c.l.b16 %v1771
        %v1900 = vunpack.c.h.b16 %v1771
        %v1901 = vunpack.c.l.b16 %v1772
        %v1902 = vunpack.c.h.b16 %v1772
        %v1903 = vunpack.c.l.b16 %v1773
        %v1904 = vunpack.c.h.b16 %v1773
        %v1905 = vunpack.c.l.b16 %v1774
        %v1906 = vunpack.c.h.b16 %v1774
        %v1907 = vunpack.c.l.b16 %v1775
        %v1908 = vunpack.c.h.b16 %v1775
        %v1909 = vunpack.c.l.b16 %v1776
        %v1910 = vunpack.c.h.b16 %v1776
        %v1911 = vunpack.c.l.b16 %v1777
        %v1912 = vunpack.c.h.b16 %v1777
        %v1913 = vunpack.c.l.b16 %v1778
        %v1914 = vunpack.c.h.b16 %v1778
        %v1915 = vunpack.c.l.b16 %v1779
        %v1916 = vunpack.c.h.b16 %v1779
        %v1917 = vunpack.c.l.b16 %v1780
        %v1918 = vunpack.c.h.b16 %v1780
        %v1919 = vunpack.c.l.b16 %v1781
        %v1920 = vunpack.c.h.b16 %v1781
        %v1921 = vunpack.c.l.b16 %v1782
        %v1922 = vunpack.c.h.b16 %v1782
        %v1923 = vunpack.c.l.b16 %v1783
        %v1924 = vunpack.c.h.b16 %v1783
        %v1925 = vunpack.c.l.b16 %v1784
        %v1926 = vunpack.c.h.b16 %v1784
        %v1927 = vunpack.c.l.b16 %v1785
        %v1928 = vunpack.c.h.b16 %v1785
        %v1929 = vunpack.c.l.b16 %v1786
        %v1930 = vunpack.c.h.b16 %v1786
        %v1931 = vunpack.c.l.b16 %v1787
        %v1932 = vunpack.c.h.b16 %v1787
        %v1933 = vunpack.c.l.b16 %v1788
        %v1934 = vunpack.c.h.b16 %v1788
        %v1935 = vunpack.c.l.b16 %v1789
        %v1936 = vunpack.c.h.b16 %v1789
        %v1937 = vunpack.c.l.b16 %v1790
        %v1938 = vunpack.c.h.b16 %v1790
        %v1939 = vunpack.c.l.b16 %v1791
        %v1940 = vunpack.c.h.b16 %v1791
        %v1941 = vunpack.c.l.b16 %v1792
        %v1942 = vunpack.c.h.b16 %v1792
        %v1943 = vunpack.c.l.b16 %v1793
        %v1944 = vunpack.c.h.b16 %v1793
        %v1945 = vunpack.c.l.b16 %v1794
        %v1946 = vunpack.c.h.b16 %v1794
        %v1947 = vunpack.c.l.b16 %v1795
        %v1948 = vunpack.c.h.b16 %v1795
        %v1949 = vunpack.c.l.b16 %v1796
        %v1950 = vunpack.c.h.b16 %v1796
        %v1951 = vunpack.c.l.b16 %v1797
        %v1952 = vunpack.c.h.b16 %v1797
        %v1953 = vunpack.c.l.b16 %v1798
        %v1954 = vunpack.c.h.b16 %v1798
        %v1955 = vpack.c.b16 %v1861, %v1859
        %v1956 = vpack.c.b16 %v1862, %v1860
        %v1957 = vpack.c.b16 %v1865, %v1863
        %v1958 = vpack.c.b16 %v1866, %v1864
        %v1959 = vpack.c.b16 %v1869, %v1867
        %v1960 = vpack.c.b16 %v1870, %v1868
        %v1961 = vpack.c.b16 %v1873, %v1871
        %v1962 = vpack.c.b16 %v1874, %v1872
        %v1963 = vpack.c.b16 %v1877, %v1875
        %v1964 = vpack.c.b16 %v1878, %v1876
        %v1965 = vpack.c.b16 %v1881, %v1879
        %v1966 = vpack.c.b16 %v1882, %v1880
        %v1967 = vpack.c.b16 %v1885, %v1883
        %v1968 = vpack.c.b16 %v1886, %v1884
        %v1969 = vpack.c.b16 %v1889, %v1887
        %v1970 = vpack.c.b16 %v1890, %v1888
        %v1971 = vpack.c.b16 %v1893, %v1891
        %v1972 = vpack.c.b16 %v1894, %v1892
        %v1973 = vpack.c.b16 %v1897, %v1895
        %v1974 = vpack.c.b16 %v1898, %v1896
        %v1975 = vpack.c.b16 %v1901, %v1899
        %v1976 = vpack.c.b16 %v1902, %v1900
        %v1977 = vpack.c.b16 %v1905, %v1903
        %v1978 = vpack.c.b16 %v1906, %v1904
        %v1979 = vpack.c.b16 %v1909, %v1907
        %v1980 = vpack.c.b16 %v1910, %v1908
        %v1981 = vpack.c.b16 %v1913, %v1911
        %v1982 = vpack.c.b16 %v1914, %v1912
        %v1983 = vpack.c.b16 %v1917, %v1915
        %v1984 = vpack.c.b16 %v1918, %v1916
        %v1985 = vpack.c.b16 %v1921, %v1919
        %v1986 = vpack.c.b16 %v1922, %v1920
        %v1987 = vpack.c.b16 %v1925, %v1923
        %v1988 = vpack.c.b16 %v1926, %v1924
        %v1989 = vpack.c.b16 %v1929, %v1927
        %v1990 = vpack.c.b16 %v1930, %v1928
        %v1991 = vpack.c.b16 %v1933, %v1931
        %v1992 = vpack.c.b16 %v1934, %v1932
        %v1993 = vpack.c.b16 %v1937, %v1935
        %v1994 = vpack.c.b16 %v1938, %v1936
        %v1995 = vpack.c.b16 %v1941, %v1939
        %v1996 = vpack.c.b16 %v1942, %v1940
        %v1997 = vpack.c.b16 %v1945, %v1943
        %v1998 = vpack.c.b16 %v1946, %v1944
        %v1999 = vpack.c.b16 %v1949, %v1947
        %v2000 = vpack.c.b16 %v1950, %v1948
        %v2001 = vpack.c.b16 %v1953, %v1951
        %v2002 = vpack.c.b16 %v1954, %v1952
        %2051 = vmatprep.subr.bf16.mxu0 %v1956
        %2052 = vmatpush1.bf16.msra.mxu0 %v1955
        %2053 = vmatprep.subr.bf16.mxu0 %v1958
        %2054 = vmatpush1.bf16.msra.mxu0 %v1957
        %2055 = vmatprep.subr.bf16.mxu0 %v1960
        %2056 = vmatpush1.bf16.msra.mxu0 %v1959
        %2057 = vmatprep.subr.bf16.mxu0 %v1962
        %2058 = vmatpush1.bf16.msra.mxu0 %v1961
        %2059 = vmatprep.subr.bf16.mxu0 %v1964
        %2060 = vmatpush1.bf16.msra.mxu0 %v1963
        %2061 = vmatprep.subr.bf16.mxu0 %v1966
        %2062 = vmatpush1.bf16.msra.mxu0 %v1965
        %2063 = vmatprep.subr.bf16.mxu0 %v1968
        %2064 = vmatpush1.bf16.msra.mxu0 %v1967
        %2065 = vmatprep.subr.bf16.mxu0 %v1970
        %2066 = vmatpush1.bf16.msra.mxu0 %v1969
        %2067 = vmatprep.subr.bf16.mxu0 %v1972
        %2068 = vmatpush1.bf16.msra.mxu0 %v1971
        %2069 = vmatprep.subr.bf16.mxu0 %v1974
        %2070 = vmatpush1.bf16.msra.mxu0 %v1973
        %2071 = vmatprep.subr.bf16.mxu0 %v1976
        %2072 = vmatpush1.bf16.msra.mxu0 %v1975
        %2073 = vmatprep.subr.bf16.mxu0 %v1978
        %2074 = vmatpush1.bf16.msra.mxu0 %v1977
        %2075 = vmatprep.subr.bf16.mxu0 %v1980
        %2076 = vmatpush1.bf16.msra.mxu0 %v1979
        %2077 = vmatprep.subr.bf16.mxu0 %v1982
        %2078 = vmatpush1.bf16.msra.mxu0 %v1981
        %2079 = vmatprep.subr.bf16.mxu0 %v1984
        %2080 = vmatpush1.bf16.msra.mxu0 %v1983
        %2081 = vmatprep.subr.bf16.mxu0 %v1986
        %2082 = vmatpush1.bf16.msra.mxu0 %v1985
        %2083 = vmatprep.mubr.bf16.mxu0 %v713
        %2084 = vmatmul.mubr.bf16.gmra.mrb[0].mxu0 %v712
        %v2085 = vpop.f32.mrb[0].mxu0
        %v2086 = vadd.f32 %v1804, %v2085
        %v2087 = vpop.f32.mrb[0].mxu0
        %v2088 = vadd.f32 %v1808, %v2087
        %v2089 = vpop.f32.mrb[0].mxu0
        %v2090 = vadd.f32 %v1804, %v2089
        %v2091 = vpop.f32.mrb[0].mxu0
        %v2092 = vadd.f32 %v1808, %v2091
        %2093 = vdwg.mxu0
        %2094 = vmatprep.subr.bf16.mxu0 %v1988
        %2095 = vmatpush1.bf16.msra.mxu0 %v1987
        %2096 = vmatprep.subr.bf16.mxu0 %v1990
        %2097 = vmatpush1.bf16.msra.mxu0 %v1989
        %2098 = vmatprep.subr.bf16.mxu0 %v1992
        %2099 = vmatpush1.bf16.msra.mxu0 %v1991
        %2100 = vmatprep.subr.bf16.mxu0 %v1994
        %2101 = vmatpush1.bf16.msra.mxu0 %v1993
        %2102 = vmatprep.subr.bf16.mxu0 %v1996
        %2103 = vmatpush1.bf16.msra.mxu0 %v1995
        %2104 = vmatprep.subr.bf16.mxu0 %v1998
        %2105 = vmatpush1.bf16.msra.mxu0 %v1997
        %2106 = vmatprep.subr.bf16.mxu0 %v2000
        %2107 = vmatpush1.bf16.msra.mxu0 %v1999
        %2108 = vmatprep.subr.bf16.mxu0 %v2002
        %2109 = vmatpush1.bf16.msra.mxu0 %v2001
        %2110 = vmatprep.subr.bf16.mxu0 0
        %2111 = vmatpush1.bf16.msra.mxu0 0
        %2112 = vmatprep.subr.bf16.mxu0 0
        %2113 = vmatpush1.bf16.msra.mxu0 0
        %2114 = vmatprep.subr.bf16.mxu0 0
        %2115 = vmatpush1.bf16.msra.mxu0 0
        %2116 = vmatprep.subr.bf16.mxu0 0
        %2117 = vmatpush1.bf16.msra.mxu0 0
        %2118 = vmatprep.subr.bf16.mxu0 0
        %2119 = vmatpush1.bf16.msra.mxu0 0
        %2120 = vmatprep.subr.bf16.mxu0 0
        %2121 = vmatpush1.bf16.msra.mxu0 0
        %2122 = vmatprep.subr.bf16.mxu0 0
        %2123 = vmatpush1.bf16.msra.mxu0 0
        %2124 = vmatprep.subr.bf16.mxu0 0
        %2125 = vmatpush1.bf16.msra.mxu0 0
        %2126 = vmatprep.mubr.bf16.mxu0 0
        %2127 = vmatmul.mubr.bf16.gmra.mrb[0].mxu0 %v1104
        %v2128 = vpop.f32.mrb[0].mxu0
        %v2129 = vadd.f32 %v2086, %v2128
        %v2130 = vpop.f32.mrb[0].mxu0
        %v2131 = vadd.f32 %v2088, %v2130
        %v2132 = vpop.f32.mrb[0].mxu0
        %v2133 = vadd.f32 %v2090, %v2132
        %v2134 = vpop.f32.mrb[0].mxu0
        %v2135 = vadd.f32 %v2092, %v2134
        %2136 = vdwg.mxu0
        %v2137 = vmax.f32 %v2129, 0.0
        %v2138 = vmax.f32 %v2131, 0.0
        %v2139 = vmax.f32 %v2133, 0.0
        %v2140 = vmax.f32 %v2135, 0.0
        %v2141 = vadd.f32 %v2137, 0.0
        %v2142 = vadd.f32 %v2139, 0.0
        %v2143 = vadd.f32 %v2141, %v2138
        %v2144 = vadd.f32 %v2142, %v2140
        %v2145 = vld [vmem:[#allocation9 + $0x208] sm:$0xff]
        %v2146 = vld [vmem:[#allocation9 + $0x228] sm:$0xff]
        %v2147 = vld [vmem:[#allocation9 + $0x248] sm:$0xff]
        %v2148 = vld [vmem:[#allocation9 + $0x268] sm:$0xff]
        %v2149 = vld [vmem:[#allocation9 + $0x288] sm:$0xff]
        %v2150 = vld [vmem:[#allocation9 + $0x2a8] sm:$0xff]
        %v2151 = vld [vmem:[#allocation9 + $0x2c8] sm:$0xff]
        %v2152 = vld [vmem:[#allocation9 + $0x2e8] sm:$0xff]
        %v2153 = vld [vmem:[#allocation9 + $0x308] sm:$0xff]
        %v2154 = vld [vmem:[#allocation9 + $0x328] sm:$0xff]
        %v2155 = vld [vmem:[#allocation9 + $0x348] sm:$0xff]
        %v2156 = vld [vmem:[#allocation9 + $0x368] sm:$0xff]
        %v2157 = vld [vmem:[#allocation9 + $0x388] sm:$0xff]
        %v2158 = vld [vmem:[#allocation9 + $0x3a8] sm:$0xff]
        %v2159 = vld [vmem:[#allocation9 + $0x3c8] sm:$0xff]
        %v2160 = vld [vmem:[#allocation9 + $0x3e8] sm:$0xff]
        %v2161 = vld [vmem:[#allocation9 + $0x408] sm:$0xff]
        %v2162 = vld [vmem:[#allocation9 + $0x428] sm:$0xff]
        %v2163 = vld [vmem:[#allocation9 + $0x448] sm:$0xff]
        %v2164 = vld [vmem:[#allocation9 + $0x468] sm:$0xff]
        %v2165 = vld [vmem:[#allocation9 + $0x488] sm:$0xff]
        %v2166 = vld [vmem:[#allocation9 + $0x4a8] sm:$0xff]
        %v2167 = vld [vmem:[#allocation9 + $0x4c8] sm:$0xff]
        %v2168 = vld [vmem:[#allocation9 + $0x4e8] sm:$0xff]
        %v2169 = vld [vmem:[#allocation9 + $0x508] sm:$0xff]
        %v2170 = vld [vmem:[#allocation9 + $0x528] sm:$0xff]
        %v2171 = vld [vmem:[#allocation9 + $0x548] sm:$0xff]
        %v2172 = vld [vmem:[#allocation9 + $0x568] sm:$0xff]
        %v2173 = vld [vmem:[#allocation9 + $0x588] sm:$0xff]
        %v2174 = vld [vmem:[#allocation9 + $0x5a8] sm:$0xff]
        %v2175 = vld [vmem:[#allocation9 + $0x5c8] sm:$0xff]
        %v2176 = vld [vmem:[#allocation9 + $0x5e8] sm:$0xff]
        %v2177 = vld [vmem:[#allocation9 + $0x608] sm:$0xff]
        %v2178 = vld [vmem:[#allocation9 + $0x628] sm:$0xff]
        %v2179 = vld [vmem:[#allocation9 + $0x648] sm:$0xff]
        %v2180 = vld [vmem:[#allocation9 + $0x668] sm:$0xff]
        %v2181 = vld [vmem:[#allocation9 + $0x688] sm:$0xff]
        %v2182 = vld [vmem:[#allocation9 + $0x6a8] sm:$0xff]
        %v2183 = vld [vmem:[#allocation9 + $0x6c8] sm:$0xff]
        %v2184 = vld [vmem:[#allocation9 + $0x6e8] sm:$0xff]
        %v2185 = vld [vmem:[#allocation9 + $0x708] sm:$0xff]
        %v2186 = vld [vmem:[#allocation9 + $0x728] sm:$0xff]
        %v2187 = vld [vmem:[#allocation9 + $0x748] sm:$0xff]
        %v2188 = vld [vmem:[#allocation9 + $0x768] sm:$0xff]
        %v2189 = vld [vmem:[#allocation9 + $0x788] sm:$0xff]
        %v2190 = vld [vmem:[#allocation9 + $0x7a8] sm:$0xff]
        %v2191 = vld [vmem:[#allocation9 + $0x7c8] sm:$0xff]
        %v2192 = vld [vmem:[#allocation9 + $0x7e8] sm:$0xff]
        %v2193 = vld [vmem:[#allocation9 + $0x808] sm:$0xff]
        %v2194 = vld [vmem:[#allocation9 + $0x828] sm:$0xff]
        %v2195 = vld [vmem:[#allocation9 + $0x848] sm:$0xff]
        %v2196 = vld [vmem:[#allocation9 + $0x868] sm:$0xff]
        %v2197 = vld [vmem:[#allocation9 + $0x888] sm:$0xff]
        %v2198 = vld [vmem:[#allocation9 + $0x8a8] sm:$0xff]
        %v2199 = vld [vmem:[#allocation9 + $0x8c8] sm:$0xff]
        %v2200 = vld [vmem:[#allocation9 + $0x8e8] sm:$0xff]
        %v2201 = vld [vmem:[#allocation9 + $0x908] sm:$0xff]
        %v2202 = vld [vmem:[#allocation9 + $0x928] sm:$0xff]
        %v2203 = vld [vmem:[#allocation9 + $0x948] sm:$0xff]
        %v2204 = vld [vmem:[#allocation9 + $0x968] sm:$0xff]
        %v2205 = vld [vmem:[#allocation9 + $0x988] sm:$0xff]
        %v2206 = vld [vmem:[#allocation9 + $0x9a8] sm:$0xff]
        %v2207 = vld [vmem:[#allocation9 + $0x9c8] sm:$0xff]
        %v2208 = vld [vmem:[#allocation9 + $0x9e8] sm:$0xff]
        %v2209 = vld [vmem:[#allocation11 + $0x2] sm:$0x3]
        %v2211 = vlaneseq
        %v2212 = vshrl.u32 %v2211, 7
        %v2213 = vsub.s32 0, %v2212
        %v2214 = vrot.slane %v2209, %v2213
        %v2215 = vlaneseq
        %v2216 = vshrl.u32 %v2215, 7
        %v2217 = vsub.s32 1, %v2216
        %v2218 = vrot.slane %v2209, %v2217
        %v2285 = vunpack.c.l.b16 %v2145
        %v2286 = vunpack.c.h.b16 %v2145
        %v2287 = vunpack.c.l.b16 %v2146
        %v2288 = vunpack.c.h.b16 %v2146
        %v2289 = vunpack.c.l.b16 %v2147
        %v2290 = vunpack.c.h.b16 %v2147
        %v2291 = vunpack.c.l.b16 %v2148
        %v2292 = vunpack.c.h.b16 %v2148
        %v2293 = vunpack.c.l.b16 %v2149
        %v2294 = vunpack.c.h.b16 %v2149
        %v2295 = vunpack.c.l.b16 %v2150
        %v2296 = vunpack.c.h.b16 %v2150
        %v2297 = vunpack.c.l.b16 %v2151
        %v2298 = vunpack.c.h.b16 %v2151
        %v2299 = vunpack.c.l.b16 %v2152
        %v2300 = vunpack.c.h.b16 %v2152
        %v2301 = vunpack.c.l.b16 %v2153
        %v2302 = vunpack.c.h.b16 %v2153
        %v2303 = vunpack.c.l.b16 %v2154
        %v2304 = vunpack.c.h.b16 %v2154
        %v2305 = vunpack.c.l.b16 %v2155
        %v2306 = vunpack.c.h.b16 %v2155
        %v2307 = vunpack.c.l.b16 %v2156
        %v2308 = vunpack.c.h.b16 %v2156
        %v2309 = vunpack.c.l.b16 %v2157
        %v2310 = vunpack.c.h.b16 %v2157
        %v2311 = vunpack.c.l.b16 %v2158
        %v2312 = vunpack.c.h.b16 %v2158
        %v2313 = vunpack.c.l.b16 %v2159
        %v2314 = vunpack.c.h.b16 %v2159
        %v2315 = vunpack.c.l.b16 %v2160
        %v2316 = vunpack.c.h.b16 %v2160
        %v2317 = vunpack.c.l.b16 %v2161
        %v2318 = vunpack.c.h.b16 %v2161
        %v2319 = vunpack.c.l.b16 %v2162
        %v2320 = vunpack.c.h.b16 %v2162
        %v2321 = vunpack.c.l.b16 %v2163
        %v2322 = vunpack.c.h.b16 %v2163
        %v2323 = vunpack.c.l.b16 %v2164
        %v2324 = vunpack.c.h.b16 %v2164
        %v2325 = vunpack.c.l.b16 %v2165
        %v2326 = vunpack.c.h.b16 %v2165
        %v2327 = vunpack.c.l.b16 %v2166
        %v2328 = vunpack.c.h.b16 %v2166
        %v2329 = vunpack.c.l.b16 %v2167
        %v2330 = vunpack.c.h.b16 %v2167
        %v2331 = vunpack.c.l.b16 %v2168
        %v2332 = vunpack.c.h.b16 %v2168
        %v2333 = vunpack.c.l.b16 %v2169
        %v2334 = vunpack.c.h.b16 %v2169
        %v2335 = vunpack.c.l.b16 %v2170
        %v2336 = vunpack.c.h.b16 %v2170
        %v2337 = vunpack.c.l.b16 %v2171
        %v2338 = vunpack.c.h.b16 %v2171
        %v2339 = vunpack.c.l.b16 %v2172
        %v2340 = vunpack.c.h.b16 %v2172
        %v2341 = vunpack.c.l.b16 %v2173
        %v2342 = vunpack.c.h.b16 %v2173
        %v2343 = vunpack.c.l.b16 %v2174
        %v2344 = vunpack.c.h.b16 %v2174
        %v2345 = vunpack.c.l.b16 %v2175
        %v2346 = vunpack.c.h.b16 %v2175
        %v2347 = vunpack.c.l.b16 %v2176
        %v2348 = vunpack.c.h.b16 %v2176
        %v2349 = vunpack.c.l.b16 %v2177
        %v2350 = vunpack.c.h.b16 %v2177
        %v2351 = vunpack.c.l.b16 %v2178
        %v2352 = vunpack.c.h.b16 %v2178
        %v2353 = vunpack.c.l.b16 %v2179
        %v2354 = vunpack.c.h.b16 %v2179
        %v2355 = vunpack.c.l.b16 %v2180
        %v2356 = vunpack.c.h.b16 %v2180
        %v2357 = vunpack.c.l.b16 %v2181
        %v2358 = vunpack.c.h.b16 %v2181
        %v2359 = vunpack.c.l.b16 %v2182
        %v2360 = vunpack.c.h.b16 %v2182
        %v2361 = vunpack.c.l.b16 %v2183
        %v2362 = vunpack.c.h.b16 %v2183
        %v2363 = vunpack.c.l.b16 %v2184
        %v2364 = vunpack.c.h.b16 %v2184
        %v2365 = vunpack.c.l.b16 %v2185
        %v2366 = vunpack.c.h.b16 %v2185
        %v2367 = vunpack.c.l.b16 %v2186
        %v2368 = vunpack.c.h.b16 %v2186
        %v2369 = vunpack.c.l.b16 %v2187
        %v2370 = vunpack.c.h.b16 %v2187
        %v2371 = vunpack.c.l.b16 %v2188
        %v2372 = vunpack.c.h.b16 %v2188
        %v2373 = vunpack.c.l.b16 %v2189
        %v2374 = vunpack.c.h.b16 %v2189
        %v2375 = vunpack.c.l.b16 %v2190
        %v2376 = vunpack.c.h.b16 %v2190
        %v2377 = vunpack.c.l.b16 %v2191
        %v2378 = vunpack.c.h.b16 %v2191
        %v2379 = vunpack.c.l.b16 %v2192
        %v2380 = vunpack.c.h.b16 %v2192
        %v2381 = vunpack.c.l.b16 %v2193
        %v2382 = vunpack.c.h.b16 %v2193
        %v2383 = vunpack.c.l.b16 %v2194
        %v2384 = vunpack.c.h.b16 %v2194
        %v2385 = vunpack.c.l.b16 %v2195
        %v2386 = vunpack.c.h.b16 %v2195
        %v2387 = vunpack.c.l.b16 %v2196
        %v2388 = vunpack.c.h.b16 %v2196
        %v2389 = vunpack.c.l.b16 %v2197
        %v2390 = vunpack.c.h.b16 %v2197
        %v2391 = vunpack.c.l.b16 %v2198
        %v2392 = vunpack.c.h.b16 %v2198
        %v2393 = vunpack.c.l.b16 %v2199
        %v2394 = vunpack.c.h.b16 %v2199
        %v2395 = vunpack.c.l.b16 %v2200
        %v2396 = vunpack.c.h.b16 %v2200
        %v2397 = vunpack.c.l.b16 %v2201
        %v2398 = vunpack.c.h.b16 %v2201
        %v2399 = vunpack.c.l.b16 %v2202
        %v2400 = vunpack.c.h.b16 %v2202
        %v2401 = vunpack.c.l.b16 %v2203
        %v2402 = vunpack.c.h.b16 %v2203
        %v2403 = vunpack.c.l.b16 %v2204
        %v2404 = vunpack.c.h.b16 %v2204
        %v2405 = vunpack.c.l.b16 %v2205
        %v2406 = vunpack.c.h.b16 %v2205
        %v2407 = vunpack.c.l.b16 %v2206
        %v2408 = vunpack.c.h.b16 %v2206
        %v2409 = vunpack.c.l.b16 %v2207
        %v2410 = vunpack.c.h.b16 %v2207
        %v2411 = vunpack.c.l.b16 %v2208
        %v2412 = vunpack.c.h.b16 %v2208
        %v2413 = vpack.c.b16 %v2287, %v2285
        %v2414 = vpack.c.b16 %v2288, %v2286
        %v2415 = vpack.c.b16 %v2291, %v2289
        %v2416 = vpack.c.b16 %v2292, %v2290
        %v2417 = vpack.c.b16 %v2295, %v2293
        %v2418 = vpack.c.b16 %v2296, %v2294
        %v2419 = vpack.c.b16 %v2299, %v2297
        %v2420 = vpack.c.b16 %v2300, %v2298
        %v2421 = vpack.c.b16 %v2303, %v2301
        %v2422 = vpack.c.b16 %v2304, %v2302
        %v2423 = vpack.c.b16 %v2307, %v2305
        %v2424 = vpack.c.b16 %v2308, %v2306
        %v2425 = vpack.c.b16 %v2311, %v2309
        %v2426 = vpack.c.b16 %v2312, %v2310
        %v2427 = vpack.c.b16 %v2315, %v2313
        %v2428 = vpack.c.b16 %v2316, %v2314
        %v2429 = vpack.c.b16 %v2319, %v2317
        %v2430 = vpack.c.b16 %v2320, %v2318
        %v2431 = vpack.c.b16 %v2323, %v2321
        %v2432 = vpack.c.b16 %v2324, %v2322
        %v2433 = vpack.c.b16 %v2327, %v2325
        %v2434 = vpack.c.b16 %v2328, %v2326
        %v2435 = vpack.c.b16 %v2331, %v2329
        %v2436 = vpack.c.b16 %v2332, %v2330
        %v2437 = vpack.c.b16 %v2335, %v2333
        %v2438 = vpack.c.b16 %v2336, %v2334
        %v2439 = vpack.c.b16 %v2339, %v2337
        %v2440 = vpack.c.b16 %v2340, %v2338
        %v2441 = vpack.c.b16 %v2343, %v2341
        %v2442 = vpack.c.b16 %v2344, %v2342
        %v2443 = vpack.c.b16 %v2347, %v2345
        %v2444 = vpack.c.b16 %v2348, %v2346
        %v2445 = vpack.c.b16 %v2351, %v2349
        %v2446 = vpack.c.b16 %v2352, %v2350
        %v2447 = vpack.c.b16 %v2355, %v2353
        %v2448 = vpack.c.b16 %v2356, %v2354
        %v2449 = vpack.c.b16 %v2359, %v2357
        %v2450 = vpack.c.b16 %v2360, %v2358
        %v2451 = vpack.c.b16 %v2363, %v2361
        %v2452 = vpack.c.b16 %v2364, %v2362
        %v2453 = vpack.c.b16 %v2367, %v2365
        %v2454 = vpack.c.b16 %v2368, %v2366
        %v2455 = vpack.c.b16 %v2371, %v2369
        %v2456 = vpack.c.b16 %v2372, %v2370
        %v2457 = vpack.c.b16 %v2375, %v2373
        %v2458 = vpack.c.b16 %v2376, %v2374
        %v2459 = vpack.c.b16 %v2379, %v2377
        %v2460 = vpack.c.b16 %v2380, %v2378
        %v2461 = vpack.c.b16 %v2383, %v2381
        %v2462 = vpack.c.b16 %v2384, %v2382
        %v2463 = vpack.c.b16 %v2387, %v2385
        %v2464 = vpack.c.b16 %v2388, %v2386
        %v2465 = vpack.c.b16 %v2391, %v2389
        %v2466 = vpack.c.b16 %v2392, %v2390
        %v2467 = vpack.c.b16 %v2395, %v2393
        %v2468 = vpack.c.b16 %v2396, %v2394
        %v2469 = vpack.c.b16 %v2399, %v2397
        %v2470 = vpack.c.b16 %v2400, %v2398
        %v2471 = vpack.c.b16 %v2403, %v2401
        %v2472 = vpack.c.b16 %v2404, %v2402
        %v2473 = vpack.c.b16 %v2407, %v2405
        %v2474 = vpack.c.b16 %v2408, %v2406
        %v2475 = vpack.c.b16 %v2411, %v2409
        %v2476 = vpack.c.b16 %v2412, %v2410
        %2541 = vmatprep.subr.bf16.mxu0 %v2414
        %2542 = vmatpush1.bf16.msra.mxu0 %v2413
        %2543 = vmatprep.subr.bf16.mxu0 %v2416
        %2544 = vmatpush1.bf16.msra.mxu0 %v2415
        %2545 = vmatprep.subr.bf16.mxu0 %v2418
        %2546 = vmatpush1.bf16.msra.mxu0 %v2417
        %2547 = vmatprep.subr.bf16.mxu0 %v2420
        %2548 = vmatpush1.bf16.msra.mxu0 %v2419
        %2549 = vmatprep.subr.bf16.mxu0 %v2422
        %2550 = vmatpush1.bf16.msra.mxu0 %v2421
        %2551 = vmatprep.subr.bf16.mxu0 %v2424
        %2552 = vmatpush1.bf16.msra.mxu0 %v2423
        %2553 = vmatprep.subr.bf16.mxu0 %v2426
        %2554 = vmatpush1.bf16.msra.mxu0 %v2425
        %2555 = vmatprep.subr.bf16.mxu0 %v2428
        %2556 = vmatpush1.bf16.msra.mxu0 %v2427
        %2557 = vmatprep.subr.bf16.mxu0 %v2430
        %2558 = vmatpush1.bf16.msra.mxu0 %v2429
        %2559 = vmatprep.subr.bf16.mxu0 %v2432
        %2560 = vmatpush1.bf16.msra.mxu0 %v2431
        %2561 = vmatprep.subr.bf16.mxu0 %v2434
        %2562 = vmatpush1.bf16.msra.mxu0 %v2433
        %2563 = vmatprep.subr.bf16.mxu0 %v2436
        %2564 = vmatpush1.bf16.msra.mxu0 %v2435
        %2565 = vmatprep.subr.bf16.mxu0 %v2438
        %2566 = vmatpush1.bf16.msra.mxu0 %v2437
        %2567 = vmatprep.subr.bf16.mxu0 %v2440
        %2568 = vmatpush1.bf16.msra.mxu0 %v2439
        %2569 = vmatprep.subr.bf16.mxu0 %v2442
        %2570 = vmatpush1.bf16.msra.mxu0 %v2441
        %2571 = vmatprep.subr.bf16.mxu0 %v2444
        %2572 = vmatpush1.bf16.msra.mxu0 %v2443
        %2573 = vmatprep.mubr.bf16.mxu0 %v1104
        %2574 = vmatmul.mubr.bf16.gmra.mrb[0].mxu0 %v713
        %v2575 = vpop.f32.mrb[0].mxu0
        %v2576 = vadd.f32 %v2214, %v2575
        %v2577 = vpop.f32.mrb[0].mxu0
        %v2578 = vadd.f32 %v2218, %v2577
        %v2579 = vpop.f32.mrb[0].mxu0
        %v2580 = vadd.f32 %v2214, %v2579
        %v2581 = vpop.f32.mrb[0].mxu0
        %v2582 = vadd.f32 %v2218, %v2581
        %2583 = vdwg.mxu0
        %2584 = vmatprep.subr.bf16.mxu0 %v2446
        %2585 = vmatpush1.bf16.msra.mxu0 %v2445
        %2586 = vmatprep.subr.bf16.mxu0 %v2448
        %2587 = vmatpush1.bf16.msra.mxu0 %v2447
        %2588 = vmatprep.subr.bf16.mxu0 %v2450
        %2589 = vmatpush1.bf16.msra.mxu0 %v2449
        %2590 = vmatprep.subr.bf16.mxu0 %v2452
        %2591 = vmatpush1.bf16.msra.mxu0 %v2451
        %2592 = vmatprep.subr.bf16.mxu0 %v2454
        %2593 = vmatpush1.bf16.msra.mxu0 %v2453
        %2594 = vmatprep.subr.bf16.mxu0 %v2456
        %2595 = vmatpush1.bf16.msra.mxu0 %v2455
        %2596 = vmatprep.subr.bf16.mxu0 %v2458
        %2597 = vmatpush1.bf16.msra.mxu0 %v2457
        %2598 = vmatprep.subr.bf16.mxu0 %v2460
        %2599 = vmatpush1.bf16.msra.mxu0 %v2459
        %2600 = vmatprep.subr.bf16.mxu0 %v2462
        %2601 = vmatpush1.bf16.msra.mxu0 %v2461
        %2602 = vmatprep.subr.bf16.mxu0 %v2464
        %2603 = vmatpush1.bf16.msra.mxu0 %v2463
        %2604 = vmatprep.subr.bf16.mxu0 %v2466
        %2605 = vmatpush1.bf16.msra.mxu0 %v2465
        %2606 = vmatprep.subr.bf16.mxu0 %v2468
        %2607 = vmatpush1.bf16.msra.mxu0 %v2467
        %2608 = vmatprep.subr.bf16.mxu0 %v2470
        %2609 = vmatpush1.bf16.msra.mxu0 %v2469
        %2610 = vmatprep.subr.bf16.mxu0 %v2472
        %2611 = vmatpush1.bf16.msra.mxu0 %v2471
        %2612 = vmatprep.subr.bf16.mxu0 %v2474
        %2613 = vmatpush1.bf16.msra.mxu0 %v2473
        %2614 = vmatprep.subr.bf16.mxu0 %v2476
        %2615 = vmatpush1.bf16.msra.mxu0 %v2475
        %2616 = vmatprep.mubr.bf16.mxu0 %v1496
        %2617 = vmatmul.mubr.bf16.gmra.mrb[0].mxu0 %v1105
        %v2618 = vpop.f32.mrb[0].mxu0
        %v2619 = vadd.f32 %v2576, %v2618
        %v2620 = vpop.f32.mrb[0].mxu0
        %v2621 = vadd.f32 %v2578, %v2620
        %v2622 = vpop.f32.mrb[0].mxu0
        %v2623 = vadd.f32 %v2580, %v2622
        %v2624 = vpop.f32.mrb[0].mxu0
        %v2625 = vadd.f32 %v2582, %v2624
        %2626 = vdwg.mxu0
        %v2627 = vmax.f32 %v2619, 0.0
        %v2628 = vmax.f32 %v2621, 0.0
        %v2629 = vmax.f32 %v2623, 0.0
        %v2630 = vmax.f32 %v2625, 0.0
        %v2631 = vadd.f32 %v2143, %v2627
        %v2632 = vadd.f32 %v2144, %v2629
        %v2633 = vadd.f32 %v2631, %v2628
        %v2634 = vadd.f32 %v2632, %v2630
        %v2635 = vld [vmem:[#allocation9 + $0x610] sm:$0xff]
        %v2636 = vld [vmem:[#allocation9 + $0x630] sm:$0xff]
        %v2637 = vld [vmem:[#allocation9 + $0x650] sm:$0xff]
        %v2638 = vld [vmem:[#allocation9 + $0x670] sm:$0xff]
        %v2639 = vld [vmem:[#allocation9 + $0x690] sm:$0xff]
        %v2640 = vld [vmem:[#allocation9 + $0x6b0] sm:$0xff]
        %v2641 = vld [vmem:[#allocation9 + $0x6d0] sm:$0xff]
        %v2642 = vld [vmem:[#allocation9 + $0x6f0] sm:$0xff]
        %v2643 = vld [vmem:[#allocation9 + $0x710] sm:$0xff]
        %v2644 = vld [vmem:[#allocation9 + $0x730] sm:$0xff]
        %v2645 = vld [vmem:[#allocation9 + $0x750] sm:$0xff]
        %v2646 = vld [vmem:[#allocation9 + $0x770] sm:$0xff]
        %v2647 = vld [vmem:[#allocation9 + $0x790] sm:$0xff]
        %v2648 = vld [vmem:[#allocation9 + $0x7b0] sm:$0xff]
        %v2649 = vld [vmem:[#allocation9 + $0x7d0] sm:$0xff]
        %v2650 = vld [vmem:[#allocation9 + $0x7f0] sm:$0xff]
        %v2651 = vld [vmem:[#allocation9 + $0x810] sm:$0xff]
        %v2652 = vld [vmem:[#allocation9 + $0x830] sm:$0xff]
        %v2653 = vld [vmem:[#allocation9 + $0x850] sm:$0xff]
        %v2654 = vld [vmem:[#allocation9 + $0x870] sm:$0xff]
        %v2655 = vld [vmem:[#allocation9 + $0x890] sm:$0xff]
        %v2656 = vld [vmem:[#allocation9 + $0x8b0] sm:$0xff]
        %v2657 = vld [vmem:[#allocation9 + $0x8d0] sm:$0xff]
        %v2658 = vld [vmem:[#allocation9 + $0x8f0] sm:$0xff]
        %v2659 = vld [vmem:[#allocation9 + $0x910] sm:$0xff]
        %v2660 = vld [vmem:[#allocation9 + $0x930] sm:$0xff]
        %v2661 = vld [vmem:[#allocation9 + $0x950] sm:$0xff]
        %v2662 = vld [vmem:[#allocation9 + $0x970] sm:$0xff]
        %v2663 = vld [vmem:[#allocation9 + $0x990] sm:$0xff]
        %v2664 = vld [vmem:[#allocation9 + $0x9b0] sm:$0xff]
        %v2665 = vld [vmem:[#allocation9 + $0x9d0] sm:$0xff]
        %v2666 = vld [vmem:[#allocation9 + $0x9f0] sm:$0xff]
        %v2667 = vld [vmem:[#allocation9 + $0xa10] sm:$0xff]
        %v2668 = vld [vmem:[#allocation9 + $0xa30] sm:$0xff]
        %v2669 = vld [vmem:[#allocation9 + $0xa50] sm:$0xff]
        %v2670 = vld [vmem:[#allocation9 + $0xa70] sm:$0xff]
        %v2671 = vld [vmem:[#allocation9 + $0xa90] sm:$0xff]
        %v2672 = vld [vmem:[#allocation9 + $0xab0] sm:$0xff]
        %v2673 = vld [vmem:[#allocation9 + $0xad0] sm:$0xff]
        %v2674 = vld [vmem:[#allocation9 + $0xaf0] sm:$0xff]
        %v2675 = vld [vmem:[#allocation9 + $0xb10] sm:$0xff]
        %v2676 = vld [vmem:[#allocation9 + $0xb30] sm:$0xff]
        %v2677 = vld [vmem:[#allocation9 + $0xb50] sm:$0xff]
        %v2678 = vld [vmem:[#allocation9 + $0xb70] sm:$0xff]
        %v2679 = vld [vmem:[#allocation9 + $0xb90] sm:$0xff]
        %v2680 = vld [vmem:[#allocation9 + $0xbb0] sm:$0xff]
        %v2681 = vld [vmem:[#allocation9 + $0xbd0] sm:$0xff]
        %v2682 = vld [vmem:[#allocation9 + $0xbf0] sm:$0xff]
        %v2683 = vld [vmem:[#allocation9 + $0xc10] sm:$0xff]
        %v2684 = vld [vmem:[#allocation9 + $0xc30] sm:$0xff]
        %v2685 = vld [vmem:[#allocation9 + $0xc50] sm:$0xff]
        %v2686 = vld [vmem:[#allocation9 + $0xc70] sm:$0xff]
        %v2687 = vld [vmem:[#allocation9 + $0xc90] sm:$0xff]
        %v2688 = vld [vmem:[#allocation9 + $0xcb0] sm:$0xff]
        %v2689 = vld [vmem:[#allocation9 + $0xcd0] sm:$0xff]
        %v2690 = vld [vmem:[#allocation9 + $0xcf0] sm:$0xff]
        %v2691 = vld [vmem:[#allocation9 + $0xd10] sm:$0xff]
        %v2692 = vld [vmem:[#allocation9 + $0xd30] sm:$0xff]
        %v2693 = vld [vmem:[#allocation9 + $0xd50] sm:$0xff]
        %v2694 = vld [vmem:[#allocation9 + $0xd70] sm:$0xff]
        %v2695 = vld [vmem:[#allocation9 + $0xd90] sm:$0xff]
        %v2696 = vld [vmem:[#allocation9 + $0xdb0] sm:$0xff]
        %v2697 = vld [vmem:[#allocation9 + $0xdd0] sm:$0xff]
        %v2698 = vld [vmem:[#allocation9 + $0xdf0] sm:$0xff]
        %v2699 = vld [vmem:[#allocation11 + $0x4] sm:$0x3]
        %v2701 = vlaneseq
        %v2702 = vshrl.u32 %v2701, 7
        %v2703 = vsub.s32 0, %v2702
        %v2704 = vrot.slane %v2699, %v2703
        %v2705 = vlaneseq
        %v2706 = vshrl.u32 %v2705, 7
        %v2707 = vsub.s32 1, %v2706
        %v2708 = vrot.slane %v2699, %v2707
        %v2775 = vunpack.c.l.b16 %v2635
        %v2776 = vunpack.c.h.b16 %v2635
        %v2777 = vunpack.c.l.b16 %v2636
        %v2778 = vunpack.c.h.b16 %v2636
        %v2779 = vunpack.c.l.b16 %v2637
        %v2780 = vunpack.c.h.b16 %v2637
        %v2781 = vunpack.c.l.b16 %v2638
        %v2782 = vunpack.c.h.b16 %v2638
        %v2783 = vunpack.c.l.b16 %v2639
        %v2784 = vunpack.c.h.b16 %v2639
        %v2785 = vunpack.c.l.b16 %v2640
        %v2786 = vunpack.c.h.b16 %v2640
        %v2787 = vunpack.c.l.b16 %v2641
        %v2788 = vunpack.c.h.b16 %v2641
        %v2789 = vunpack.c.l.b16 %v2642
        %v2790 = vunpack.c.h.b16 %v2642
        %v2791 = vunpack.c.l.b16 %v2643
        %v2792 = vunpack.c.h.b16 %v2643
        %v2793 = vunpack.c.l.b16 %v2644
        %v2794 = vunpack.c.h.b16 %v2644
        %v2795 = vunpack.c.l.b16 %v2645
        %v2796 = vunpack.c.h.b16 %v2645
        %v2797 = vunpack.c.l.b16 %v2646
        %v2798 = vunpack.c.h.b16 %v2646
        %v2799 = vunpack.c.l.b16 %v2647
        %v2800 = vunpack.c.h.b16 %v2647
        %v2801 = vunpack.c.l.b16 %v2648
        %v2802 = vunpack.c.h.b16 %v2648
        %v2803 = vunpack.c.l.b16 %v2649
        %v2804 = vunpack.c.h.b16 %v2649
        %v2805 = vunpack.c.l.b16 %v2650
        %v2806 = vunpack.c.h.b16 %v2650
        %v2807 = vunpack.c.l.b16 %v2651
        %v2808 = vunpack.c.h.b16 %v2651
        %v2809 = vunpack.c.l.b16 %v2652
        %v2810 = vunpack.c.h.b16 %v2652
        %v2811 = vunpack.c.l.b16 %v2653
        %v2812 = vunpack.c.h.b16 %v2653
        %v2813 = vunpack.c.l.b16 %v2654
        %v2814 = vunpack.c.h.b16 %v2654
        %v2815 = vunpack.c.l.b16 %v2655
        %v2816 = vunpack.c.h.b16 %v2655
        %v2817 = vunpack.c.l.b16 %v2656
        %v2818 = vunpack.c.h.b16 %v2656
        %v2819 = vunpack.c.l.b16 %v2657
        %v2820 = vunpack.c.h.b16 %v2657
        %v2821 = vunpack.c.l.b16 %v2658
        %v2822 = vunpack.c.h.b16 %v2658
        %v2823 = vunpack.c.l.b16 %v2659
        %v2824 = vunpack.c.h.b16 %v2659
        %v2825 = vunpack.c.l.b16 %v2660
        %v2826 = vunpack.c.h.b16 %v2660
        %v2827 = vunpack.c.l.b16 %v2661
        %v2828 = vunpack.c.h.b16 %v2661
        %v2829 = vunpack.c.l.b16 %v2662
        %v2830 = vunpack.c.h.b16 %v2662
        %v2831 = vunpack.c.l.b16 %v2663
        %v2832 = vunpack.c.h.b16 %v2663
        %v2833 = vunpack.c.l.b16 %v2664
        %v2834 = vunpack.c.h.b16 %v2664
        %v2835 = vunpack.c.l.b16 %v2665
        %v2836 = vunpack.c.h.b16 %v2665
        %v2837 = vunpack.c.l.b16 %v2666
        %v2838 = vunpack.c.h.b16 %v2666
        %v2839 = vunpack.c.l.b16 %v2667
        %v2840 = vunpack.c.h.b16 %v2667
        %v2841 = vunpack.c.l.b16 %v2668
        %v2842 = vunpack.c.h.b16 %v2668
        %v2843 = vunpack.c.l.b16 %v2669
        %v2844 = vunpack.c.h.b16 %v2669
        %v2845 = vunpack.c.l.b16 %v2670
        %v2846 = vunpack.c.h.b16 %v2670
        %v2847 = vunpack.c.l.b16 %v2671
        %v2848 = vunpack.c.h.b16 %v2671
        %v2849 = vunpack.c.l.b16 %v2672
        %v2850 = vunpack.c.h.b16 %v2672
        %v2851 = vunpack.c.l.b16 %v2673
        %v2852 = vunpack.c.h.b16 %v2673
        %v2853 = vunpack.c.l.b16 %v2674
        %v2854 = vunpack.c.h.b16 %v2674
        %v2855 = vunpack.c.l.b16 %v2675
        %v2856 = vunpack.c.h.b16 %v2675
        %v2857 = vunpack.c.l.b16 %v2676
        %v2858 = vunpack.c.h.b16 %v2676
        %v2859 = vunpack.c.l.b16 %v2677
        %v2860 = vunpack.c.h.b16 %v2677
        %v2861 = vunpack.c.l.b16 %v2678
        %v2862 = vunpack.c.h.b16 %v2678
        %v2863 = vunpack.c.l.b16 %v2679
        %v2864 = vunpack.c.h.b16 %v2679
        %v2865 = vunpack.c.l.b16 %v2680
        %v2866 = vunpack.c.h.b16 %v2680
        %v2867 = vunpack.c.l.b16 %v2681
        %v2868 = vunpack.c.h.b16 %v2681
        %v2869 = vunpack.c.l.b16 %v2682
        %v2870 = vunpack.c.h.b16 %v2682
        %v2871 = vunpack.c.l.b16 %v2683
        %v2872 = vunpack.c.h.b16 %v2683
        %v2873 = vunpack.c.l.b16 %v2684
        %v2874 = vunpack.c.h.b16 %v2684
        %v2875 = vunpack.c.l.b16 %v2685
        %v2876 = vunpack.c.h.b16 %v2685
        %v2877 = vunpack.c.l.b16 %v2686
        %v2878 = vunpack.c.h.b16 %v2686
        %v2879 = vunpack.c.l.b16 %v2687
        %v2880 = vunpack.c.h.b16 %v2687
        %v2881 = vunpack.c.l.b16 %v2688
        %v2882 = vunpack.c.h.b16 %v2688
        %v2883 = vunpack.c.l.b16 %v2689
        %v2884 = vunpack.c.h.b16 %v2689
        %v2885 = vunpack.c.l.b16 %v2690
        %v2886 = vunpack.c.h.b16 %v2690
        %v2887 = vunpack.c.l.b16 %v2691
        %v2888 = vunpack.c.h.b16 %v2691
        %v2889 = vunpack.c.l.b16 %v2692
        %v2890 = vunpack.c.h.b16 %v2692
        %v2891 = vunpack.c.l.b16 %v2693
        %v2892 = vunpack.c.h.b16 %v2693
        %v2893 = vunpack.c.l.b16 %v2694
        %v2894 = vunpack.c.h.b16 %v2694
        %v2895 = vunpack.c.l.b16 %v2695
        %v2896 = vunpack.c.h.b16 %v2695
        %v2897 = vunpack.c.l.b16 %v2696
        %v2898 = vunpack.c.h.b16 %v2696
        %v2899 = vunpack.c.l.b16 %v2697
        %v2900 = vunpack.c.h.b16 %v2697
        %v2901 = vunpack.c.l.b16 %v2698
        %v2902 = vunpack.c.h.b16 %v2698
        %v2903 = vpack.c.b16 %v2777, %v2775
        %v2904 = vpack.c.b16 %v2778, %v2776
        %v2905 = vpack.c.b16 %v2781, %v2779
        %v2906 = vpack.c.b16 %v2782, %v2780
        %v2907 = vpack.c.b16 %v2785, %v2783
        %v2908 = vpack.c.b16 %v2786, %v2784
        %v2909 = vpack.c.b16 %v2789, %v2787
        %v2910 = vpack.c.b16 %v2790, %v2788
        %v2911 = vpack.c.b16 %v2793, %v2791
        %v2912 = vpack.c.b16 %v2794, %v2792
        %v2913 = vpack.c.b16 %v2797, %v2795
        %v2914 = vpack.c.b16 %v2798, %v2796
        %v2915 = vpack.c.b16 %v2801, %v2799
        %v2916 = vpack.c.b16 %v2802, %v2800
        %v2917 = vpack.c.b16 %v2805, %v2803
        %v2918 = vpack.c.b16 %v2806, %v2804
        %v2919 = vpack.c.b16 %v2809, %v2807
        %v2920 = vpack.c.b16 %v2810, %v2808
        %v2921 = vpack.c.b16 %v2813, %v2811
        %v2922 = vpack.c.b16 %v2814, %v2812
        %v2923 = vpack.c.b16 %v2817, %v2815
        %v2924 = vpack.c.b16 %v2818, %v2816
        %v2925 = vpack.c.b16 %v2821, %v2819
        %v2926 = vpack.c.b16 %v2822, %v2820
        %v2927 = vpack.c.b16 %v2825, %v2823
        %v2928 = vpack.c.b16 %v2826, %v2824
        %v2929 = vpack.c.b16 %v2829, %v2827
        %v2930 = vpack.c.b16 %v2830, %v2828
        %v2931 = vpack.c.b16 %v2833, %v2831
        %v2932 = vpack.c.b16 %v2834, %v2832
        %v2933 = vpack.c.b16 %v2837, %v2835
        %v2934 = vpack.c.b16 %v2838, %v2836
        %v2935 = vpack.c.b16 %v2841, %v2839
        %v2936 = vpack.c.b16 %v2842, %v2840
        %v2937 = vpack.c.b16 %v2845, %v2843
        %v2938 = vpack.c.b16 %v2846, %v2844
        %v2939 = vpack.c.b16 %v2849, %v2847
        %v2940 = vpack.c.b16 %v2850, %v2848
        %v2941 = vpack.c.b16 %v2853, %v2851
        %v2942 = vpack.c.b16 %v2854, %v2852
        %v2943 = vpack.c.b16 %v2857, %v2855
        %v2944 = vpack.c.b16 %v2858, %v2856
        %v2945 = vpack.c.b16 %v2861, %v2859
        %v2946 = vpack.c.b16 %v2862, %v2860
        %v2947 = vpack.c.b16 %v2865, %v2863
        %v2948 = vpack.c.b16 %v2866, %v2864
        %v2949 = vpack.c.b16 %v2869, %v2867
        %v2950 = vpack.c.b16 %v2870, %v2868
        %v2951 = vpack.c.b16 %v2873, %v2871
        %v2952 = vpack.c.b16 %v2874, %v2872
        %v2953 = vpack.c.b16 %v2877, %v2875
        %v2954 = vpack.c.b16 %v2878, %v2876
        %v2955 = vpack.c.b16 %v2881, %v2879
        %v2956 = vpack.c.b16 %v2882, %v2880
        %v2957 = vpack.c.b16 %v2885, %v2883
        %v2958 = vpack.c.b16 %v2886, %v2884
        %v2959 = vpack.c.b16 %v2889, %v2887
        %v2960 = vpack.c.b16 %v2890, %v2888
        %v2961 = vpack.c.b16 %v2893, %v2891
        %v2962 = vpack.c.b16 %v2894, %v2892
        %v2963 = vpack.c.b16 %v2897, %v2895
        %v2964 = vpack.c.b16 %v2898, %v2896
        %v2965 = vpack.c.b16 %v2901, %v2899
        %v2966 = vpack.c.b16 %v2902, %v2900
        %3031 = vmatprep.subr.bf16.mxu0 %v2904
        %3032 = vmatpush1.bf16.msra.mxu0 %v2903
        %3033 = vmatprep.subr.bf16.mxu0 %v2906
        %3034 = vmatpush1.bf16.msra.mxu0 %v2905
        %3035 = vmatprep.subr.bf16.mxu0 %v2908
        %3036 = vmatpush1.bf16.msra.mxu0 %v2907
        %3037 = vmatprep.subr.bf16.mxu0 %v2910
        %3038 = vmatpush1.bf16.msra.mxu0 %v2909
        %3039 = vmatprep.subr.bf16.mxu0 %v2912
        %3040 = vmatpush1.bf16.msra.mxu0 %v2911
        %3041 = vmatprep.subr.bf16.mxu0 %v2914
        %3042 = vmatpush1.bf16.msra.mxu0 %v2913
        %3043 = vmatprep.subr.bf16.mxu0 %v2916
        %3044 = vmatpush1.bf16.msra.mxu0 %v2915
        %3045 = vmatprep.subr.bf16.mxu0 %v2918
        %3046 = vmatpush1.bf16.msra.mxu0 %v2917
        %3047 = vmatprep.subr.bf16.mxu0 %v2920
        %3048 = vmatpush1.bf16.msra.mxu0 %v2919
        %3049 = vmatprep.subr.bf16.mxu0 %v2922
        %3050 = vmatpush1.bf16.msra.mxu0 %v2921
        %3051 = vmatprep.subr.bf16.mxu0 %v2924
        %3052 = vmatpush1.bf16.msra.mxu0 %v2923
        %3053 = vmatprep.subr.bf16.mxu0 %v2926
        %3054 = vmatpush1.bf16.msra.mxu0 %v2925
        %3055 = vmatprep.subr.bf16.mxu0 %v2928
        %3056 = vmatpush1.bf16.msra.mxu0 %v2927
        %3057 = vmatprep.subr.bf16.mxu0 %v2930
        %3058 = vmatpush1.bf16.msra.mxu0 %v2929
        %3059 = vmatprep.subr.bf16.mxu0 %v2932
        %3060 = vmatpush1.bf16.msra.mxu0 %v2931
        %3061 = vmatprep.subr.bf16.mxu0 %v2934
        %3062 = vmatpush1.bf16.msra.mxu0 %v2933
        %3063 = vmatprep.mubr.bf16.mxu0 %v1496
        %3064 = vmatmul.mubr.bf16.gmra.mrb[0].mxu0 %v1105
        %v3065 = vpop.f32.mrb[0].mxu0
        %v3066 = vadd.f32 %v2704, %v3065
        %v3067 = vpop.f32.mrb[0].mxu0
        %v3068 = vadd.f32 %v2708, %v3067
        %v3069 = vpop.f32.mrb[0].mxu0
        %v3070 = vadd.f32 %v2704, %v3069
        %v3071 = vpop.f32.mrb[0].mxu0
        %v3072 = vadd.f32 %v2708, %v3071
        %3073 = vdwg.mxu0
        %3074 = vmatprep.subr.bf16.mxu0 %v2936
        %3075 = vmatpush1.bf16.msra.mxu0 %v2935
        %3076 = vmatprep.subr.bf16.mxu0 %v2938
        %3077 = vmatpush1.bf16.msra.mxu0 %v2937
        %3078 = vmatprep.subr.bf16.mxu0 %v2940
        %3079 = vmatpush1.bf16.msra.mxu0 %v2939
        %3080 = vmatprep.subr.bf16.mxu0 %v2942
        %3081 = vmatpush1.bf16.msra.mxu0 %v2941
        %3082 = vmatprep.subr.bf16.mxu0 %v2944
        %3083 = vmatpush1.bf16.msra.mxu0 %v2943
        %3084 = vmatprep.subr.bf16.mxu0 %v2946
        %3085 = vmatpush1.bf16.msra.mxu0 %v2945
        %3086 = vmatprep.subr.bf16.mxu0 %v2948
        %3087 = vmatpush1.bf16.msra.mxu0 %v2947
        %3088 = vmatprep.subr.bf16.mxu0 %v2950
        %3089 = vmatpush1.bf16.msra.mxu0 %v2949
        %3090 = vmatprep.subr.bf16.mxu0 %v2952
        %3091 = vmatpush1.bf16.msra.mxu0 %v2951
        %3092 = vmatprep.subr.bf16.mxu0 %v2954
        %3093 = vmatpush1.bf16.msra.mxu0 %v2953
        %3094 = vmatprep.subr.bf16.mxu0 %v2956
        %3095 = vmatpush1.bf16.msra.mxu0 %v2955
        %3096 = vmatprep.subr.bf16.mxu0 %v2958
        %3097 = vmatpush1.bf16.msra.mxu0 %v2957
        %3098 = vmatprep.subr.bf16.mxu0 %v2960
        %3099 = vmatpush1.bf16.msra.mxu0 %v2959
        %3100 = vmatprep.subr.bf16.mxu0 %v2962
        %3101 = vmatpush1.bf16.msra.mxu0 %v2961
        %3102 = vmatprep.subr.bf16.mxu0 %v2964
        %3103 = vmatpush1.bf16.msra.mxu0 %v2963
        %3104 = vmatprep.subr.bf16.mxu0 %v2966
        %3105 = vmatpush1.bf16.msra.mxu0 %v2965
        %3106 = vmatprep.mubr.bf16.mxu0 %v1749
        %3107 = vmatmul.mubr.bf16.gmra.mrb[0].mxu0 %v1497
        %v3108 = vpop.f32.mrb[0].mxu0
        %v3109 = vadd.f32 %v3066, %v3108
        %v3110 = vpop.f32.mrb[0].mxu0
        %v3111 = vadd.f32 %v3068, %v3110
        %v3112 = vpop.f32.mrb[0].mxu0
        %v3113 = vadd.f32 %v3070, %v3112
        %v3114 = vpop.f32.mrb[0].mxu0
        %v3115 = vadd.f32 %v3072, %v3114
        %3116 = vdwg.mxu0
        %v3117 = vmax.f32 %v3109, 0.0
        %v3118 = vmax.f32 %v3111, 0.0
        %v3119 = vmax.f32 %v3113, 0.0
        %v3120 = vmax.f32 %v3115, 0.0
        %v3121 = vadd.f32 %v2633, %v3117
        %v3122 = vadd.f32 %v2634, %v3119
        %v3123 = vadd.f32 %v3121, %v3118
        %v3124 = vadd.f32 %v3122, %v3120
        %v3125 = vld [vmem:[#allocation9 + $0xa18] sm:$0xff]
        %v3126 = vld [vmem:[#allocation9 + $0xa38] sm:$0xff]
        %v3127 = vld [vmem:[#allocation9 + $0xa58] sm:$0xff]
        %v3128 = vld [vmem:[#allocation9 + $0xa78] sm:$0xff]
        %v3129 = vld [vmem:[#allocation9 + $0xa98] sm:$0xff]
        %v3130 = vld [vmem:[#allocation9 + $0xab8] sm:$0xff]
        %v3131 = vld [vmem:[#allocation9 + $0xad8] sm:$0xff]
        %v3132 = vld [vmem:[#allocation9 + $0xaf8] sm:$0xff]
        %v3133 = vld [vmem:[#allocation9 + $0xb18] sm:$0xff]
        %v3134 = vld [vmem:[#allocation9 + $0xb38] sm:$0xff]
        %v3135 = vld [vmem:[#allocation9 + $0xb58] sm:$0xff]
        %v3136 = vld [vmem:[#allocation9 + $0xb78] sm:$0xff]
        %v3137 = vld [vmem:[#allocation9 + $0xb98] sm:$0xff]
        %v3138 = vld [vmem:[#allocation9 + $0xbb8] sm:$0xff]
        %v3139 = vld [vmem:[#allocation9 + $0xbd8] sm:$0xff]
        %v3140 = vld [vmem:[#allocation9 + $0xbf8] sm:$0xff]
        %v3141 = vld [vmem:[#allocation9 + $0xc18] sm:$0xff]
        %v3142 = vld [vmem:[#allocation9 + $0xc38] sm:$0xff]
        %v3143 = vld [vmem:[#allocation9 + $0xc58] sm:$0xff]
        %v3144 = vld [vmem:[#allocation9 + $0xc78] sm:$0xff]
        %v3145 = vld [vmem:[#allocation9 + $0xc98] sm:$0xff]
        %v3146 = vld [vmem:[#allocation9 + $0xcb8] sm:$0xff]
        %v3147 = vld [vmem:[#allocation9 + $0xcd8] sm:$0xff]
        %v3148 = vld [vmem:[#allocation9 + $0xcf8] sm:$0xff]
        %v3149 = vld [vmem:[#allocation9 + $0xd18] sm:$0xff]
        %v3150 = vld [vmem:[#allocation9 + $0xd38] sm:$0xff]
        %v3151 = vld [vmem:[#allocation9 + $0xd58] sm:$0xff]
        %v3152 = vld [vmem:[#allocation9 + $0xd78] sm:$0xff]
        %v3153 = vld [vmem:[#allocation9 + $0xd98] sm:$0xff]
        %v3154 = vld [vmem:[#allocation9 + $0xdb8] sm:$0xff]
        %v3155 = vld [vmem:[#allocation9 + $0xdd8] sm:$0xff]
        %v3156 = vld [vmem:[#allocation9 + $0xdf8] sm:$0xff]
        %v3157 = vld [vmem:[#allocation9 + $0xe18] sm:$0xff]
        %v3158 = vld [vmem:[#allocation9 + $0xe38] sm:$0xff]
        %v3159 = vld [vmem:[#allocation9 + $0xe58] sm:$0xff]
        %v3160 = vld [vmem:[#allocation9 + $0xe78] sm:$0xff]
        %v3161 = vld [vmem:[#allocation9 + $0xe98] sm:$0xff]
        %v3162 = vld [vmem:[#allocation9 + $0xeb8] sm:$0xff]
        %v3163 = vld [vmem:[#allocation9 + $0xed8] sm:$0xff]
        %v3164 = vld [vmem:[#allocation9 + $0xef8] sm:$0xff]
        %v3165 = vld [vmem:[#allocation9 + $0xf18] sm:$0xff]
        %v3166 = vld [vmem:[#allocation9 + $0xf38] sm:$0xff]
        %v3167 = vld [vmem:[#allocation9 + $0xf58] sm:$0xff]
        %v3168 = vld [vmem:[#allocation9 + $0xf78] sm:$0xff]
        %v3169 = vld [vmem:[#allocation9 + $0xf98] sm:$0xff]
        %v3170 = vld [vmem:[#allocation9 + $0xfb8] sm:$0xff]
        %v3171 = vld [vmem:[#allocation9 + $0xfd8] sm:$0xff]
        %v3172 = vld [vmem:[#allocation9 + $0xff8] sm:$0xff]
        %v3173 = vld [vmem:[#allocation11 + $0x6] sm:$0x3]
        %v3175 = vlaneseq
        %v3176 = vshrl.u32 %v3175, 7
        %v3177 = vsub.s32 0, %v3176
        %v3178 = vrot.slane %v3173, %v3177
        %v3179 = vlaneseq
        %v3180 = vshrl.u32 %v3179, 7
        %v3181 = vsub.s32 1, %v3180
        %v3182 = vrot.slane %v3173, %v3181
        %v3233 = vunpack.c.l.b16 %v3125
        %v3234 = vunpack.c.h.b16 %v3125
        %v3235 = vunpack.c.l.b16 %v3126
        %v3236 = vunpack.c.h.b16 %v3126
        %v3237 = vunpack.c.l.b16 %v3127
        %v3238 = vunpack.c.h.b16 %v3127
        %v3239 = vunpack.c.l.b16 %v3128
        %v3240 = vunpack.c.h.b16 %v3128
        %v3241 = vunpack.c.l.b16 %v3129
        %v3242 = vunpack.c.h.b16 %v3129
        %v3243 = vunpack.c.l.b16 %v3130
        %v3244 = vunpack.c.h.b16 %v3130
        %v3245 = vunpack.c.l.b16 %v3131
        %v3246 = vunpack.c.h.b16 %v3131
        %v3247 = vunpack.c.l.b16 %v3132
        %v3248 = vunpack.c.h.b16 %v3132
        %v3249 = vunpack.c.l.b16 %v3133
        %v3250 = vunpack.c.h.b16 %v3133
        %v3251 = vunpack.c.l.b16 %v3134
        %v3252 = vunpack.c.h.b16 %v3134
        %v3253 = vunpack.c.l.b16 %v3135
        %v3254 = vunpack.c.h.b16 %v3135
        %v3255 = vunpack.c.l.b16 %v3136
        %v3256 = vunpack.c.h.b16 %v3136
        %v3257 = vunpack.c.l.b16 %v3137
        %v3258 = vunpack.c.h.b16 %v3137
        %v3259 = vunpack.c.l.b16 %v3138
        %v3260 = vunpack.c.h.b16 %v3138
        %v3261 = vunpack.c.l.b16 %v3139
        %v3262 = vunpack.c.h.b16 %v3139
        %v3263 = vunpack.c.l.b16 %v3140
        %v3264 = vunpack.c.h.b16 %v3140
        %v3265 = vunpack.c.l.b16 %v3141
        %v3266 = vunpack.c.h.b16 %v3141
        %v3267 = vunpack.c.l.b16 %v3142
        %v3268 = vunpack.c.h.b16 %v3142
        %v3269 = vunpack.c.l.b16 %v3143
        %v3270 = vunpack.c.h.b16 %v3143
        %v3271 = vunpack.c.l.b16 %v3144
        %v3272 = vunpack.c.h.b16 %v3144
        %v3273 = vunpack.c.l.b16 %v3145
        %v3274 = vunpack.c.h.b16 %v3145
        %v3275 = vunpack.c.l.b16 %v3146
        %v3276 = vunpack.c.h.b16 %v3146
        %v3277 = vunpack.c.l.b16 %v3147
        %v3278 = vunpack.c.h.b16 %v3147
        %v3279 = vunpack.c.l.b16 %v3148
        %v3280 = vunpack.c.h.b16 %v3148
        %v3281 = vunpack.c.l.b16 %v3149
        %v3282 = vunpack.c.h.b16 %v3149
        %v3283 = vunpack.c.l.b16 %v3150
        %v3284 = vunpack.c.h.b16 %v3150
        %v3285 = vunpack.c.l.b16 %v3151
        %v3286 = vunpack.c.h.b16 %v3151
        %v3287 = vunpack.c.l.b16 %v3152
        %v3288 = vunpack.c.h.b16 %v3152
        %v3289 = vunpack.c.l.b16 %v3153
        %v3290 = vunpack.c.h.b16 %v3153
        %v3291 = vunpack.c.l.b16 %v3154
        %v3292 = vunpack.c.h.b16 %v3154
        %v3293 = vunpack.c.l.b16 %v3155
        %v3294 = vunpack.c.h.b16 %v3155
        %v3295 = vunpack.c.l.b16 %v3156
        %v3296 = vunpack.c.h.b16 %v3156
        %v3297 = vunpack.c.l.b16 %v3157
        %v3298 = vunpack.c.h.b16 %v3157
        %v3299 = vunpack.c.l.b16 %v3158
        %v3300 = vunpack.c.h.b16 %v3158
        %v3301 = vunpack.c.l.b16 %v3159
        %v3302 = vunpack.c.h.b16 %v3159
        %v3303 = vunpack.c.l.b16 %v3160
        %v3304 = vunpack.c.h.b16 %v3160
        %v3305 = vunpack.c.l.b16 %v3161
        %v3306 = vunpack.c.h.b16 %v3161
        %v3307 = vunpack.c.l.b16 %v3162
        %v3308 = vunpack.c.h.b16 %v3162
        %v3309 = vunpack.c.l.b16 %v3163
        %v3310 = vunpack.c.h.b16 %v3163
        %v3311 = vunpack.c.l.b16 %v3164
        %v3312 = vunpack.c.h.b16 %v3164
        %v3313 = vunpack.c.l.b16 %v3165
        %v3314 = vunpack.c.h.b16 %v3165
        %v3315 = vunpack.c.l.b16 %v3166
        %v3316 = vunpack.c.h.b16 %v3166
        %v3317 = vunpack.c.l.b16 %v3167
        %v3318 = vunpack.c.h.b16 %v3167
        %v3319 = vunpack.c.l.b16 %v3168
        %v3320 = vunpack.c.h.b16 %v3168
        %v3321 = vunpack.c.l.b16 %v3169
        %v3322 = vunpack.c.h.b16 %v3169
        %v3323 = vunpack.c.l.b16 %v3170
        %v3324 = vunpack.c.h.b16 %v3170
        %v3325 = vunpack.c.l.b16 %v3171
        %v3326 = vunpack.c.h.b16 %v3171
        %v3327 = vunpack.c.l.b16 %v3172
        %v3328 = vunpack.c.h.b16 %v3172
        %v3329 = vpack.c.b16 %v3235, %v3233
        %v3330 = vpack.c.b16 %v3236, %v3234
        %v3331 = vpack.c.b16 %v3239, %v3237
        %v3332 = vpack.c.b16 %v3240, %v3238
        %v3333 = vpack.c.b16 %v3243, %v3241
        %v3334 = vpack.c.b16 %v3244, %v3242
        %v3335 = vpack.c.b16 %v3247, %v3245
        %v3336 = vpack.c.b16 %v3248, %v3246
        %v3337 = vpack.c.b16 %v3251, %v3249
        %v3338 = vpack.c.b16 %v3252, %v3250
        %v3339 = vpack.c.b16 %v3255, %v3253
        %v3340 = vpack.c.b16 %v3256, %v3254
        %v3341 = vpack.c.b16 %v3259, %v3257
        %v3342 = vpack.c.b16 %v3260, %v3258
        %v3343 = vpack.c.b16 %v3263, %v3261
        %v3344 = vpack.c.b16 %v3264, %v3262
        %v3345 = vpack.c.b16 %v3267, %v3265
        %v3346 = vpack.c.b16 %v3268, %v3266
        %v3347 = vpack.c.b16 %v3271, %v3269
        %v3348 = vpack.c.b16 %v3272, %v3270
        %v3349 = vpack.c.b16 %v3275, %v3273
        %v3350 = vpack.c.b16 %v3276, %v3274
        %v3351 = vpack.c.b16 %v3279, %v3277
        %v3352 = vpack.c.b16 %v3280, %v3278
        %v3353 = vpack.c.b16 %v3283, %v3281
        %v3354 = vpack.c.b16 %v3284, %v3282
        %v3355 = vpack.c.b16 %v3287, %v3285
        %v3356 = vpack.c.b16 %v3288, %v3286
        %v3357 = vpack.c.b16 %v3291, %v3289
        %v3358 = vpack.c.b16 %v3292, %v3290
        %v3359 = vpack.c.b16 %v3295, %v3293
        %v3360 = vpack.c.b16 %v3296, %v3294
        %v3361 = vpack.c.b16 %v3299, %v3297
        %v3362 = vpack.c.b16 %v3300, %v3298
        %v3363 = vpack.c.b16 %v3303, %v3301
        %v3364 = vpack.c.b16 %v3304, %v3302
        %v3365 = vpack.c.b16 %v3307, %v3305
        %v3366 = vpack.c.b16 %v3308, %v3306
        %v3367 = vpack.c.b16 %v3311, %v3309
        %v3368 = vpack.c.b16 %v3312, %v3310
        %v3369 = vpack.c.b16 %v3315, %v3313
        %v3370 = vpack.c.b16 %v3316, %v3314
        %v3371 = vpack.c.b16 %v3319, %v3317
        %v3372 = vpack.c.b16 %v3320, %v3318
        %v3373 = vpack.c.b16 %v3323, %v3321
        %v3374 = vpack.c.b16 %v3324, %v3322
        %v3375 = vpack.c.b16 %v3327, %v3325
        %v3376 = vpack.c.b16 %v3328, %v3326
        %3425 = vmatprep.subr.bf16.mxu0 %v3330
        %3426 = vmatpush1.bf16.msra.mxu0 %v3329
        %3427 = vmatprep.subr.bf16.mxu0 %v3332
        %3428 = vmatpush1.bf16.msra.mxu0 %v3331
        %3429 = vmatprep.subr.bf16.mxu0 %v3334
        %3430 = vmatpush1.bf16.msra.mxu0 %v3333
        %3431 = vmatprep.subr.bf16.mxu0 %v3336
        %3432 = vmatpush1.bf16.msra.mxu0 %v3335
        %3433 = vmatprep.subr.bf16.mxu0 %v3338
        %3434 = vmatpush1.bf16.msra.mxu0 %v3337
        %3435 = vmatprep.subr.bf16.mxu0 %v3340
        %3436 = vmatpush1.bf16.msra.mxu0 %v3339
        %3437 = vmatprep.subr.bf16.mxu0 %v3342
        %3438 = vmatpush1.bf16.msra.mxu0 %v3341
        %3439 = vmatprep.subr.bf16.mxu0 %v3344
        %3440 = vmatpush1.bf16.msra.mxu0 %v3343
        %3441 = vmatprep.subr.bf16.mxu0 %v3346
        %3442 = vmatpush1.bf16.msra.mxu0 %v3345
        %3443 = vmatprep.subr.bf16.mxu0 %v3348
        %3444 = vmatpush1.bf16.msra.mxu0 %v3347
        %3445 = vmatprep.subr.bf16.mxu0 %v3350
        %3446 = vmatpush1.bf16.msra.mxu0 %v3349
        %3447 = vmatprep.subr.bf16.mxu0 %v3352
        %3448 = vmatpush1.bf16.msra.mxu0 %v3351
        %3449 = vmatprep.subr.bf16.mxu0 %v3354
        %3450 = vmatpush1.bf16.msra.mxu0 %v3353
        %3451 = vmatprep.subr.bf16.mxu0 %v3356
        %3452 = vmatpush1.bf16.msra.mxu0 %v3355
        %3453 = vmatprep.subr.bf16.mxu0 %v3358
        %3454 = vmatpush1.bf16.msra.mxu0 %v3357
        %3455 = vmatprep.subr.bf16.mxu0 %v3360
        %3456 = vmatpush1.bf16.msra.mxu0 %v3359
        %3457 = vmatprep.mubr.bf16.mxu0 %v1749
        %3458 = vmatmul.mubr.bf16.gmra.mrb[0].mxu0 %v1497
        %v3459 = vpop.f32.mrb[0].mxu0
        %v3460 = vadd.f32 %v3178, %v3459
        %v3461 = vpop.f32.mrb[0].mxu0
        %v3462 = vadd.f32 %v3182, %v3461
        %v3463 = vpop.f32.mrb[0].mxu0
        %v3464 = vadd.f32 %v3178, %v3463
        %v3465 = vpop.f32.mrb[0].mxu0
        %v3466 = vadd.f32 %v3182, %v3465
        %3467 = vdwg.mxu0
        %3468 = vmatprep.subr.bf16.mxu0 %v3362
        %3469 = vmatpush1.bf16.msra.mxu0 %v3361
        %3470 = vmatprep.subr.bf16.mxu0 %v3364
        %3471 = vmatpush1.bf16.msra.mxu0 %v3363
        %3472 = vmatprep.subr.bf16.mxu0 %v3366
        %3473 = vmatpush1.bf16.msra.mxu0 %v3365
        %3474 = vmatprep.subr.bf16.mxu0 %v3368
        %3475 = vmatpush1.bf16.msra.mxu0 %v3367
        %3476 = vmatprep.subr.bf16.mxu0 %v3370
        %3477 = vmatpush1.bf16.msra.mxu0 %v3369
        %3478 = vmatprep.subr.bf16.mxu0 %v3372
        %3479 = vmatpush1.bf16.msra.mxu0 %v3371
        %3480 = vmatprep.subr.bf16.mxu0 %v3374
        %3481 = vmatpush1.bf16.msra.mxu0 %v3373
        %3482 = vmatprep.subr.bf16.mxu0 %v3376
        %3483 = vmatpush1.bf16.msra.mxu0 %v3375
        %3484 = vmatprep.subr.bf16.mxu0 0
        %3485 = vmatpush1.bf16.msra.mxu0 0
        %3486 = vmatprep.subr.bf16.mxu0 0
        %3487 = vmatpush1.bf16.msra.mxu0 0
        %3488 = vmatprep.subr.bf16.mxu0 0
        %3489 = vmatpush1.bf16.msra.mxu0 0
        %3490 = vmatprep.subr.bf16.mxu0 0
        %3491 = vmatpush1.bf16.msra.mxu0 0
        %3492 = vmatprep.subr.bf16.mxu0 0
        %3493 = vmatpush1.bf16.msra.mxu0 0
        %3494 = vmatprep.subr.bf16.mxu0 0
        %3495 = vmatpush1.bf16.msra.mxu0 0
        %3496 = vmatprep.subr.bf16.mxu0 0
        %3497 = vmatpush1.bf16.msra.mxu0 0
        %3498 = vmatprep.subr.bf16.mxu0 0
        %3499 = vmatpush1.bf16.msra.mxu0 0
        %3500 = vmatprep.mubr.bf16.mxu0 0
        %3501 = vmatmul.mubr.bf16.gmra.mrb[0].mxu0 %v1750
        %v3502 = vpop.f32.mrb[0].mxu0
        %v3503 = vadd.f32 %v3460, %v3502
        %v3504 = vpop.f32.mrb[0].mxu0
        %v3505 = vadd.f32 %v3462, %v3504
        %v3506 = vpop.f32.mrb[0].mxu0
        %v3507 = vadd.f32 %v3464, %v3506
        %v3508 = vpop.f32.mrb[0].mxu0
        %v3509 = vadd.f32 %v3466, %v3508
        %3510 = vdwg.mxu0
        %v3511 = vmax.f32 %v3503, 0.0
        %v3512 = vmax.f32 %v3505, 0.0
        %v3513 = vmax.f32 %v3507, 0.0
        %v3514 = vmax.f32 %v3509, 0.0
        %v3515 = vadd.f32 %v3123, %v3511
        %v3516 = vadd.f32 %v3124, %v3513
        %v3517 = vadd.f32 %v3515, %v3512
        %v3518 = vadd.f32 %v3516, %v3514
        %v3519 = vmul.f32 %v3517, 0.0625
        %v3520 = vmul.f32 %v3518, 0.0625
        %v3521 = vpack.c.bf16 %v3520, %v3519
        %v3522 = vld [vmem:[#allocation12] sm:$0xf]
        %v3523 = vld [vmem:[#allocation12 + $0x4] sm:$0xf]
        %v3524 = vld [vmem:[#allocation12 + $0x8] sm:$0xf]
        %v3525 = vld [vmem:[#allocation12 + $0xc] sm:$0xf]
        %v3526 = vld [vmem:[#allocation12 + $0x10] sm:$0xf]
        %v3527 = vld [vmem:[#allocation12 + $0x14] sm:$0xf]
        %v3528 = vld [vmem:[#allocation12 + $0x18] sm:$0xf]
        %v3529 = vld [vmem:[#allocation12 + $0x1c] sm:$0xf]
        %v3530 = vld [vmem:[#allocation12 + $0x20] sm:$0xf]
        %v3531 = vld [vmem:[#allocation12 + $0x24] sm:$0xf]
        %v3532 = vld [vmem:[#allocation12 + $0x28] sm:$0xf]
        %v3533 = vld [vmem:[#allocation12 + $0x2c] sm:$0xf]
        %v3534 = vld [vmem:[#allocation12 + $0x30] sm:$0xf]
        %v3535 = vld [vmem:[#allocation12 + $0x34] sm:$0xf]
        %v3536 = vld [vmem:[#allocation12 + $0x38] sm:$0xf]
        %v3537 = vld [vmem:[#allocation12 + $0x3c] sm:$0xf]
        %v3538 = vld [vmem:[#allocation14] sm:$0x1]
        %v3540 = vlaneseq
        %v3541 = vshrl.u32 %v3540, 7
        %v3542 = vsub.s32 0, %v3541
        %v3543 = vrot.slane %v3538, %v3542
        %v3561 = vunpack.c.l.b16 %v3522
        %v3562 = vunpack.c.l.b16 %v3523
        %v3563 = vunpack.c.l.b16 %v3524
        %v3564 = vunpack.c.l.b16 %v3525
        %v3565 = vunpack.c.l.b16 %v3526
        %v3566 = vunpack.c.l.b16 %v3527
        %v3567 = vunpack.c.l.b16 %v3528
        %v3568 = vunpack.c.l.b16 %v3529
        %v3569 = vunpack.c.l.b16 %v3530
        %v3570 = vunpack.c.l.b16 %v3531
        %v3571 = vunpack.c.l.b16 %v3532
        %v3572 = vunpack.c.l.b16 %v3533
        %v3573 = vunpack.c.l.b16 %v3534
        %v3574 = vunpack.c.l.b16 %v3535
        %v3575 = vunpack.c.l.b16 %v3536
        %v3576 = vunpack.c.l.b16 %v3537
        %v3577 = vpack.c.b16 %v3562, %v3561
        %v3578 = vpack.c.b16 %v3564, %v3563
        %v3579 = vpack.c.b16 %v3566, %v3565
        %v3580 = vpack.c.b16 %v3568, %v3567
        %v3581 = vpack.c.b16 %v3570, %v3569
        %v3582 = vpack.c.b16 %v3572, %v3571
        %v3583 = vpack.c.b16 %v3574, %v3573
        %v3584 = vpack.c.b16 %v3576, %v3575
        %3593 = vmatprep.subr.bf16.mxu0 0
        %3594 = vmatpush1.bf16.msra.mxu0 %v3577
        %3595 = vmatprep.subr.bf16.mxu0 0
        %3596 = vmatpush1.bf16.msra.mxu0 %v3578
        %3597 = vmatprep.subr.bf16.mxu0 0
        %3598 = vmatpush1.bf16.msra.mxu0 %v3579
        %3599 = vmatprep.subr.bf16.mxu0 0
        %3600 = vmatpush1.bf16.msra.mxu0 %v3580
        %3601 = vmatprep.subr.bf16.mxu0 0
        %3602 = vmatpush1.bf16.msra.mxu0 %v3581
        %3603 = vmatprep.subr.bf16.mxu0 0
        %3604 = vmatpush1.bf16.msra.mxu0 %v3582
        %3605 = vmatprep.subr.bf16.mxu0 0
        %3606 = vmatpush1.bf16.msra.mxu0 %v3583
        %3607 = vmatprep.subr.bf16.mxu0 0
        %3608 = vmatpush1.bf16.msra.mxu0 %v3584
        %3609 = vmatprep.subr.bf16.mxu0 0
        %3610 = vmatpush1.bf16.msra.mxu0 0
        %3611 = vmatprep.subr.bf16.mxu0 0
        %3612 = vmatpush1.bf16.msra.mxu0 0
        %3613 = vmatprep.subr.bf16.mxu0 0
        %3614 = vmatpush1.bf16.msra.mxu0 0
        %3615 = vmatprep.subr.bf16.mxu0 0
        %3616 = vmatpush1.bf16.msra.mxu0 0
        %3617 = vmatprep.subr.bf16.mxu0 0
        %3618 = vmatpush1.bf16.msra.mxu0 0
        %3619 = vmatprep.subr.bf16.mxu0 0
        %3620 = vmatpush1.bf16.msra.mxu0 0
        %3621 = vmatprep.subr.bf16.mxu0 0
        %3622 = vmatpush1.bf16.msra.mxu0 0
        %3623 = vmatprep.subr.bf16.mxu0 0
        %3624 = vmatpush1.bf16.msra.mxu0 0
        %3625 = vmatprep.mubr.bf16.mxu0 0
        %3626 = vmatmul.mubr.bf16.gmra.mrb[0].mxu0 %v3521
        %v3627 = vpop.f32.mrb[0].mxu0
        %v3628 = vadd.f32 %v3543, %v3627
        %v3629 = vpop.f32.mrb[0].mxu0
        %v3630 = vpop.f32.mrb[0].mxu0
        %v3631 = vadd.f32 %v3543, %v3630
        %v3632 = vpop.f32.mrb[0].mxu0
        %3633 = vdwg.mxu0
        %v3634 = vmax.f32 %v3628, 0.0
        %v3635 = vmax.f32 %v3631, 0.0
        %v3636 = vld [vmem:[#allocation15] sm:$0x1]
        %v3637 = vpack.c.bf16 %v3635, %v3634
        %v3638 = vld [vmem:[#allocation2] sm:$0x1]
        %3640 = vset.pattern.permute.xlu0 0
        %3641 = vperm.xlu0 %3640, %v3638
        %v3642 = vpop.permute.xlu0 %3641
        %v3644 = vlaneseq
        %v3645 = vshrl.u32 %v3644, 7
        %v3646 = vsub.s32 0, %v3645
        %v3647 = vrot.slane %v3642, %v3646
        %3648 = vmatprep.subr.bf16.mxu0 0
        %3649 = vmatpush1.bf16.xpose.msra.mxu0 %v3637
        %3650 = vmatprep.subr.bf16.mxu0 0
        %3651 = vmatpush1.bf16.xpose.msra.mxu0 0
        %3652 = vmatprep.subr.bf16.mxu0 0
        %3653 = vmatpush1.bf16.xpose.msra.mxu0 0
        %3654 = vmatprep.subr.bf16.mxu0 0
        %3655 = vmatpush1.bf16.xpose.msra.mxu0 0
        %3656 = vmatprep.subr.bf16.mxu0 0
        %3657 = vmatpush1.bf16.xpose.msra.mxu0 0
        %3658 = vmatprep.subr.bf16.mxu0 0
        %3659 = vmatpush1.bf16.xpose.msra.mxu0 0
        %3660 = vmatprep.subr.bf16.mxu0 0
        %3661 = vmatpush1.bf16.xpose.msra.mxu0 0
        %3662 = vmatprep.subr.bf16.mxu0 0
        %3663 = vmatpush1.bf16.xpose.msra.mxu0 0
        %3664 = vmatprep.subr.bf16.mxu0 0
        %3665 = vmatpush1.bf16.xpose.msra.mxu0 0
        %3666 = vmatprep.subr.bf16.mxu0 0
        %3667 = vmatpush1.bf16.xpose.msra.mxu0 0
        %3668 = vmatprep.subr.bf16.mxu0 0
        %3669 = vmatpush1.bf16.xpose.msra.mxu0 0
        %3670 = vmatprep.subr.bf16.mxu0 0
        %3671 = vmatpush1.bf16.xpose.msra.mxu0 0
        %3672 = vmatprep.subr.bf16.mxu0 0
        %3673 = vmatpush1.bf16.xpose.msra.mxu0 0
        %3674 = vmatprep.subr.bf16.mxu0 0
        %3675 = vmatpush1.bf16.xpose.msra.mxu0 0
        %3676 = vmatprep.subr.bf16.mxu0 0
        %3677 = vmatpush1.bf16.xpose.msra.mxu0 0
        %3678 = vmatprep.subr.bf16.mxu0 0
        %3679 = vmatpush1.bf16.xpose.msra.mxu0 0
        %3680 = vmatprep.mubr.bf16.mxu0 0
        %3681 = vmatmul.mubr.bf16.gmra.mrb[0].mxu0 %v3636
        %v3682 = vpop.f32.mrb[0].mxu0
        %v3683 = vadd.f32 %v3647, %v3682
        %v3684 = vpop.f32.mrb[0].mxu0
        %v3685 = vpop.f32.mrb[0].mxu0
        %v3686 = vpop.f32.mrb[0].mxu0
        %3687 = vdwg.mxu0
        %v3688 = vxor.u32 %v3683, 2147483648
        %v3689 = vmul.f32 %v3688, 1.442695
        %v3690 = vpow.pop %v3689
        %v3691 = vadd.f32 %v3690, 1.0
        %v3692 = vrcp.pop %v3691
        %v3693 = vmul.f32 1.0, %v3692
        %vm3694 = vcmask 122880
        %3695 = vst.msk [vmem:[%s446] sm:$0x1] %vm3694, %v3693
        %s3696 = sand.u32 %s234, 1
        %s3697 = scalar_lea.sflag [#allocation5], %s3696
        %s3698 = sand.u32 %s234, 1
        %s3699 = scalar_lea.vmem [#allocation17], %s3698
        // Predicated region
        $region89: #{tpu_custom_call.1} parent=55 // pred_check
          %p3700 = pneg %p244
        $region90: #{tpu_custom_call.1} parent=55 // pred_check_branch
          %3702 = sbr.rel (%p3700) target = $region92
        $region91: #{tpu_custom_call.1} parent=55 // pred_region
          %s3704 = ssub.s32 16, 16
          %3705 = vsyncadd %s3697, %s3704
          %s3706 = smul.addr %s32, 16
          %s3707 = scalar_lea.hbm %s9, %s3706
          %s3709 = sshll.u32 %s3699, 4
          %s3710 = int_to_ptr.vmem [resolvable:$true] %s3709
          %3712 = dma.vmem_to_hbm [thread:$0]  %s3710, 16, %s3707, %s3697
        $region92: #{tpu_custom_call.1} parent=55 // pred_fallthru
          _
      $region56: #{tpu_custom_call.1} parent=5 // pred_fallthru
        _
      %p3713 = scmp.le.s32.totalorder 2, %s27
      // Predicated region
      $region93: #{tpu_custom_call.1} parent=5 // pred_check
        %p3714 = pneg %p3713
      $region94: #{tpu_custom_call.1} parent=5 // pred_check_branch
        %3716 = sbr.rel (%p3714) target = $region96
      $region95: #{tpu_custom_call.1} parent=5 // pred_region
        %s3717 = ssub.s32 %s27, 2
        // Predicated region
        $region97: #{tpu_custom_call.1} parent=95 // pred_check
          %p3718 = pneg %p250
        $region98: #{tpu_custom_call.1} parent=95 // pred_check_branch
          %3720 = sbr.rel (%p3718) target = $region100
        $region99: #{tpu_custom_call.1} parent=95 // pred_region
          %s3721 = sand.u32 %s235, 1
          %s3722 = scalar_lea.sflag [#allocation5], %s3721
          %s3723 = sand.u32 %s235, 1
          %s3724 = scalar_lea.vmem [#allocation17], %s3723
          %3725 = dma.done %s3722, 16
        $region100: #{tpu_custom_call.1} parent=95 // pred_fallthru
          _
      $region96: #{tpu_custom_call.1} parent=5 // pred_fallthru
        _
    $region6: #{tpu_custom_call.1} parent=1 // loop_footer
      %s31 = sadd.s32 1, %s27
    $region7: #{tpu_custom_call.1} parent=1 // loop_footer_branch
      %26 = sbr.rel target = $region3
    $region8: #{tpu_custom_call.1} parent=1 // loop_exit
      _
    %3726 = vsyncpa [#allocation4], 1
    %s3727 = scalar_lea.sflag [#allocation4], 1
    %3728 = vsyncpa %s3727, 1
    %3729 = vsyncpa [#allocation7], 1
    %3730 = vsyncpa [#allocation10], 1
    %3731 = vsyncpa [#allocation13], 1
    %3732 = vsyncpa [#allocation16], 1
    %3733 = vsyncpa [#allocation5], 1
    %s3734 = scalar_lea.sflag [#allocation5], 1
    %3735 = vsyncpa %s3734, 1

</llo_original>
